<compile_context>
chip_gen: v6e
topology: v6e:2x2x1
jax: 0.10.0
libtpu: 0.0.40
codegen_flags: <defaults>
</compile_context>

<pallas_src>
import functools
import math

import jax
import jax.numpy as jnp
from jax import lax
from jax.experimental import pallas as pl
from jax.experimental.pallas import tpu as pltpu


# ---------------------------------------------------------------------------
# Pallas kernel: PE add + all encoder layers for one batch chunk
# ---------------------------------------------------------------------------
def _layer_norm(h, gamma, beta, eps=1e-5):
    mu = jnp.mean(h, axis=-1, keepdims=True)
    var = jnp.mean((h - mu) ** 2, axis=-1, keepdims=True)
    return (h - mu) * lax.rsqrt(var + eps) * gamma + beta


def _make_kernel(nhead):
    def kernel(x_ref, pe_ref,
               wqkv_ref, bqkv_ref, wo_ref, vecd_ref,
               w1_ref, b1_ref, w2_ref,
               o_ref):
        num_layers = wqkv_ref.shape[0]
        Bb, S, D = x_ref.shape
        dh = D // nhead
        scale = 1.0 / math.sqrt(dh)

        # Fused positional-encoding add; flatten (batch, seq) into the MXU M dim.
        x = (x_ref[...] + pe_ref[...][None, :, :]).reshape(Bb * S, D)   # f32

        # Causal mask built once, broadcast over (head, batch).
        row = lax.broadcasted_iota(jnp.int32, (1, S, S), 1)
        col = lax.broadcasted_iota(jnp.int32, (1, S, S), 2)
        causal = col > row                                 # True above diagonal

        def split_heads(t):                                # (Bb*S, D) -> (nhead*Bb, S, dh)
            t = t.reshape(Bb, S, D)
            t = jnp.stack([t[:, :, h * dh:(h + 1) * dh] for h in range(nhead)],
                          axis=0)                          # (nhead, Bb, S, dh)
            return t.reshape(nhead * Bb, S, dh)

        for l in range(num_layers):                        # static, unrolled
            vec = vecd_ref[l]                              # (6, D): bo, g1, b1, bff2, g2, b2

            # ----- fused QKV: one lane-dense (Bb*S, D) x (D, 3D) matmul
            qkv = jnp.dot(x.astype(jnp.bfloat16), wqkv_ref[l],
                          preferred_element_type=jnp.float32) + bqkv_ref[l]

            q = split_heads(qkv[:, 0 * D:1 * D]).astype(jnp.bfloat16)
            k = split_heads(qkv[:, 1 * D:2 * D]).astype(jnp.bfloat16)
            v = split_heads(qkv[:, 2 * D:3 * D]).astype(jnp.bfloat16)

            # ----- scaled-dot-product attention, f32 softmax, exact divide
            s = jnp.einsum('nqd,nkd->nqk', q, k,
                           preferred_element_type=jnp.float32) * scale
            s = jnp.where(causal, -1e30, s)
            s = s - jnp.max(s, axis=-1, keepdims=True)
            p = jnp.exp(s)
            p = p / jnp.sum(p, axis=-1, keepdims=True)

            ctx = jnp.einsum('nqk,nkd->nqd', p.astype(jnp.bfloat16), v,
                             preferred_element_type=jnp.float32)  # (nhead*Bb, S, dh)

            # ----- concat heads on the lane dim, single (D, D) out-projection
            ctx = ctx.reshape(nhead, Bb, S, dh)
            ctx = jnp.concatenate([ctx[h] for h in range(nhead)], axis=-1)
            ctx = ctx.reshape(Bb * S, D)
            attn = jnp.dot(ctx.astype(jnp.bfloat16), wo_ref[l],
                           preferred_element_type=jnp.float32) + vec[0:1]

            # ----- residual + post-LayerNorm 1 (f32)
            h1 = _layer_norm(x + attn, vec[1:2], vec[2:3])

            # ----- feed-forward: Linear -> ReLU -> Linear (bf16 MXU, f32 accum)
            f = jnp.dot(h1.astype(jnp.bfloat16), w1_ref[l],
                        preferred_element_type=jnp.float32) + b1_ref[l]
            f = jnp.maximum(f, 0.0)
            f = jnp.dot(f.astype(jnp.bfloat16), w2_ref[l],
                        preferred_element_type=jnp.float32) + vec[3:4]

            # ----- residual + post-LayerNorm 2 (f32)
            x = _layer_norm(h1 + f, vec[4:5], vec[5:6])

        o_ref[...] = x.reshape(Bb, S, D)

    return kernel


# ---------------------------------------------------------------------------
# Wrapper: single pallas_call, grid over batch chunks only
# ---------------------------------------------------------------------------
def sinusoidal_pe(seq_len, d_model):
    position = jnp.arange(seq_len, dtype=jnp.float32)[:, None]
    div_term = jnp.exp(jnp.arange(0, d_model, 2, dtype=jnp.float32)
                       * (-math.log(10000.0) / d_model))
    ang = position * div_term
    pe = jnp.zeros((seq_len, d_model), jnp.float32)
    pe = pe.at[:, 0::2].set(jnp.sin(ang))
    pe = pe.at[:, 1::2].set(jnp.cos(ang)[:, : d_model // 2])
    return pe


_PARAM_ORDER = ("wqkv", "bqkv", "wo", "vecd", "w1", "b1", "w2")


def _choose_batch_block(B, S, nhead):
    # Cap Bb so the live f32 score + prob tensors (~8 * nhead * Bb * S^2 bytes)
    # stay well inside v7x's 64 MiB VMEM (default scoped 32 MiB).
    # TODO(synk): for very long S, replace the cap with a KV-tiled online softmax.
    budget = 12 * 1024 * 1024
    bb_cap = max(1, budget // max(1, 8 * nhead * S * S))
    target = B
    try:
        if "v7" in jax.devices()[0].device_kind.lower() and B % 2 == 0:
            target = B // 2            # >=2 parallel grid steps -> feed both TCs
    except Exception:
        pass
    bb = max(1, min(target, bb_cap))
    while B % bb:                      # keep the grid evenly divided
        bb -= 1
    return bb


def causal_transformer(x, params, nhead, *, batch_block=None):
    B, S, D = x.shape
    assert D % nhead == 0
    pe = sinusoidal_pe(S, D)
    Bb = batch_block if batch_block is not None else _choose_batch_block(B, S, nhead)
    assert B % Bb == 0
    weights = [params[n] for n in _PARAM_ORDER]

    def const_spec(shape):
        zeros = (0,) * len(shape)
        return pl.BlockSpec(shape, lambda b: zeros)

    in_specs = ([pl.BlockSpec((Bb, S, D), lambda b: (b, 0, 0)),    # x (batch chunk)
                 const_spec(pe.shape)]                             # positional enc
                + [const_spec(w.shape) for w in weights])          # all layers' weights

    return pl.pallas_call(
        _make_kernel(nhead),
        out_shape=jax.ShapeDtypeStruct((B, S, D), jnp.float32),
        grid=(B // Bb,),
        in_specs=in_specs,
        out_specs=pl.BlockSpec((Bb, S, D), lambda b: (b, 0, 0)),
        compiler_params=pltpu.CompilerParams(
            dimension_semantics=("parallel",),
            vmem_limit_bytes=48 * 1024 * 1024),
    )(x, pe, *weights)


def init_params(key, num_layers, d_model, nhead, dim_feedforward):
    L, D, F = num_layers, d_model, dim_feedforward
    ks = jax.random.split(key, 4)
    std = 0.02

    def w(k, shape):  # matmul weights live in bf16 (MXU operands)
        return (jax.random.normal(k, shape, jnp.float32) * std).astype(jnp.bfloat16)

    # Packed D-sized per-layer vectors: rows = [bo, ln1_g, ln1_b, ffn_b2, ln2_g, ln2_b]
    vecd = jnp.zeros((L, 6, D), jnp.float32)
    vecd = vecd.at[:, 1, :].set(1.0)   # LayerNorm1 gamma
    vecd = vecd.at[:, 4, :].set(1.0)   # LayerNorm2 gamma

    return {
        "wqkv": w(ks[0], (L, D, 3 * D)),        # fused Wq|Wk|Wv, (in, out)
        "bqkv": jnp.zeros((L, 1, 3 * D), jnp.float32),
        "wo":   w(ks[1], (L, D, D)),            # out-projection, (in, out)
        "vecd": vecd,
        "w1":   w(ks[2], (L, D, F)),
        "b1":   jnp.zeros((L, 1, F), jnp.float32),
        "w2":   w(ks[3], (L, F, D)),
    }


if __name__ == "__main__":
    # Small shapes consistent with the module: (batch, seq_len, d_model)
    batch, seq_len, d_model = 2, 8, 32
    nhead, num_layers, dim_feedforward = 4, 2, 64

    key = jax.random.PRNGKey(0)
    kx, kp = jax.random.split(key)
    x = jax.random.normal(kx, (batch, seq_len, d_model), jnp.float32)
    params = init_params(kp, num_layers, d_model, nhead, dim_feedforward)

    fwd = jax.jit(functools.partial(causal_transformer, nhead=nhead))
    out = jax.block_until_ready(fwd(x, params))

    assert out.shape == (batch, seq_len, d_model)
    assert bool(jnp.all(jnp.isfinite(out)))
    print("KERNEL_OK")
</pallas_src>

<mosaic_0001>
module attributes {stable_mosaic.version = 11 : i64} {
  func.func @kernel(%arg0: i32, %arg1: memref<2x8x32xf32, #tpu.memory_space<vmem>>, %arg2: memref<8x32xf32, #tpu.memory_space<vmem>>, %arg3: memref<2x32x96xbf16, #tpu.memory_space<vmem>>, %arg4: memref<2x1x96xf32, #tpu.memory_space<vmem>>, %arg5: memref<2x32x32xbf16, #tpu.memory_space<vmem>>, %arg6: memref<2x6x32xf32, #tpu.memory_space<vmem>>, %arg7: memref<2x32x64xbf16, #tpu.memory_space<vmem>>, %arg8: memref<2x1x64xf32, #tpu.memory_space<vmem>>, %arg9: memref<2x64x32xbf16, #tpu.memory_space<vmem>>, %arg10: memref<2x8x32xf32, #tpu.memory_space<vmem>>) attributes {dimension_semantics = [#tpu.dimension_semantics<parallel>], iteration_bounds = array<i64: 1>, scalar_prefetch = 0 : i64, scratch_operands = 0 : i64, tpu.core_type = #tpu.core_type<tc>, window_params = [{transform_indices = @transform_0, window_bounds = array<i64: 2, 8, 32>}, {pipeline_mode = #tpu.pipeline_mode<synchronous>, transform_indices = @transform_1, window_bounds = array<i64: 8, 32>}, {pipeline_mode = #tpu.pipeline_mode<synchronous>, transform_indices = @transform_2, window_bounds = array<i64: 2, 32, 96>}, {pipeline_mode = #tpu.pipeline_mode<synchronous>, transform_indices = @transform_3, window_bounds = array<i64: 2, 1, 96>}, {pipeline_mode = #tpu.pipeline_mode<synchronous>, transform_indices = @transform_4, window_bounds = array<i64: 2, 32, 32>}, {pipeline_mode = #tpu.pipeline_mode<synchronous>, transform_indices = @transform_5, window_bounds = array<i64: 2, 6, 32>}, {pipeline_mode = #tpu.pipeline_mode<synchronous>, transform_indices = @transform_6, window_bounds = array<i64: 2, 32, 64>}, {pipeline_mode = #tpu.pipeline_mode<synchronous>, transform_indices = @transform_7, window_bounds = array<i64: 2, 1, 64>}, {pipeline_mode = #tpu.pipeline_mode<synchronous>, transform_indices = @transform_8, window_bounds = array<i64: 2, 64, 32>}, {transform_indices = @transform_9, window_bounds = array<i64: 2, 8, 32>}]} {
    %c0 = arith.constant 0 : index
    %c0_0 = arith.constant 0 : index
    %c0_1 = arith.constant 0 : index
    %0 = vector.load %arg1[%c0, %c0_0, %c0_1] : memref<2x8x32xf32, #tpu.memory_space<vmem>>, vector<2x8x32xf32>
    %c0_2 = arith.constant 0 : index
    %c0_3 = arith.constant 0 : index
    %1 = vector.load %arg2[%c0_2, %c0_3] : memref<8x32xf32, #tpu.memory_space<vmem>>, vector<8x32xf32>
    %2 = vector.shape_cast %1 : vector<8x32xf32> to vector<1x8x32xf32>
    %3 = vector.broadcast %2 : vector<1x8x32xf32> to vector<2x8x32xf32>
    %4 = arith.addf %0, %3 : vector<2x8x32xf32>
    %5 = vector.shape_cast %4 : vector<2x8x32xf32> to vector<16x32xf32>
    %6 = tpu.iota {dimensions = array<i32: 1>} : vector<1x8x8xi32>
    %7 = tpu.iota {dimensions = array<i32: 2>} : vector<1x8x8xi32>
    %8 = arith.cmpi sgt, %7, %6 : vector<1x8x8xi32>
    %c0_4 = arith.constant 0 : index
    %c0_5 = arith.constant 0 : index
    %c0_6 = arith.constant 0 : index
    %9 = vector.load %arg6[%c0_4, %c0_5, %c0_6] : memref<2x6x32xf32, #tpu.memory_space<vmem>>, vector<1x6x32xf32>
    %10 = vector.shape_cast %9 : vector<1x6x32xf32> to vector<6x32xf32>
    %11 = arith.truncf %5 : vector<16x32xf32> to vector<16x32xbf16>
    %c0_7 = arith.constant 0 : index
    %c0_8 = arith.constant 0 : index
    %c0_9 = arith.constant 0 : index
    %12 = vector.load %arg3[%c0_7, %c0_8, %c0_9] : memref<2x32x96xbf16, #tpu.memory_space<vmem>>, vector<1x32x96xbf16>
    %13 = vector.shape_cast %12 : vector<1x32x96xbf16> to vector<32x96xbf16>
    %cst = arith.constant dense<0.000000e+00> : vector<16x96xf32>
    %14 = tpu.matmul %11, %13, %cst {dimension_numbers = #tpu.dot_dimension_numbers<[1], [0], [0], [1], [0, 0, 1, 1], [], []>} : vector<16x32xbf16>, vector<32x96xbf16>, vector<16x96xf32> -> vector<16x96xf32>
    %c0_10 = arith.constant 0 : index
    %c0_11 = arith.constant 0 : index
    %c0_12 = arith.constant 0 : index
    %15 = vector.load %arg4[%c0_10, %c0_11, %c0_12] : memref<2x1x96xf32, #tpu.memory_space<vmem>>, vector<1x1x96xf32>
    %16 = vector.shape_cast %15 : vector<1x1x96xf32> to vector<1x96xf32>
    %17 = vector.broadcast %16 : vector<1x96xf32> to vector<16x96xf32>
    %18 = arith.addf %14, %17 : vector<16x96xf32>
    %19 = vector.extract_strided_slice %18 {offsets = [0, 0], sizes = [16, 32], strides = [1, 1]} : vector<16x96xf32> to vector<16x32xf32>
    %20 = vector.shape_cast %19 : vector<16x32xf32> to vector<2x8x32xf32>
    %21 = vector.extract_strided_slice %20 {offsets = [0, 0, 0], sizes = [2, 8, 8], strides = [1, 1, 1]} : vector<2x8x32xf32> to vector<2x8x8xf32>
    %22 = vector.extract_strided_slice %20 {offsets = [0, 0, 8], sizes = [2, 8, 8], strides = [1, 1, 1]} : vector<2x8x32xf32> to vector<2x8x8xf32>
    %23 = vector.extract_strided_slice %20 {offsets = [0, 0, 16], sizes = [2, 8, 8], strides = [1, 1, 1]} : vector<2x8x32xf32> to vector<2x8x8xf32>
    %24 = vector.extract_strided_slice %20 {offsets = [0, 0, 24], sizes = [2, 8, 8], strides = [1, 1, 1]} : vector<2x8x32xf32> to vector<2x8x8xf32>
    %25 = vector.shape_cast %21 : vector<2x8x8xf32> to vector<1x2x8x8xf32>
    %26 = vector.shape_cast %22 : vector<2x8x8xf32> to vector<1x2x8x8xf32>
    %27 = vector.shape_cast %23 : vector<2x8x8xf32> to vector<1x2x8x8xf32>
    %28 = vector.shape_cast %24 : vector<2x8x8xf32> to vector<1x2x8x8xf32>
    %29 = tpu.concatenate %25, %26, %27, %28 in 0 : vector<1x2x8x8xf32>, vector<1x2x8x8xf32>, vector<1x2x8x8xf32>, vector<1x2x8x8xf32> -> vector<4x2x8x8xf32>
    %30 = vector.shape_cast %29 : vector<4x2x8x8xf32> to vector<8x8x8xf32>
    %31 = arith.truncf %30 : vector<8x8x8xf32> to vector<8x8x8xbf16>
    %32 = vector.extract_strided_slice %18 {offsets = [0, 32], sizes = [16, 32], strides = [1, 1]} : vector<16x96xf32> to vector<16x32xf32>
    %33 = vector.shape_cast %32 : vector<16x32xf32> to vector<2x8x32xf32>
    %34 = vector.extract_strided_slice %33 {offsets = [0, 0, 0], sizes = [2, 8, 8], strides = [1, 1, 1]} : vector<2x8x32xf32> to vector<2x8x8xf32>
    %35 = vector.extract_strided_slice %33 {offsets = [0, 0, 8], sizes = [2, 8, 8], strides = [1, 1, 1]} : vector<2x8x32xf32> to vector<2x8x8xf32>
    %36 = vector.extract_strided_slice %33 {offsets = [0, 0, 16], sizes = [2, 8, 8], strides = [1, 1, 1]} : vector<2x8x32xf32> to vector<2x8x8xf32>
    %37 = vector.extract_strided_slice %33 {offsets = [0, 0, 24], sizes = [2, 8, 8], strides = [1, 1, 1]} : vector<2x8x32xf32> to vector<2x8x8xf32>
    %38 = vector.shape_cast %34 : vector<2x8x8xf32> to vector<1x2x8x8xf32>
    %39 = vector.shape_cast %35 : vector<2x8x8xf32> to vector<1x2x8x8xf32>
    %40 = vector.shape_cast %36 : vector<2x8x8xf32> to vector<1x2x8x8xf32>
    %41 = vector.shape_cast %37 : vector<2x8x8xf32> to vector<1x2x8x8xf32>
    %42 = tpu.concatenate %38, %39, %40, %41 in 0 : vector<1x2x8x8xf32>, vector<1x2x8x8xf32>, vector<1x2x8x8xf32>, vector<1x2x8x8xf32> -> vector<4x2x8x8xf32>
    %43 = vector.shape_cast %42 : vector<4x2x8x8xf32> to vector<8x8x8xf32>
    %44 = arith.truncf %43 : vector<8x8x8xf32> to vector<8x8x8xbf16>
    %45 = vector.extract_strided_slice %18 {offsets = [0, 64], sizes = [16, 32], strides = [1, 1]} : vector<16x96xf32> to vector<16x32xf32>
    %46 = vector.shape_cast %45 : vector<16x32xf32> to vector<2x8x32xf32>
    %47 = vector.extract_strided_slice %46 {offsets = [0, 0, 0], sizes = [2, 8, 8], strides = [1, 1, 1]} : vector<2x8x32xf32> to vector<2x8x8xf32>
    %48 = vector.extract_strided_slice %46 {offsets = [0, 0, 8], sizes = [2, 8, 8], strides = [1, 1, 1]} : vector<2x8x32xf32> to vector<2x8x8xf32>
    %49 = vector.extract_strided_slice %46 {offsets = [0, 0, 16], sizes = [2, 8, 8], strides = [1, 1, 1]} : vector<2x8x32xf32> to vector<2x8x8xf32>
    %50 = vector.extract_strided_slice %46 {offsets = [0, 0, 24], sizes = [2, 8, 8], strides = [1, 1, 1]} : vector<2x8x32xf32> to vector<2x8x8xf32>
    %51 = vector.shape_cast %47 : vector<2x8x8xf32> to vector<1x2x8x8xf32>
    %52 = vector.shape_cast %48 : vector<2x8x8xf32> to vector<1x2x8x8xf32>
    %53 = vector.shape_cast %49 : vector<2x8x8xf32> to vector<1x2x8x8xf32>
    %54 = vector.shape_cast %50 : vector<2x8x8xf32> to vector<1x2x8x8xf32>
    %55 = tpu.concatenate %51, %52, %53, %54 in 0 : vector<1x2x8x8xf32>, vector<1x2x8x8xf32>, vector<1x2x8x8xf32>, vector<1x2x8x8xf32> -> vector<4x2x8x8xf32>
    %56 = vector.shape_cast %55 : vector<4x2x8x8xf32> to vector<8x8x8xf32>
    %57 = arith.truncf %56 : vector<8x8x8xf32> to vector<8x8x8xbf16>
    "tpu.trace_start"() <{level = 10 : i32, message = "nqd,nkd->nqk"}> : () -> ()
    %cst_13 = arith.constant dense<0.000000e+00> : vector<8x8x8xf32>
    %58 = tpu.matmul %31, %44, %cst_13 {dimension_numbers = #tpu.dot_dimension_numbers<[2], [2], [1], [1], [0, 0, 0, 1, 1, 1], [0], [0]>} : vector<8x8x8xbf16>, vector<8x8x8xbf16>, vector<8x8x8xf32> -> vector<8x8x8xf32>
    "tpu.trace_stop"() : () -> ()
    %cst_14 = arith.constant 0.353553385 : f32
    %59 = vector.broadcast %cst_14 : f32 to vector<8x8x8xf32>
    %60 = arith.mulf %58, %59 : vector<8x8x8xf32>
    %cst_15 = arith.constant -1.000000e+30 : f32
    %61 = vector.shape_cast %8 : vector<1x8x8xi1> to vector<1x8x8xi1>
    %62 = vector.broadcast %61 : vector<1x8x8xi1> to vector<8x8x8xi1>
    %63 = vector.broadcast %cst_15 : f32 to vector<8x8x8xf32>
    %64 = arith.select %62, %63, %60 : vector<8x8x8xi1>, vector<8x8x8xf32>
    %cst_16 = arith.constant dense<0xFF800000> : vector<8x8xf32>
    %65 = vector.multi_reduction <maximumf>, %64, %cst_16 [2] : vector<8x8x8xf32> to vector<8x8xf32>
    %66 = vector.shape_cast %65 : vector<8x8xf32> to vector<8x8x1xf32>
    %67 = vector.broadcast %66 : vector<8x8x1xf32> to vector<8x8x8xf32>
    %68 = arith.subf %64, %67 : vector<8x8x8xf32>
    %69 = math.exp %68 : vector<8x8x8xf32>
    %cst_17 = arith.constant dense<0.000000e+00> : vector<8x8xf32>
    %70 = vector.multi_reduction <add>, %69, %cst_17 [2] : vector<8x8x8xf32> to vector<8x8xf32>
    %71 = vector.shape_cast %70 : vector<8x8xf32> to vector<8x8x1xf32>
    %72 = vector.broadcast %71 : vector<8x8x1xf32> to vector<8x8x8xf32>
    %73 = arith.divf %69, %72 : vector<8x8x8xf32>
    %74 = arith.truncf %73 : vector<8x8x8xf32> to vector<8x8x8xbf16>
    "tpu.trace_start"() <{level = 10 : i32, message = "nqk,nkd->nqd"}> : () -> ()
    %cst_18 = arith.constant dense<0.000000e+00> : vector<8x8x8xf32>
    %75 = tpu.matmul %74, %57, %cst_18 {dimension_numbers = #tpu.dot_dimension_numbers<[2], [1], [1], [2], [0, 0, 0, 1, 1, 2], [0], [0]>} : vector<8x8x8xbf16>, vector<8x8x8xbf16>, vector<8x8x8xf32> -> vector<8x8x8xf32>
    "tpu.trace_stop"() : () -> ()
    %76 = vector.shape_cast %75 : vector<8x8x8xf32> to vector<4x2x8x8xf32>
    %77 = vector.extract_strided_slice %76 {offsets = [0, 0, 0, 0], sizes = [1, 2, 8, 8], strides = [1, 1, 1, 1]} : vector<4x2x8x8xf32> to vector<1x2x8x8xf32>
    %78 = vector.shape_cast %77 : vector<1x2x8x8xf32> to vector<2x8x8xf32>
    %79 = vector.extract_strided_slice %76 {offsets = [1, 0, 0, 0], sizes = [1, 2, 8, 8], strides = [1, 1, 1, 1]} : vector<4x2x8x8xf32> to vector<1x2x8x8xf32>
    %80 = vector.shape_cast %79 : vector<1x2x8x8xf32> to vector<2x8x8xf32>
    %81 = vector.extract_strided_slice %76 {offsets = [2, 0, 0, 0], sizes = [1, 2, 8, 8], strides = [1, 1, 1, 1]} : vector<4x2x8x8xf32> to vector<1x2x8x8xf32>
    %82 = vector.shape_cast %81 : vector<1x2x8x8xf32> to vector<2x8x8xf32>
    %83 = vector.extract_strided_slice %76 {offsets = [3, 0, 0, 0], sizes = [1, 2, 8, 8], strides = [1, 1, 1, 1]} : vector<4x2x8x8xf32> to vector<1x2x8x8xf32>
    %84 = vector.shape_cast %83 : vector<1x2x8x8xf32> to vector<2x8x8xf32>
    %85 = tpu.concatenate %78, %80, %82, %84 in 2 : vector<2x8x8xf32>, vector<2x8x8xf32>, vector<2x8x8xf32>, vector<2x8x8xf32> -> vector<2x8x32xf32>
    %86 = vector.shape_cast %85 : vector<2x8x32xf32> to vector<16x32xf32>
    %87 = arith.truncf %86 : vector<16x32xf32> to vector<16x32xbf16>
    %c0_19 = arith.constant 0 : index
    %c0_20 = arith.constant 0 : index
    %c0_21 = arith.constant 0 : index
    %88 = vector.load %arg5[%c0_19, %c0_20, %c0_21] : memref<2x32x32xbf16, #tpu.memory_space<vmem>>, vector<1x32x32xbf16>
    %89 = vector.shape_cast %88 : vector<1x32x32xbf16> to vector<32x32xbf16>
    %cst_22 = arith.constant dense<0.000000e+00> : vector<16x32xf32>
    %90 = tpu.matmul %87, %89, %cst_22 {dimension_numbers = #tpu.dot_dimension_numbers<[1], [0], [0], [1], [0, 0, 1, 1], [], []>} : vector<16x32xbf16>, vector<32x32xbf16>, vector<16x32xf32> -> vector<16x32xf32>
    %91 = vector.extract_strided_slice %10 {offsets = [0, 0], sizes = [1, 32], strides = [1, 1]} : vector<6x32xf32> to vector<1x32xf32>
    %92 = vector.broadcast %91 : vector<1x32xf32> to vector<16x32xf32>
    %93 = arith.addf %90, %92 : vector<16x32xf32>
    %94 = arith.addf %5, %93 : vector<16x32xf32>
    %95 = vector.extract_strided_slice %10 {offsets = [1, 0], sizes = [1, 32], strides = [1, 1]} : vector<6x32xf32> to vector<1x32xf32>
    %96 = vector.extract_strided_slice %10 {offsets = [2, 0], sizes = [1, 32], strides = [1, 1]} : vector<6x32xf32> to vector<1x32xf32>
    %cst_23 = arith.constant dense<0.000000e+00> : vector<16xf32>
    %97 = vector.multi_reduction <add>, %94, %cst_23 [1] : vector<16x32xf32> to vector<16xf32>
    %98 = vector.shape_cast %97 : vector<16xf32> to vector<16x1xf32>
    %cst_24 = arith.constant 3.200000e+01 : f32
    %99 = vector.broadcast %cst_24 : f32 to vector<16x1xf32>
    %100 = arith.divf %98, %99 : vector<16x1xf32>
    %101 = vector.broadcast %100 : vector<16x1xf32> to vector<16x32xf32>
    %102 = arith.subf %94, %101 : vector<16x32xf32>
    %103 = arith.mulf %102, %102 : vector<16x32xf32>
    %cst_25 = arith.constant dense<0.000000e+00> : vector<16xf32>
    %104 = vector.multi_reduction <add>, %103, %cst_25 [1] : vector<16x32xf32> to vector<16xf32>
    %105 = vector.shape_cast %104 : vector<16xf32> to vector<16x1xf32>
    %cst_26 = arith.constant 3.200000e+01 : f32
    %106 = vector.broadcast %cst_26 : f32 to vector<16x1xf32>
    %107 = arith.divf %105, %106 : vector<16x1xf32>
    %108 = vector.broadcast %100 : vector<16x1xf32> to vector<16x32xf32>
    %109 = arith.subf %94, %108 : vector<16x32xf32>
    %cst_27 = arith.constant 9.99999974E-6 : f32
    %110 = vector.broadcast %cst_27 : f32 to vector<16x1xf32>
    %111 = arith.addf %107, %110 : vector<16x1xf32>
    %112 = math.rsqrt %111 : vector<16x1xf32>
    %113 = vector.broadcast %112 : vector<16x1xf32> to vector<16x32xf32>
    %114 = arith.mulf %109, %113 : vector<16x32xf32>
    %115 = vector.broadcast %95 : vector<1x32xf32> to vector<16x32xf32>
    %116 = arith.mulf %114, %115 : vector<16x32xf32>
    %117 = vector.broadcast %96 : vector<1x32xf32> to vector<16x32xf32>
    %118 = arith.addf %116, %117 : vector<16x32xf32>
    %119 = arith.truncf %118 : vector<16x32xf32> to vector<16x32xbf16>
    %c0_28 = arith.constant 0 : index
    %c0_29 = arith.constant 0 : index
    %c0_30 = arith.constant 0 : index
    %120 = vector.load %arg7[%c0_28, %c0_29, %c0_30] : memref<2x32x64xbf16, #tpu.memory_space<vmem>>, vector<1x32x64xbf16>
    %121 = vector.shape_cast %120 : vector<1x32x64xbf16> to vector<32x64xbf16>
    %cst_31 = arith.constant dense<0.000000e+00> : vector<16x64xf32>
    %122 = tpu.matmul %119, %121, %cst_31 {dimension_numbers = #tpu.dot_dimension_numbers<[1], [0], [0], [1], [0, 0, 1, 1], [], []>} : vector<16x32xbf16>, vector<32x64xbf16>, vector<16x64xf32> -> vector<16x64xf32>
    %c0_32 = arith.constant 0 : index
    %c0_33 = arith.constant 0 : index
    %c0_34 = arith.constant 0 : index
    %123 = vector.load %arg8[%c0_32, %c0_33, %c0_34] : memref<2x1x64xf32, #tpu.memory_space<vmem>>, vector<1x1x64xf32>
    %124 = vector.shape_cast %123 : vector<1x1x64xf32> to vector<1x64xf32>
    %125 = vector.broadcast %124 : vector<1x64xf32> to vector<16x64xf32>
    %126 = arith.addf %122, %125 : vector<16x64xf32>
    %cst_35 = arith.constant 0.000000e+00 : f32
    %127 = vector.broadcast %cst_35 : f32 to vector<16x64xf32>
    %128 = arith.maximumf %126, %127 : vector<16x64xf32>
    %129 = arith.truncf %128 : vector<16x64xf32> to vector<16x64xbf16>
    %c0_36 = arith.constant 0 : index
    %c0_37 = arith.constant 0 : index
    %c0_38 = arith.constant 0 : index
    %130 = vector.load %arg9[%c0_36, %c0_37, %c0_38] : memref<2x64x32xbf16, #tpu.memory_space<vmem>>, vector<1x64x32xbf16>
    %131 = vector.shape_cast %130 : vector<1x64x32xbf16> to vector<64x32xbf16>
    %cst_39 = arith.constant dense<0.000000e+00> : vector<16x32xf32>
    %132 = tpu.matmul %129, %131, %cst_39 {dimension_numbers = #tpu.dot_dimension_numbers<[1], [0], [0], [1], [0, 0, 1, 1], [], []>} : vector<16x64xbf16>, vector<64x32xbf16>, vector<16x32xf32> -> vector<16x32xf32>
    %133 = vector.extract_strided_slice %10 {offsets = [3, 0], sizes = [1, 32], strides = [1, 1]} : vector<6x32xf32> to vector<1x32xf32>
    %134 = vector.broadcast %133 : vector<1x32xf32> to vector<16x32xf32>
    %135 = arith.addf %132, %134 : vector<16x32xf32>
    %136 = arith.addf %118, %135 : vector<16x32xf32>
    %137 = vector.extract_strided_slice %10 {offsets = [4, 0], sizes = [1, 32], strides = [1, 1]} : vector<6x32xf32> to vector<1x32xf32>
    %138 = vector.extract_strided_slice %10 {offsets = [5, 0], sizes = [1, 32], strides = [1, 1]} : vector<6x32xf32> to vector<1x32xf32>
    %cst_40 = arith.constant dense<0.000000e+00> : vector<16xf32>
    %139 = vector.multi_reduction <add>, %136, %cst_40 [1] : vector<16x32xf32> to vector<16xf32>
    %140 = vector.shape_cast %139 : vector<16xf32> to vector<16x1xf32>
    %cst_41 = arith.constant 3.200000e+01 : f32
    %141 = vector.broadcast %cst_41 : f32 to vector<16x1xf32>
    %142 = arith.divf %140, %141 : vector<16x1xf32>
    %143 = vector.broadcast %142 : vector<16x1xf32> to vector<16x32xf32>
    %144 = arith.subf %136, %143 : vector<16x32xf32>
    %145 = arith.mulf %144, %144 : vector<16x32xf32>
    %cst_42 = arith.constant dense<0.000000e+00> : vector<16xf32>
    %146 = vector.multi_reduction <add>, %145, %cst_42 [1] : vector<16x32xf32> to vector<16xf32>
    %147 = vector.shape_cast %146 : vector<16xf32> to vector<16x1xf32>
    %cst_43 = arith.constant 3.200000e+01 : f32
    %148 = vector.broadcast %cst_43 : f32 to vector<16x1xf32>
    %149 = arith.divf %147, %148 : vector<16x1xf32>
    %150 = vector.broadcast %142 : vector<16x1xf32> to vector<16x32xf32>
    %151 = arith.subf %136, %150 : vector<16x32xf32>
    %cst_44 = arith.constant 9.99999974E-6 : f32
    %152 = vector.broadcast %cst_44 : f32 to vector<16x1xf32>
    %153 = arith.addf %149, %152 : vector<16x1xf32>
    %154 = math.rsqrt %153 : vector<16x1xf32>
    %155 = vector.broadcast %154 : vector<16x1xf32> to vector<16x32xf32>
    %156 = arith.mulf %151, %155 : vector<16x32xf32>
    %157 = vector.broadcast %137 : vector<1x32xf32> to vector<16x32xf32>
    %158 = arith.mulf %156, %157 : vector<16x32xf32>
    %159 = vector.broadcast %138 : vector<1x32xf32> to vector<16x32xf32>
    %160 = arith.addf %158, %159 : vector<16x32xf32>
    %c1 = arith.constant 1 : index
    %c0_45 = arith.constant 0 : index
    %c0_46 = arith.constant 0 : index
    %161 = vector.load %arg6[%c1, %c0_45, %c0_46] : memref<2x6x32xf32, #tpu.memory_space<vmem>>, vector<1x6x32xf32>
    %162 = vector.shape_cast %161 : vector<1x6x32xf32> to vector<6x32xf32>
    %163 = arith.truncf %160 : vector<16x32xf32> to vector<16x32xbf16>
    %c1_47 = arith.constant 1 : index
    %c0_48 = arith.constant 0 : index
    %c0_49 = arith.constant 0 : index
    %164 = vector.load %arg3[%c1_47, %c0_48, %c0_49] : memref<2x32x96xbf16, #tpu.memory_space<vmem>>, vector<1x32x96xbf16>
    %165 = vector.shape_cast %164 : vector<1x32x96xbf16> to vector<32x96xbf16>
    %cst_50 = arith.constant dense<0.000000e+00> : vector<16x96xf32>
    %166 = tpu.matmul %163, %165, %cst_50 {dimension_numbers = #tpu.dot_dimension_numbers<[1], [0], [0], [1], [0, 0, 1, 1], [], []>} : vector<16x32xbf16>, vector<32x96xbf16>, vector<16x96xf32> -> vector<16x96xf32>
    %c1_51 = arith.constant 1 : index
    %c0_52 = arith.constant 0 : index
    %c0_53 = arith.constant 0 : index
    %167 = vector.load %arg4[%c1_51, %c0_52, %c0_53] : memref<2x1x96xf32, #tpu.memory_space<vmem>>, vector<1x1x96xf32>
    %168 = vector.shape_cast %167 : vector<1x1x96xf32> to vector<1x96xf32>
    %169 = vector.broadcast %168 : vector<1x96xf32> to vector<16x96xf32>
    %170 = arith.addf %166, %169 : vector<16x96xf32>
    %171 = vector.extract_strided_slice %170 {offsets = [0, 0], sizes = [16, 32], strides = [1, 1]} : vector<16x96xf32> to vector<16x32xf32>
    %172 = vector.shape_cast %171 : vector<16x32xf32> to vector<2x8x32xf32>
    %173 = vector.extract_strided_slice %172 {offsets = [0, 0, 0], sizes = [2, 8, 8], strides = [1, 1, 1]} : vector<2x8x32xf32> to vector<2x8x8xf32>
    %174 = vector.extract_strided_slice %172 {offsets = [0, 0, 8], sizes = [2, 8, 8], strides = [1, 1, 1]} : vector<2x8x32xf32> to vector<2x8x8xf32>
    %175 = vector.extract_strided_slice %172 {offsets = [0, 0, 16], sizes = [2, 8, 8], strides = [1, 1, 1]} : vector<2x8x32xf32> to vector<2x8x8xf32>
    %176 = vector.extract_strided_slice %172 {offsets = [0, 0, 24], sizes = [2, 8, 8], strides = [1, 1, 1]} : vector<2x8x32xf32> to vector<2x8x8xf32>
    %177 = vector.shape_cast %173 : vector<2x8x8xf32> to vector<1x2x8x8xf32>
    %178 = vector.shape_cast %174 : vector<2x8x8xf32> to vector<1x2x8x8xf32>
    %179 = vector.shape_cast %175 : vector<2x8x8xf32> to vector<1x2x8x8xf32>
    %180 = vector.shape_cast %176 : vector<2x8x8xf32> to vector<1x2x8x8xf32>
    %181 = tpu.concatenate %177, %178, %179, %180 in 0 : vector<1x2x8x8xf32>, vector<1x2x8x8xf32>, vector<1x2x8x8xf32>, vector<1x2x8x8xf32> -> vector<4x2x8x8xf32>
    %182 = vector.shape_cast %181 : vector<4x2x8x8xf32> to vector<8x8x8xf32>
    %183 = arith.truncf %182 : vector<8x8x8xf32> to vector<8x8x8xbf16>
    %184 = vector.extract_strided_slice %170 {offsets = [0, 32], sizes = [16, 32], strides = [1, 1]} : vector<16x96xf32> to vector<16x32xf32>
    %185 = vector.shape_cast %184 : vector<16x32xf32> to vector<2x8x32xf32>
    %186 = vector.extract_strided_slice %185 {offsets = [0, 0, 0], sizes = [2, 8, 8], strides = [1, 1, 1]} : vector<2x8x32xf32> to vector<2x8x8xf32>
    %187 = vector.extract_strided_slice %185 {offsets = [0, 0, 8], sizes = [2, 8, 8], strides = [1, 1, 1]} : vector<2x8x32xf32> to vector<2x8x8xf32>
    %188 = vector.extract_strided_slice %185 {offsets = [0, 0, 16], sizes = [2, 8, 8], strides = [1, 1, 1]} : vector<2x8x32xf32> to vector<2x8x8xf32>
    %189 = vector.extract_strided_slice %185 {offsets = [0, 0, 24], sizes = [2, 8, 8], strides = [1, 1, 1]} : vector<2x8x32xf32> to vector<2x8x8xf32>
    %190 = vector.shape_cast %186 : vector<2x8x8xf32> to vector<1x2x8x8xf32>
    %191 = vector.shape_cast %187 : vector<2x8x8xf32> to vector<1x2x8x8xf32>
    %192 = vector.shape_cast %188 : vector<2x8x8xf32> to vector<1x2x8x8xf32>
    %193 = vector.shape_cast %189 : vector<2x8x8xf32> to vector<1x2x8x8xf32>
    %194 = tpu.concatenate %190, %191, %192, %193 in 0 : vector<1x2x8x8xf32>, vector<1x2x8x8xf32>, vector<1x2x8x8xf32>, vector<1x2x8x8xf32> -> vector<4x2x8x8xf32>
    %195 = vector.shape_cast %194 : vector<4x2x8x8xf32> to vector<8x8x8xf32>
    %196 = arith.truncf %195 : vector<8x8x8xf32> to vector<8x8x8xbf16>
    %197 = vector.extract_strided_slice %170 {offsets = [0, 64], sizes = [16, 32], strides = [1, 1]} : vector<16x96xf32> to vector<16x32xf32>
    %198 = vector.shape_cast %197 : vector<16x32xf32> to vector<2x8x32xf32>
    %199 = vector.extract_strided_slice %198 {offsets = [0, 0, 0], sizes = [2, 8, 8], strides = [1, 1, 1]} : vector<2x8x32xf32> to vector<2x8x8xf32>
    %200 = vector.extract_strided_slice %198 {offsets = [0, 0, 8], sizes = [2, 8, 8], strides = [1, 1, 1]} : vector<2x8x32xf32> to vector<2x8x8xf32>
    %201 = vector.extract_strided_slice %198 {offsets = [0, 0, 16], sizes = [2, 8, 8], strides = [1, 1, 1]} : vector<2x8x32xf32> to vector<2x8x8xf32>
    %202 = vector.extract_strided_slice %198 {offsets = [0, 0, 24], sizes = [2, 8, 8], strides = [1, 1, 1]} : vector<2x8x32xf32> to vector<2x8x8xf32>
    %203 = vector.shape_cast %199 : vector<2x8x8xf32> to vector<1x2x8x8xf32>
    %204 = vector.shape_cast %200 : vector<2x8x8xf32> to vector<1x2x8x8xf32>
    %205 = vector.shape_cast %201 : vector<2x8x8xf32> to vector<1x2x8x8xf32>
    %206 = vector.shape_cast %202 : vector<2x8x8xf32> to vector<1x2x8x8xf32>
    %207 = tpu.concatenate %203, %204, %205, %206 in 0 : vector<1x2x8x8xf32>, vector<1x2x8x8xf32>, vector<1x2x8x8xf32>, vector<1x2x8x8xf32> -> vector<4x2x8x8xf32>
    %208 = vector.shape_cast %207 : vector<4x2x8x8xf32> to vector<8x8x8xf32>
    %209 = arith.truncf %208 : vector<8x8x8xf32> to vector<8x8x8xbf16>
    "tpu.trace_start"() <{level = 10 : i32, message = "nqd,nkd->nqk"}> : () -> ()
    %cst_54 = arith.constant dense<0.000000e+00> : vector<8x8x8xf32>
    %210 = tpu.matmul %183, %196, %cst_54 {dimension_numbers = #tpu.dot_dimension_numbers<[2], [2], [1], [1], [0, 0, 0, 1, 1, 1], [0], [0]>} : vector<8x8x8xbf16>, vector<8x8x8xbf16>, vector<8x8x8xf32> -> vector<8x8x8xf32>
    "tpu.trace_stop"() : () -> ()
    %cst_55 = arith.constant 0.353553385 : f32
    %211 = vector.broadcast %cst_55 : f32 to vector<8x8x8xf32>
    %212 = arith.mulf %210, %211 : vector<8x8x8xf32>
    %cst_56 = arith.constant -1.000000e+30 : f32
    %213 = vector.shape_cast %8 : vector<1x8x8xi1> to vector<1x8x8xi1>
    %214 = vector.broadcast %213 : vector<1x8x8xi1> to vector<8x8x8xi1>
    %215 = vector.broadcast %cst_56 : f32 to vector<8x8x8xf32>
    %216 = arith.select %214, %215, %212 : vector<8x8x8xi1>, vector<8x8x8xf32>
    %cst_57 = arith.constant dense<0xFF800000> : vector<8x8xf32>
    %217 = vector.multi_reduction <maximumf>, %216, %cst_57 [2] : vector<8x8x8xf32> to vector<8x8xf32>
    %218 = vector.shape_cast %217 : vector<8x8xf32> to vector<8x8x1xf32>
    %219 = vector.broadcast %218 : vector<8x8x1xf32> to vector<8x8x8xf32>
    %220 = arith.subf %216, %219 : vector<8x8x8xf32>
    %221 = math.exp %220 : vector<8x8x8xf32>
    %cst_58 = arith.constant dense<0.000000e+00> : vector<8x8xf32>
    %222 = vector.multi_reduction <add>, %221, %cst_58 [2] : vector<8x8x8xf32> to vector<8x8xf32>
    %223 = vector.shape_cast %222 : vector<8x8xf32> to vector<8x8x1xf32>
    %224 = vector.broadcast %223 : vector<8x8x1xf32> to vector<8x8x8xf32>
    %225 = arith.divf %221, %224 : vector<8x8x8xf32>
    %226 = arith.truncf %225 : vector<8x8x8xf32> to vector<8x8x8xbf16>
    "tpu.trace_start"() <{level = 10 : i32, message = "nqk,nkd->nqd"}> : () -> ()
    %cst_59 = arith.constant dense<0.000000e+00> : vector<8x8x8xf32>
    %227 = tpu.matmul %226, %209, %cst_59 {dimension_numbers = #tpu.dot_dimension_numbers<[2], [1], [1], [2], [0, 0, 0, 1, 1, 2], [0], [0]>} : vector<8x8x8xbf16>, vector<8x8x8xbf16>, vector<8x8x8xf32> -> vector<8x8x8xf32>
    "tpu.trace_stop"() : () -> ()
    %228 = vector.shape_cast %227 : vector<8x8x8xf32> to vector<4x2x8x8xf32>
    %229 = vector.extract_strided_slice %228 {offsets = [0, 0, 0, 0], sizes = [1, 2, 8, 8], strides = [1, 1, 1, 1]} : vector<4x2x8x8xf32> to vector<1x2x8x8xf32>
    %230 = vector.shape_cast %229 : vector<1x2x8x8xf32> to vector<2x8x8xf32>
    %231 = vector.extract_strided_slice %228 {offsets = [1, 0, 0, 0], sizes = [1, 2, 8, 8], strides = [1, 1, 1, 1]} : vector<4x2x8x8xf32> to vector<1x2x8x8xf32>
    %232 = vector.shape_cast %231 : vector<1x2x8x8xf32> to vector<2x8x8xf32>
    %233 = vector.extract_strided_slice %228 {offsets = [2, 0, 0, 0], sizes = [1, 2, 8, 8], strides = [1, 1, 1, 1]} : vector<4x2x8x8xf32> to vector<1x2x8x8xf32>
    %234 = vector.shape_cast %233 : vector<1x2x8x8xf32> to vector<2x8x8xf32>
    %235 = vector.extract_strided_slice %228 {offsets = [3, 0, 0, 0], sizes = [1, 2, 8, 8], strides = [1, 1, 1, 1]} : vector<4x2x8x8xf32> to vector<1x2x8x8xf32>
    %236 = vector.shape_cast %235 : vector<1x2x8x8xf32> to vector<2x8x8xf32>
    %237 = tpu.concatenate %230, %232, %234, %236 in 2 : vector<2x8x8xf32>, vector<2x8x8xf32>, vector<2x8x8xf32>, vector<2x8x8xf32> -> vector<2x8x32xf32>
    %238 = vector.shape_cast %237 : vector<2x8x32xf32> to vector<16x32xf32>
    %239 = arith.truncf %238 : vector<16x32xf32> to vector<16x32xbf16>
    %c1_60 = arith.constant 1 : index
    %c0_61 = arith.constant 0 : index
    %c0_62 = arith.constant 0 : index
    %240 = vector.load %arg5[%c1_60, %c0_61, %c0_62] : memref<2x32x32xbf16, #tpu.memory_space<vmem>>, vector<1x32x32xbf16>
    %241 = vector.shape_cast %240 : vector<1x32x32xbf16> to vector<32x32xbf16>
    %cst_63 = arith.constant dense<0.000000e+00> : vector<16x32xf32>
    %242 = tpu.matmul %239, %241, %cst_63 {dimension_numbers = #tpu.dot_dimension_numbers<[1], [0], [0], [1], [0, 0, 1, 1], [], []>} : vector<16x32xbf16>, vector<32x32xbf16>, vector<16x32xf32> -> vector<16x32xf32>
    %243 = vector.extract_strided_slice %162 {offsets = [0, 0], sizes = [1, 32], strides = [1, 1]} : vector<6x32xf32> to vector<1x32xf32>
    %244 = vector.broadcast %243 : vector<1x32xf32> to vector<16x32xf32>
    %245 = arith.addf %242, %244 : vector<16x32xf32>
    %246 = arith.addf %160, %245 : vector<16x32xf32>
    %247 = vector.extract_strided_slice %162 {offsets = [1, 0], sizes = [1, 32], strides = [1, 1]} : vector<6x32xf32> to vector<1x32xf32>
    %248 = vector.extract_strided_slice %162 {offsets = [2, 0], sizes = [1, 32], strides = [1, 1]} : vector<6x32xf32> to vector<1x32xf32>
    %cst_64 = arith.constant dense<0.000000e+00> : vector<16xf32>
    %249 = vector.multi_reduction <add>, %246, %cst_64 [1] : vector<16x32xf32> to vector<16xf32>
    %250 = vector.shape_cast %249 : vector<16xf32> to vector<16x1xf32>
    %cst_65 = arith.constant 3.200000e+01 : f32
    %251 = vector.broadcast %cst_65 : f32 to vector<16x1xf32>
    %252 = arith.divf %250, %251 : vector<16x1xf32>
    %253 = vector.broadcast %252 : vector<16x1xf32> to vector<16x32xf32>
    %254 = arith.subf %246, %253 : vector<16x32xf32>
    %255 = arith.mulf %254, %254 : vector<16x32xf32>
    %cst_66 = arith.constant dense<0.000000e+00> : vector<16xf32>
    %256 = vector.multi_reduction <add>, %255, %cst_66 [1] : vector<16x32xf32> to vector<16xf32>
    %257 = vector.shape_cast %256 : vector<16xf32> to vector<16x1xf32>
    %cst_67 = arith.constant 3.200000e+01 : f32
    %258 = vector.broadcast %cst_67 : f32 to vector<16x1xf32>
    %259 = arith.divf %257, %258 : vector<16x1xf32>
    %260 = vector.broadcast %252 : vector<16x1xf32> to vector<16x32xf32>
    %261 = arith.subf %246, %260 : vector<16x32xf32>
    %cst_68 = arith.constant 9.99999974E-6 : f32
    %262 = vector.broadcast %cst_68 : f32 to vector<16x1xf32>
    %263 = arith.addf %259, %262 : vector<16x1xf32>
    %264 = math.rsqrt %263 : vector<16x1xf32>
    %265 = vector.broadcast %264 : vector<16x1xf32> to vector<16x32xf32>
    %266 = arith.mulf %261, %265 : vector<16x32xf32>
    %267 = vector.broadcast %247 : vector<1x32xf32> to vector<16x32xf32>
    %268 = arith.mulf %266, %267 : vector<16x32xf32>
    %269 = vector.broadcast %248 : vector<1x32xf32> to vector<16x32xf32>
    %270 = arith.addf %268, %269 : vector<16x32xf32>
    %271 = arith.truncf %270 : vector<16x32xf32> to vector<16x32xbf16>
    %c1_69 = arith.constant 1 : index
    %c0_70 = arith.constant 0 : index
    %c0_71 = arith.constant 0 : index
    %272 = vector.load %arg7[%c1_69, %c0_70, %c0_71] : memref<2x32x64xbf16, #tpu.memory_space<vmem>>, vector<1x32x64xbf16>
    %273 = vector.shape_cast %272 : vector<1x32x64xbf16> to vector<32x64xbf16>
    %cst_72 = arith.constant dense<0.000000e+00> : vector<16x64xf32>
    %274 = tpu.matmul %271, %273, %cst_72 {dimension_numbers = #tpu.dot_dimension_numbers<[1], [0], [0], [1], [0, 0, 1, 1], [], []>} : vector<16x32xbf16>, vector<32x64xbf16>, vector<16x64xf32> -> vector<16x64xf32>
    %c1_73 = arith.constant 1 : index
    %c0_74 = arith.constant 0 : index
    %c0_75 = arith.constant 0 : index
    %275 = vector.load %arg8[%c1_73, %c0_74, %c0_75] : memref<2x1x64xf32, #tpu.memory_space<vmem>>, vector<1x1x64xf32>
    %276 = vector.shape_cast %275 : vector<1x1x64xf32> to vector<1x64xf32>
    %277 = vector.broadcast %276 : vector<1x64xf32> to vector<16x64xf32>
    %278 = arith.addf %274, %277 : vector<16x64xf32>
    %cst_76 = arith.constant 0.000000e+00 : f32
    %279 = vector.broadcast %cst_76 : f32 to vector<16x64xf32>
    %280 = arith.maximumf %278, %279 : vector<16x64xf32>
    %281 = arith.truncf %280 : vector<16x64xf32> to vector<16x64xbf16>
    %c1_77 = arith.constant 1 : index
    %c0_78 = arith.constant 0 : index
    %c0_79 = arith.constant 0 : index
    %282 = vector.load %arg9[%c1_77, %c0_78, %c0_79] : memref<2x64x32xbf16, #tpu.memory_space<vmem>>, vector<1x64x32xbf16>
    %283 = vector.shape_cast %282 : vector<1x64x32xbf16> to vector<64x32xbf16>
    %cst_80 = arith.constant dense<0.000000e+00> : vector<16x32xf32>
    %284 = tpu.matmul %281, %283, %cst_80 {dimension_numbers = #tpu.dot_dimension_numbers<[1], [0], [0], [1], [0, 0, 1, 1], [], []>} : vector<16x64xbf16>, vector<64x32xbf16>, vector<16x32xf32> -> vector<16x32xf32>
    %285 = vector.extract_strided_slice %162 {offsets = [3, 0], sizes = [1, 32], strides = [1, 1]} : vector<6x32xf32> to vector<1x32xf32>
    %286 = vector.broadcast %285 : vector<1x32xf32> to vector<16x32xf32>
    %287 = arith.addf %284, %286 : vector<16x32xf32>
    %288 = arith.addf %270, %287 : vector<16x32xf32>
    %289 = vector.extract_strided_slice %162 {offsets = [4, 0], sizes = [1, 32], strides = [1, 1]} : vector<6x32xf32> to vector<1x32xf32>
    %290 = vector.extract_strided_slice %162 {offsets = [5, 0], sizes = [1, 32], strides = [1, 1]} : vector<6x32xf32> to vector<1x32xf32>
    %cst_81 = arith.constant dense<0.000000e+00> : vector<16xf32>
    %291 = vector.multi_reduction <add>, %288, %cst_81 [1] : vector<16x32xf32> to vector<16xf32>
    %292 = vector.shape_cast %291 : vector<16xf32> to vector<16x1xf32>
    %cst_82 = arith.constant 3.200000e+01 : f32
    %293 = vector.broadcast %cst_82 : f32 to vector<16x1xf32>
    %294 = arith.divf %292, %293 : vector<16x1xf32>
    %295 = vector.broadcast %294 : vector<16x1xf32> to vector<16x32xf32>
    %296 = arith.subf %288, %295 : vector<16x32xf32>
    %297 = arith.mulf %296, %296 : vector<16x32xf32>
    %cst_83 = arith.constant dense<0.000000e+00> : vector<16xf32>
    %298 = vector.multi_reduction <add>, %297, %cst_83 [1] : vector<16x32xf32> to vector<16xf32>
    %299 = vector.shape_cast %298 : vector<16xf32> to vector<16x1xf32>
    %cst_84 = arith.constant 3.200000e+01 : f32
    %300 = vector.broadcast %cst_84 : f32 to vector<16x1xf32>
    %301 = arith.divf %299, %300 : vector<16x1xf32>
    %302 = vector.broadcast %294 : vector<16x1xf32> to vector<16x32xf32>
    %303 = arith.subf %288, %302 : vector<16x32xf32>
    %cst_85 = arith.constant 9.99999974E-6 : f32
    %304 = vector.broadcast %cst_85 : f32 to vector<16x1xf32>
    %305 = arith.addf %301, %304 : vector<16x1xf32>
    %306 = math.rsqrt %305 : vector<16x1xf32>
    %307 = vector.broadcast %306 : vector<16x1xf32> to vector<16x32xf32>
    %308 = arith.mulf %303, %307 : vector<16x32xf32>
    %309 = vector.broadcast %289 : vector<1x32xf32> to vector<16x32xf32>
    %310 = arith.mulf %308, %309 : vector<16x32xf32>
    %311 = vector.broadcast %290 : vector<1x32xf32> to vector<16x32xf32>
    %312 = arith.addf %310, %311 : vector<16x32xf32>
    %313 = vector.shape_cast %312 : vector<16x32xf32> to vector<2x8x32xf32>
    %c0_86 = arith.constant 0 : index
    %c0_87 = arith.constant 0 : index
    %c0_88 = arith.constant 0 : index
    %314 = vector.load %arg10[%c0_86, %c0_87, %c0_88] : memref<2x8x32xf32, #tpu.memory_space<vmem>>, vector<2x8x32xf32>
    tpu.vector_store %arg10[%c0_86, %c0_87, %c0_88], %313 {strides = array<i32>} : memref<2x8x32xf32, #tpu.memory_space<vmem>>, vector<2x8x32xf32>,
    return
  }
  func.func @transform_0(%arg0: i32) -> (i32, i32, i32) {
    %c0_i32 = arith.constant 0 : i32
    %c0_i32_0 = arith.constant 0 : i32
    %c0_i32_1 = arith.constant 0 : i32
    return %arg0, %c0_i32, %c0_i32_0 : i32, i32, i32
  }
  func.func @transform_1(%arg0: i32) -> (i32, i32) {
    %c0_i32 = arith.constant 0 : i32
    %c0_i32_0 = arith.constant 0 : i32
    %c0_i32_1 = arith.constant 0 : i32
    return %c0_i32, %c0_i32_0 : i32, i32
  }
  func.func @transform_2(%arg0: i32) -> (i32, i32, i32) {
    %c0_i32 = arith.constant 0 : i32
    %c0_i32_0 = arith.constant 0 : i32
    %c0_i32_1 = arith.constant 0 : i32
    %c0_i32_2 = arith.constant 0 : i32
    return %c0_i32, %c0_i32_0, %c0_i32_1 : i32, i32, i32
  }
  func.func @transform_3(%arg0: i32) -> (i32, i32, i32) {
    %c0_i32 = arith.constant 0 : i32
    %c0_i32_0 = arith.constant 0 : i32
    %c0_i32_1 = arith.constant 0 : i32
    %c0_i32_2 = arith.constant 0 : i32
    return %c0_i32, %c0_i32_0, %c0_i32_1 : i32, i32, i32
  }
  func.func @transform_4(%arg0: i32) -> (i32, i32, i32) {
    %c0_i32 = arith.constant 0 : i32
    %c0_i32_0 = arith.constant 0 : i32
    %c0_i32_1 = arith.constant 0 : i32
    %c0_i32_2 = arith.constant 0 : i32
    return %c0_i32, %c0_i32_0, %c0_i32_1 : i32, i32, i32
  }
  func.func @transform_5(%arg0: i32) -> (i32, i32, i32) {
    %c0_i32 = arith.constant 0 : i32
    %c0_i32_0 = arith.constant 0 : i32
    %c0_i32_1 = arith.constant 0 : i32
    %c0_i32_2 = arith.constant 0 : i32
    return %c0_i32, %c0_i32_0, %c0_i32_1 : i32, i32, i32
  }
  func.func @transform_6(%arg0: i32) -> (i32, i32, i32) {
    %c0_i32 = arith.constant 0 : i32
    %c0_i32_0 = arith.constant 0 : i32
    %c0_i32_1 = arith.constant 0 : i32
    %c0_i32_2 = arith.constant 0 : i32
    return %c0_i32, %c0_i32_0, %c0_i32_1 : i32, i32, i32
  }
  func.func @transform_7(%arg0: i32) -> (i32, i32, i32) {
    %c0_i32 = arith.constant 0 : i32
    %c0_i32_0 = arith.constant 0 : i32
    %c0_i32_1 = arith.constant 0 : i32
    %c0_i32_2 = arith.constant 0 : i32
    return %c0_i32, %c0_i32_0, %c0_i32_1 : i32, i32, i32
  }
  func.func @transform_8(%arg0: i32) -> (i32, i32, i32) {
    %c0_i32 = arith.constant 0 : i32
    %c0_i32_0 = arith.constant 0 : i32
    %c0_i32_1 = arith.constant 0 : i32
    %c0_i32_2 = arith.constant 0 : i32
    return %c0_i32, %c0_i32_0, %c0_i32_1 : i32, i32, i32
  }
  func.func @transform_9(%arg0: i32) -> (i32, i32, i32) {
    %c0_i32 = arith.constant 0 : i32
    %c0_i32_0 = arith.constant 0 : i32
    %c0_i32_1 = arith.constant 0 : i32
    return %arg0, %c0_i32, %c0_i32_0 : i32, i32, i32
  }
}

</mosaic_0001>

<llo_original>
// kernel: causal_transformer.1
$region0: #{causal_transformer.1}
  #allocation0 [shape = 'u32[]', space=smem, size = 0x4, offset = 0x4, fixed_abs, tag = 'smem constant byte address 0x4 - core index']
  #allocation1 [shape = 'u32[144,128]{1,0:T(1,128)}', space=vmem, size = 0x12000, scoped, tag = 'internal scratch']
  %s0 = inlined_call_operand.vmem [shape: f32[2,8,32], index: 0, kind: input, shape index: {}]
  %s1 = inlined_call_operand.vmem [shape: f32[8,32], index: 1, kind: input, shape index: {}]
  %s2 = inlined_call_operand.vmem [shape: bf16[2,32,96], index: 2, kind: input, shape index: {}]
  %s3 = inlined_call_operand.vmem [shape: f32[2,1,96], index: 3, kind: input, shape index: {}]
  %s4 = inlined_call_operand.vmem [shape: bf16[2,32,32], index: 4, kind: input, shape index: {}]
  %s5 = inlined_call_operand.vmem [shape: f32[2,6,32], index: 5, kind: input, shape index: {}]
  %s6 = inlined_call_operand.vmem [shape: bf16[2,32,64], index: 6, kind: input, shape index: {}]
  %s7 = inlined_call_operand.vmem [shape: f32[2,1,64], index: 7, kind: input, shape index: {}]
  %s8 = inlined_call_operand.vmem [shape: bf16[2,64,32], index: 8, kind: input, shape index: {}]
  %s9 = inlined_call_operand.hbm [shape: f32[2,8,32], index: 9, kind: output, shape index: {}]
  %s10 = sld [smem:[#allocation0]]
  $region46: #{causal_transformer.1} parent=0
    _
  %s12 = ssub.s32 1, %s10
  %s13 = scalar_select 0, %s12, %s10
  $region1: #{causal_transformer.1} parent=0
    #allocation2 [shape = 'u8[8192]{0}', space=vmem, size = 0x2000, scoped, tag = 'output window, operand 0, single buffered']
    #allocation3 [shape = 's32[1]{0}', space=sflag, size = 0x4, scoped, tag = 'scoped memory for causal_transformer.1']
    %14 = vsyncpa [#allocation3], 0
    // Predicated region
    $region2: #{causal_transformer.1} parent=1 // pred_check
      _
    $region3: #{causal_transformer.1} parent=1 // pred_check_branch
      %16 = sbr.rel (0) target = $region5
    $region4: #{causal_transformer.1} parent=1 // pred_region
      _
    $region5: #{causal_transformer.1} parent=1 // pred_fallthru
      _
    // Predicated region
    $region6: #{causal_transformer.1} parent=1 // pred_check
      _
    $region7: #{causal_transformer.1} parent=1 // pred_check_branch
      %18 = sbr.rel (0) target = $region9
    $region8: #{causal_transformer.1} parent=1 // pred_region
      _
    $region9: #{causal_transformer.1} parent=1 // pred_fallthru
      _
    // Predicated region
    $region10: #{causal_transformer.1} parent=1 // pred_check
      _
    $region11: #{causal_transformer.1} parent=1 // pred_check_branch
      %20 = sbr.rel (0) target = $region13
    $region12: #{causal_transformer.1} parent=1 // pred_region
      _
    $region13: #{causal_transformer.1} parent=1 // pred_fallthru
      _
    // Predicated region
    $region14: #{causal_transformer.1} parent=1 // pred_check
      _
    $region15: #{causal_transformer.1} parent=1 // pred_check_branch
      %22 = sbr.rel (0) target = $region17
    $region16: #{causal_transformer.1} parent=1 // pred_region
      _
    $region17: #{causal_transformer.1} parent=1 // pred_fallthru
      _
    // Predicated region
    $region18: #{causal_transformer.1} parent=1 // pred_check
      _
    $region19: #{causal_transformer.1} parent=1 // pred_check_branch
      %24 = sbr.rel (0) target = $region21
    $region20: #{causal_transformer.1} parent=1 // pred_region
      _
    $region21: #{causal_transformer.1} parent=1 // pred_fallthru
      _
    // Predicated region
    $region22: #{causal_transformer.1} parent=1 // pred_check
      _
    $region23: #{causal_transformer.1} parent=1 // pred_check_branch
      %26 = sbr.rel (0) target = $region25
    $region24: #{causal_transformer.1} parent=1 // pred_region
      _
    $region25: #{causal_transformer.1} parent=1 // pred_fallthru
      _
    // Predicated region
    $region26: #{causal_transformer.1} parent=1 // pred_check
      _
    $region27: #{causal_transformer.1} parent=1 // pred_check_branch
      %28 = sbr.rel (0) target = $region29
    $region28: #{causal_transformer.1} parent=1 // pred_region
      _
    $region29: #{causal_transformer.1} parent=1 // pred_fallthru
      _
    // Predicated region
    $region30: #{causal_transformer.1} parent=1 // pred_check
      _
    $region31: #{causal_transformer.1} parent=1 // pred_check_branch
      %30 = sbr.rel (0) target = $region33
    $region32: #{causal_transformer.1} parent=1 // pred_region
      _
    $region33: #{causal_transformer.1} parent=1 // pred_fallthru
      _
    // Predicated region
    $region34: #{causal_transformer.1} parent=1 // pred_check
      _
    $region35: #{causal_transformer.1} parent=1 // pred_check_branch
      %32 = sbr.rel (0) target = $region37
    $region36: #{causal_transformer.1} parent=1 // pred_region
      _
    $region37: #{causal_transformer.1} parent=1 // pred_fallthru
      _
    %v34 = vld [vmem:[%s0] sm:$0xff]
    %v35 = vld [vmem:[%s0 + $0x8] sm:$0xff]
    %v36 = vld [vmem:[%s1] sm:$0xff]
    %v37 = vadd.f32 %v34, %v36
    %v38 = vadd.f32 %v35, %v36
    %v39 = vlaneseq
    %v40 = vshrl.u32 %v39, 7
    %v41 = vlaneseq
    %v42 = vand.u32 %v41, 127
    %vm43 = vcmp.gt.s32.totalorder %v42, %v40
    %v44 = vld [vmem:[%s5] sm:$0x3f]
    %v45 = vpack.c.bf16 %v38, %v37
    %v46 = vld [vmem:[%s2] sm:$0xf]
    %v47 = vld [vmem:[%s2 + $0x4] sm:$0xf]
    %v48 = vld [vmem:[%s2 + $0x8] sm:$0xf]
    %v49 = vld [vmem:[%s2 + $0xc] sm:$0xf]
    %v50 = vld [vmem:[%s3] sm:$0x1]
    %v52 = vlaneseq
    %v53 = vshrl.u32 %v52, 7
    %v54 = vsub.s32 0, %v53
    %v55 = vrot.slane %v50, %v54
    %v61 = vunpack.c.l.b16 %v46
    %v62 = vunpack.c.l.b16 %v47
    %v63 = vunpack.c.l.b16 %v48
    %v64 = vunpack.c.l.b16 %v49
    %v65 = vpack.c.b16 %v62, %v61
    %v66 = vpack.c.b16 %v64, %v63
    %vm69 = vcmask 261120
    %v71 = vsel %vm69, %v45, 0
    %73 = vmatprep.subr.bf16.mxu0 0
    %74 = vmatpush1.bf16.msra.mxu0 0
    %75 = vmatprep.subr.bf16.mxu0 0
    %76 = vmatpush1.bf16.msra.mxu0 0
    %77 = vmatprep.subr.bf16.mxu0 0
    %78 = vmatpush1.bf16.msra.mxu0 0
    %79 = vmatprep.subr.bf16.mxu0 0
    %80 = vmatpush1.bf16.msra.mxu0 0
    %81 = vmatprep.subr.bf16.mxu0 0
    %82 = vmatpush1.bf16.msra.mxu0 0
    %83 = vmatprep.subr.bf16.mxu0 0
    %84 = vmatpush1.bf16.msra.mxu0 0
    %85 = vmatprep.subr.bf16.mxu0 0
    %86 = vmatpush1.bf16.msra.mxu0 %v66
    %87 = vmatprep.subr.bf16.mxu0 0
    %88 = vmatpush1.bf16.msra.mxu0 %v65
    %89 = vmatprep.subr.bf16.mxu0 0
    %90 = vmatpush2.bf16.msra.mxu0 0
    %91 = vmatprep.subr.bf16.mxu0 0
    %92 = vmatpush2.bf16.msra.mxu0 0
    %93 = vmatprep.subr.bf16.mxu0 0
    %94 = vmatpush2.bf16.msra.mxu0 0
    %95 = vmatprep.subr.bf16.mxu0 0
    %96 = vmatpush2.bf16.msra.mxu0 0
    %97 = vmatprep.subr.bf16.mxu0 0
    %98 = vmatpush2.bf16.msra.mxu0 0
    %99 = vmatprep.subr.bf16.mxu0 0
    %100 = vmatpush2.bf16.msra.mxu0 0
    %101 = vmatprep.subr.bf16.mxu0 0
    %102 = vmatpush2.bf16.msra.mxu0 0
    %103 = vmatprep.subr.bf16.mxu0 0
    %104 = vmatpush2.bf16.msra.mxu0 0
    %105 = vmatprep.mubr.bf16.mxu0 0
    %106 = vmatmul.mubr.bf16.gmra.mxu0 %v71
    %v107 = vpop.f32.mrf.mxu0
    %v108 = vadd.f32 %v55, %v107
    %v109 = vpop.f32.mrf.mxu0
    %v110 = vpop.f32.mrf.mxu0
    %v111 = vadd.f32 %v55, %v110
    %v112 = vpop.f32.mrf.mxu0
    %113 = vdwg.mxu0
    %116 = vrot.lane.b32.xlu0 %v108, 120
    %v117 = vpop.permute.xlu0 %116
    %118 = vrot.lane.b32.xlu0 %v111, 120
    %v119 = vpop.permute.xlu0 %118
    %122 = vrot.lane.b32.xlu0 %v108, 112
    %v123 = vpop.permute.xlu0 %122
    %124 = vrot.lane.b32.xlu0 %v111, 112
    %v125 = vpop.permute.xlu0 %124
    %128 = vrot.lane.b32.xlu0 %v108, 104
    %v129 = vpop.permute.xlu0 %128
    %130 = vrot.lane.b32.xlu0 %v111, 104
    %v131 = vpop.permute.xlu0 %130
    %v134 = vpack.c.bf16 %v108, %v108
    %v135 = vpack.c.bf16 %v111, %v111
    %v136 = vpack.c.bf16 %v117, %v117
    %v137 = vpack.c.bf16 %v119, %v119
    %v138 = vpack.c.bf16 %v123, %v123
    %v139 = vpack.c.bf16 %v125, %v125
    %v140 = vpack.c.bf16 %v129, %v129
    %v141 = vpack.c.bf16 %v131, %v131
    %143 = vrot.lane.b32.xlu0 %v134, 96
    %v144 = vpop.permute.xlu0 %143
    %vm145 = vcmask 64512
    %v147 = vsel %vm145, %v134, 0
    %v150 = vsel %vm145, %v144, 0
    %152 = vmatprep.subr.bf16.mxu0 0
    %153 = vmatpush1.bf16.xpose.msra.mxu0 0
    %154 = vmatprep.subr.bf16.mxu0 0
    %155 = vmatpush1.bf16.xpose.msra.mxu0 0
    %156 = vmatprep.subr.bf16.mxu0 0
    %157 = vmatpush1.bf16.xpose.msra.mxu0 0
    %158 = vmatprep.subr.bf16.mxu0 0
    %159 = vmatpush1.bf16.xpose.msra.mxu0 0
    %160 = vmatprep.subr.bf16.mxu0 0
    %161 = vmatpush1.bf16.xpose.msra.mxu0 0
    %162 = vmatprep.subr.bf16.mxu0 0
    %163 = vmatpush1.bf16.xpose.msra.mxu0 0
    %164 = vmatprep.subr.bf16.mxu0 0
    %165 = vmatpush1.bf16.xpose.msra.mxu0 0
    %166 = vmatprep.subr.bf16.mxu0 0
    %167 = vmatpush1.bf16.xpose.msra.mxu0 %v150
    %168 = vmatprep.subr.bf16.mxu0 0
    %169 = vmatpush2.bf16.xpose.msra.mxu0 0
    %170 = vmatprep.subr.bf16.mxu0 0
    %171 = vmatpush2.bf16.xpose.msra.mxu0 0
    %172 = vmatprep.subr.bf16.mxu0 0
    %173 = vmatpush2.bf16.xpose.msra.mxu0 0
    %174 = vmatprep.subr.bf16.mxu0 0
    %175 = vmatpush2.bf16.xpose.msra.mxu0 0
    %176 = vmatprep.subr.bf16.mxu0 0
    %177 = vmatpush2.bf16.xpose.msra.mxu0 0
    %178 = vmatprep.subr.bf16.mxu0 0
    %179 = vmatpush2.bf16.xpose.msra.mxu0 0
    %180 = vmatprep.subr.bf16.mxu0 0
    %181 = vmatpush2.bf16.xpose.msra.mxu0 0
    %182 = vmatprep.subr.bf16.mxu0 0
    %183 = vmatpush2.bf16.xpose.msra.mxu0 0
    %184 = vmatprep.mubr.bf16.mxu0 0
    %185 = vmatmul.mubr.bf16.gmra.mxu0 %v147
    %v186 = vpop.f32.mrf.mxu0
    %v187 = vadd.f32 0.0, %v186
    %v188 = vpop.f32.mrf.mxu0
    %v189 = vpop.f32.mrf.mxu0
    %v190 = vpop.f32.mrf.mxu0
    %191 = vdwg.mxu0
    %193 = vrot.lane.b32.xlu0 %v135, 96
    %v194 = vpop.permute.xlu0 %193
    %v196 = vsel %vm145, %v135, 0
    %v199 = vsel %vm145, %v194, 0
    %201 = vmatprep.subr.bf16.mxu0 0
    %202 = vmatpush1.bf16.xpose.msra.mxu0 0
    %203 = vmatprep.subr.bf16.mxu0 0
    %204 = vmatpush1.bf16.xpose.msra.mxu0 0
    %205 = vmatprep.subr.bf16.mxu0 0
    %206 = vmatpush1.bf16.xpose.msra.mxu0 0
    %207 = vmatprep.subr.bf16.mxu0 0
    %208 = vmatpush1.bf16.xpose.msra.mxu0 0
    %209 = vmatprep.subr.bf16.mxu0 0
    %210 = vmatpush1.bf16.xpose.msra.mxu0 0
    %211 = vmatprep.subr.bf16.mxu0 0
    %212 = vmatpush1.bf16.xpose.msra.mxu0 0
    %213 = vmatprep.subr.bf16.mxu0 0
    %214 = vmatpush1.bf16.xpose.msra.mxu0 0
    %215 = vmatprep.subr.bf16.mxu0 0
    %216 = vmatpush1.bf16.xpose.msra.mxu0 %v199
    %217 = vmatprep.subr.bf16.mxu0 0
    %218 = vmatpush2.bf16.xpose.msra.mxu0 0
    %219 = vmatprep.subr.bf16.mxu0 0
    %220 = vmatpush2.bf16.xpose.msra.mxu0 0
    %221 = vmatprep.subr.bf16.mxu0 0
    %222 = vmatpush2.bf16.xpose.msra.mxu0 0
    %223 = vmatprep.subr.bf16.mxu0 0
    %224 = vmatpush2.bf16.xpose.msra.mxu0 0
    %225 = vmatprep.subr.bf16.mxu0 0
    %226 = vmatpush2.bf16.xpose.msra.mxu0 0
    %227 = vmatprep.subr.bf16.mxu0 0
    %228 = vmatpush2.bf16.xpose.msra.mxu0 0
    %229 = vmatprep.subr.bf16.mxu0 0
    %230 = vmatpush2.bf16.xpose.msra.mxu0 0
    %231 = vmatprep.subr.bf16.mxu0 0
    %232 = vmatpush2.bf16.xpose.msra.mxu0 0
    %233 = vmatprep.mubr.bf16.mxu0 0
    %234 = vmatmul.mubr.bf16.gmra.mxu0 %v196
    %v235 = vpop.f32.mrf.mxu0
    %v236 = vadd.f32 0.0, %v235
    %v237 = vpop.f32.mrf.mxu0
    %v238 = vpop.f32.mrf.mxu0
    %v239 = vpop.f32.mrf.mxu0
    %240 = vdwg.mxu0
    %242 = vrot.lane.b32.xlu0 %v136, 96
    %v243 = vpop.permute.xlu0 %242
    %v245 = vsel %vm145, %v136, 0
    %v248 = vsel %vm145, %v243, 0
    %250 = vmatprep.subr.bf16.mxu0 0
    %251 = vmatpush1.bf16.xpose.msra.mxu0 0
    %252 = vmatprep.subr.bf16.mxu0 0
    %253 = vmatpush1.bf16.xpose.msra.mxu0 0
    %254 = vmatprep.subr.bf16.mxu0 0
    %255 = vmatpush1.bf16.xpose.msra.mxu0 0
    %256 = vmatprep.subr.bf16.mxu0 0
    %257 = vmatpush1.bf16.xpose.msra.mxu0 0
    %258 = vmatprep.subr.bf16.mxu0 0
    %259 = vmatpush1.bf16.xpose.msra.mxu0 0
    %260 = vmatprep.subr.bf16.mxu0 0
    %261 = vmatpush1.bf16.xpose.msra.mxu0 0
    %262 = vmatprep.subr.bf16.mxu0 0
    %263 = vmatpush1.bf16.xpose.msra.mxu0 0
    %264 = vmatprep.subr.bf16.mxu0 0
    %265 = vmatpush1.bf16.xpose.msra.mxu0 %v248
    %266 = vmatprep.subr.bf16.mxu0 0
    %267 = vmatpush2.bf16.xpose.msra.mxu0 0
    %268 = vmatprep.subr.bf16.mxu0 0
    %269 = vmatpush2.bf16.xpose.msra.mxu0 0
    %270 = vmatprep.subr.bf16.mxu0 0
    %271 = vmatpush2.bf16.xpose.msra.mxu0 0
    %272 = vmatprep.subr.bf16.mxu0 0
    %273 = vmatpush2.bf16.xpose.msra.mxu0 0
    %274 = vmatprep.subr.bf16.mxu0 0
    %275 = vmatpush2.bf16.xpose.msra.mxu0 0
    %276 = vmatprep.subr.bf16.mxu0 0
    %277 = vmatpush2.bf16.xpose.msra.mxu0 0
    %278 = vmatprep.subr.bf16.mxu0 0
    %279 = vmatpush2.bf16.xpose.msra.mxu0 0
    %280 = vmatprep.subr.bf16.mxu0 0
    %281 = vmatpush2.bf16.xpose.msra.mxu0 0
    %282 = vmatprep.mubr.bf16.mxu0 0
    %283 = vmatmul.mubr.bf16.gmra.mxu0 %v245
    %v284 = vpop.f32.mrf.mxu0
    %v285 = vadd.f32 0.0, %v284
    %v286 = vpop.f32.mrf.mxu0
    %v287 = vpop.f32.mrf.mxu0
    %v288 = vpop.f32.mrf.mxu0
    %289 = vdwg.mxu0
    %291 = vrot.lane.b32.xlu0 %v137, 96
    %v292 = vpop.permute.xlu0 %291
    %v294 = vsel %vm145, %v137, 0
    %v297 = vsel %vm145, %v292, 0
    %299 = vmatprep.subr.bf16.mxu0 0
    %300 = vmatpush1.bf16.xpose.msra.mxu0 0
    %301 = vmatprep.subr.bf16.mxu0 0
    %302 = vmatpush1.bf16.xpose.msra.mxu0 0
    %303 = vmatprep.subr.bf16.mxu0 0
    %304 = vmatpush1.bf16.xpose.msra.mxu0 0
    %305 = vmatprep.subr.bf16.mxu0 0
    %306 = vmatpush1.bf16.xpose.msra.mxu0 0
    %307 = vmatprep.subr.bf16.mxu0 0
    %308 = vmatpush1.bf16.xpose.msra.mxu0 0
    %309 = vmatprep.subr.bf16.mxu0 0
    %310 = vmatpush1.bf16.xpose.msra.mxu0 0
    %311 = vmatprep.subr.bf16.mxu0 0
    %312 = vmatpush1.bf16.xpose.msra.mxu0 0
    %313 = vmatprep.subr.bf16.mxu0 0
    %314 = vmatpush1.bf16.xpose.msra.mxu0 %v297
    %315 = vmatprep.subr.bf16.mxu0 0
    %316 = vmatpush2.bf16.xpose.msra.mxu0 0
    %317 = vmatprep.subr.bf16.mxu0 0
    %318 = vmatpush2.bf16.xpose.msra.mxu0 0
    %319 = vmatprep.subr.bf16.mxu0 0
    %320 = vmatpush2.bf16.xpose.msra.mxu0 0
    %321 = vmatprep.subr.bf16.mxu0 0
    %322 = vmatpush2.bf16.xpose.msra.mxu0 0
    %323 = vmatprep.subr.bf16.mxu0 0
    %324 = vmatpush2.bf16.xpose.msra.mxu0 0
    %325 = vmatprep.subr.bf16.mxu0 0
    %326 = vmatpush2.bf16.xpose.msra.mxu0 0
    %327 = vmatprep.subr.bf16.mxu0 0
    %328 = vmatpush2.bf16.xpose.msra.mxu0 0
    %329 = vmatprep.subr.bf16.mxu0 0
    %330 = vmatpush2.bf16.xpose.msra.mxu0 0
    %331 = vmatprep.mubr.bf16.mxu0 0
    %332 = vmatmul.mubr.bf16.gmra.mxu0 %v294
    %v333 = vpop.f32.mrf.mxu0
    %v334 = vadd.f32 0.0, %v333
    %v335 = vpop.f32.mrf.mxu0
    %v336 = vpop.f32.mrf.mxu0
    %v337 = vpop.f32.mrf.mxu0
    %338 = vdwg.mxu0
    %340 = vrot.lane.b32.xlu0 %v138, 96
    %v341 = vpop.permute.xlu0 %340
    %v343 = vsel %vm145, %v138, 0
    %v346 = vsel %vm145, %v341, 0
    %348 = vmatprep.subr.bf16.mxu0 0
    %349 = vmatpush1.bf16.xpose.msra.mxu0 0
    %350 = vmatprep.subr.bf16.mxu0 0
    %351 = vmatpush1.bf16.xpose.msra.mxu0 0
    %352 = vmatprep.subr.bf16.mxu0 0
    %353 = vmatpush1.bf16.xpose.msra.mxu0 0
    %354 = vmatprep.subr.bf16.mxu0 0
    %355 = vmatpush1.bf16.xpose.msra.mxu0 0
    %356 = vmatprep.subr.bf16.mxu0 0
    %357 = vmatpush1.bf16.xpose.msra.mxu0 0
    %358 = vmatprep.subr.bf16.mxu0 0
    %359 = vmatpush1.bf16.xpose.msra.mxu0 0
    %360 = vmatprep.subr.bf16.mxu0 0
    %361 = vmatpush1.bf16.xpose.msra.mxu0 0
    %362 = vmatprep.subr.bf16.mxu0 0
    %363 = vmatpush1.bf16.xpose.msra.mxu0 %v346
    %364 = vmatprep.subr.bf16.mxu0 0
    %365 = vmatpush2.bf16.xpose.msra.mxu0 0
    %366 = vmatprep.subr.bf16.mxu0 0
    %367 = vmatpush2.bf16.xpose.msra.mxu0 0
    %368 = vmatprep.subr.bf16.mxu0 0
    %369 = vmatpush2.bf16.xpose.msra.mxu0 0
    %370 = vmatprep.subr.bf16.mxu0 0
    %371 = vmatpush2.bf16.xpose.msra.mxu0 0
    %372 = vmatprep.subr.bf16.mxu0 0
    %373 = vmatpush2.bf16.xpose.msra.mxu0 0
    %374 = vmatprep.subr.bf16.mxu0 0
    %375 = vmatpush2.bf16.xpose.msra.mxu0 0
    %376 = vmatprep.subr.bf16.mxu0 0
    %377 = vmatpush2.bf16.xpose.msra.mxu0 0
    %378 = vmatprep.subr.bf16.mxu0 0
    %379 = vmatpush2.bf16.xpose.msra.mxu0 0
    %380 = vmatprep.mubr.bf16.mxu0 0
    %381 = vmatmul.mubr.bf16.gmra.mxu0 %v343
    %v382 = vpop.f32.mrf.mxu0
    %v383 = vadd.f32 0.0, %v382
    %v384 = vpop.f32.mrf.mxu0
    %v385 = vpop.f32.mrf.mxu0
    %v386 = vpop.f32.mrf.mxu0
    %387 = vdwg.mxu0
    %389 = vrot.lane.b32.xlu0 %v139, 96
    %v390 = vpop.permute.xlu0 %389
    %v392 = vsel %vm145, %v139, 0
    %v395 = vsel %vm145, %v390, 0
    %397 = vmatprep.subr.bf16.mxu0 0
    %398 = vmatpush1.bf16.xpose.msra.mxu0 0
    %399 = vmatprep.subr.bf16.mxu0 0
    %400 = vmatpush1.bf16.xpose.msra.mxu0 0
    %401 = vmatprep.subr.bf16.mxu0 0
    %402 = vmatpush1.bf16.xpose.msra.mxu0 0
    %403 = vmatprep.subr.bf16.mxu0 0
    %404 = vmatpush1.bf16.xpose.msra.mxu0 0
    %405 = vmatprep.subr.bf16.mxu0 0
    %406 = vmatpush1.bf16.xpose.msra.mxu0 0
    %407 = vmatprep.subr.bf16.mxu0 0
    %408 = vmatpush1.bf16.xpose.msra.mxu0 0
    %409 = vmatprep.subr.bf16.mxu0 0
    %410 = vmatpush1.bf16.xpose.msra.mxu0 0
    %411 = vmatprep.subr.bf16.mxu0 0
    %412 = vmatpush1.bf16.xpose.msra.mxu0 %v395
    %413 = vmatprep.subr.bf16.mxu0 0
    %414 = vmatpush2.bf16.xpose.msra.mxu0 0
    %415 = vmatprep.subr.bf16.mxu0 0
    %416 = vmatpush2.bf16.xpose.msra.mxu0 0
    %417 = vmatprep.subr.bf16.mxu0 0
    %418 = vmatpush2.bf16.xpose.msra.mxu0 0
    %419 = vmatprep.subr.bf16.mxu0 0
    %420 = vmatpush2.bf16.xpose.msra.mxu0 0
    %421 = vmatprep.subr.bf16.mxu0 0
    %422 = vmatpush2.bf16.xpose.msra.mxu0 0
    %423 = vmatprep.subr.bf16.mxu0 0
    %424 = vmatpush2.bf16.xpose.msra.mxu0 0
    %425 = vmatprep.subr.bf16.mxu0 0
    %426 = vmatpush2.bf16.xpose.msra.mxu0 0
    %427 = vmatprep.subr.bf16.mxu0 0
    %428 = vmatpush2.bf16.xpose.msra.mxu0 0
    %429 = vmatprep.mubr.bf16.mxu0 0
    %430 = vmatmul.mubr.bf16.gmra.mxu0 %v392
    %v431 = vpop.f32.mrf.mxu0
    %v432 = vadd.f32 0.0, %v431
    %v433 = vpop.f32.mrf.mxu0
    %v434 = vpop.f32.mrf.mxu0
    %v435 = vpop.f32.mrf.mxu0
    %436 = vdwg.mxu0
    %438 = vrot.lane.b32.xlu0 %v140, 96
    %v439 = vpop.permute.xlu0 %438
    %v441 = vsel %vm145, %v140, 0
    %v444 = vsel %vm145, %v439, 0
    %446 = vmatprep.subr.bf16.mxu0 0
    %447 = vmatpush1.bf16.xpose.msra.mxu0 0
    %448 = vmatprep.subr.bf16.mxu0 0
    %449 = vmatpush1.bf16.xpose.msra.mxu0 0
    %450 = vmatprep.subr.bf16.mxu0 0
    %451 = vmatpush1.bf16.xpose.msra.mxu0 0
    %452 = vmatprep.subr.bf16.mxu0 0
    %453 = vmatpush1.bf16.xpose.msra.mxu0 0
    %454 = vmatprep.subr.bf16.mxu0 0
    %455 = vmatpush1.bf16.xpose.msra.mxu0 0
    %456 = vmatprep.subr.bf16.mxu0 0
    %457 = vmatpush1.bf16.xpose.msra.mxu0 0
    %458 = vmatprep.subr.bf16.mxu0 0
    %459 = vmatpush1.bf16.xpose.msra.mxu0 0
    %460 = vmatprep.subr.bf16.mxu0 0
    %461 = vmatpush1.bf16.xpose.msra.mxu0 %v444
    %462 = vmatprep.subr.bf16.mxu0 0
    %463 = vmatpush2.bf16.xpose.msra.mxu0 0
    %464 = vmatprep.subr.bf16.mxu0 0
    %465 = vmatpush2.bf16.xpose.msra.mxu0 0
    %466 = vmatprep.subr.bf16.mxu0 0
    %467 = vmatpush2.bf16.xpose.msra.mxu0 0
    %468 = vmatprep.subr.bf16.mxu0 0
    %469 = vmatpush2.bf16.xpose.msra.mxu0 0
    %470 = vmatprep.subr.bf16.mxu0 0
    %471 = vmatpush2.bf16.xpose.msra.mxu0 0
    %472 = vmatprep.subr.bf16.mxu0 0
    %473 = vmatpush2.bf16.xpose.msra.mxu0 0
    %474 = vmatprep.subr.bf16.mxu0 0
    %475 = vmatpush2.bf16.xpose.msra.mxu0 0
    %476 = vmatprep.subr.bf16.mxu0 0
    %477 = vmatpush2.bf16.xpose.msra.mxu0 0
    %478 = vmatprep.mubr.bf16.mxu0 0
    %479 = vmatmul.mubr.bf16.gmra.mxu0 %v441
    %v480 = vpop.f32.mrf.mxu0
    %v481 = vadd.f32 0.0, %v480
    %v482 = vpop.f32.mrf.mxu0
    %v483 = vpop.f32.mrf.mxu0
    %v484 = vpop.f32.mrf.mxu0
    %485 = vdwg.mxu0
    %487 = vrot.lane.b32.xlu0 %v141, 96
    %v488 = vpop.permute.xlu0 %487
    %v490 = vsel %vm145, %v141, 0
    %v493 = vsel %vm145, %v488, 0
    %495 = vmatprep.subr.bf16.mxu0 0
    %496 = vmatpush1.bf16.xpose.msra.mxu0 0
    %497 = vmatprep.subr.bf16.mxu0 0
    %498 = vmatpush1.bf16.xpose.msra.mxu0 0
    %499 = vmatprep.subr.bf16.mxu0 0
    %500 = vmatpush1.bf16.xpose.msra.mxu0 0
    %501 = vmatprep.subr.bf16.mxu0 0
    %502 = vmatpush1.bf16.xpose.msra.mxu0 0
    %503 = vmatprep.subr.bf16.mxu0 0
    %504 = vmatpush1.bf16.xpose.msra.mxu0 0
    %505 = vmatprep.subr.bf16.mxu0 0
    %506 = vmatpush1.bf16.xpose.msra.mxu0 0
    %507 = vmatprep.subr.bf16.mxu0 0
    %508 = vmatpush1.bf16.xpose.msra.mxu0 0
    %509 = vmatprep.subr.bf16.mxu0 0
    %510 = vmatpush1.bf16.xpose.msra.mxu0 %v493
    %511 = vmatprep.subr.bf16.mxu0 0
    %512 = vmatpush2.bf16.xpose.msra.mxu0 0
    %513 = vmatprep.subr.bf16.mxu0 0
    %514 = vmatpush2.bf16.xpose.msra.mxu0 0
    %515 = vmatprep.subr.bf16.mxu0 0
    %516 = vmatpush2.bf16.xpose.msra.mxu0 0
    %517 = vmatprep.subr.bf16.mxu0 0
    %518 = vmatpush2.bf16.xpose.msra.mxu0 0
    %519 = vmatprep.subr.bf16.mxu0 0
    %520 = vmatpush2.bf16.xpose.msra.mxu0 0
    %521 = vmatprep.subr.bf16.mxu0 0
    %522 = vmatpush2.bf16.xpose.msra.mxu0 0
    %523 = vmatprep.subr.bf16.mxu0 0
    %524 = vmatpush2.bf16.xpose.msra.mxu0 0
    %525 = vmatprep.subr.bf16.mxu0 0
    %526 = vmatpush2.bf16.xpose.msra.mxu0 0
    %527 = vmatprep.mubr.bf16.mxu0 0
    %528 = vmatmul.mubr.bf16.gmra.mxu0 %v490
    %v529 = vpop.f32.mrf.mxu0
    %v530 = vadd.f32 0.0, %v529
    %v531 = vpop.f32.mrf.mxu0
    %v532 = vpop.f32.mrf.mxu0
    %v533 = vpop.f32.mrf.mxu0
    %534 = vdwg.mxu0
    %v535 = vmul.f32 %v187, 0.35355338
    %v536 = vmul.f32 %v236, 0.35355338
    %v537 = vmul.f32 %v285, 0.35355338
    %v538 = vmul.f32 %v334, 0.35355338
    %v539 = vmul.f32 %v383, 0.35355338
    %v540 = vmul.f32 %v432, 0.35355338
    %v541 = vmul.f32 %v481, 0.35355338
    %v542 = vmul.f32 %v530, 0.35355338
    %v543 = vsel %vm43, 1, 0
    %vm544 = vcmp.eq.s32.totalorder %v543, 1
    %v545 = vsel %vm544, -1e+30, %v535
    %v546 = vsel %vm544, -1e+30, %v536
    %v547 = vsel %vm544, -1e+30, %v537
    %v548 = vsel %vm544, -1e+30, %v538
    %v549 = vsel %vm544, -1e+30, %v539
    %v550 = vsel %vm544, -1e+30, %v540
    %v551 = vsel %vm544, -1e+30, %v541
    %v552 = vsel %vm544, -1e+30, %v542
    %v553 = vsel %vm145, %v545, -inf
    %554 = vmax.xlane.f32.xlu0 %v553
    %v555 = vpop.xlane.xlu0 %554
    %v556 = vsel %vm145, %v546, -inf
    %557 = vmax.xlane.f32.xlu0 %v556
    %v558 = vpop.xlane.xlu0 %557
    %v559 = vsel %vm145, %v547, -inf
    %560 = vmax.xlane.f32.xlu0 %v559
    %v561 = vpop.xlane.xlu0 %560
    %v562 = vsel %vm145, %v548, -inf
    %563 = vmax.xlane.f32.xlu0 %v562
    %v564 = vpop.xlane.xlu0 %563
    %v565 = vsel %vm145, %v549, -inf
    %566 = vmax.xlane.f32.xlu0 %v565
    %v567 = vpop.xlane.xlu0 %566
    %v568 = vsel %vm145, %v550, -inf
    %569 = vmax.xlane.f32.xlu0 %v568
    %v570 = vpop.xlane.xlu0 %569
    %v571 = vsel %vm145, %v551, -inf
    %572 = vmax.xlane.f32.xlu0 %v571
    %v573 = vpop.xlane.xlu0 %572
    %v574 = vsel %vm145, %v552, -inf
    %575 = vmax.xlane.f32.xlu0 %v574
    %v576 = vpop.xlane.xlu0 %575
    %v577 = vsub.f32 %v545, %v555
    %v578 = vsub.f32 %v546, %v558
    %v579 = vsub.f32 %v547, %v561
    %v580 = vsub.f32 %v548, %v564
    %v581 = vsub.f32 %v549, %v567
    %v582 = vsub.f32 %v550, %v570
    %v583 = vsub.f32 %v551, %v573
    %v584 = vsub.f32 %v552, %v576
    %v585 = vmul.f32 %v577, 1.442695
    %v586 = vpow.pop %v585
    %v587 = vmul.f32 %v578, 1.442695
    %v588 = vpow.pop %v587
    %v589 = vmul.f32 %v579, 1.442695
    %v590 = vpow.pop %v589
    %v591 = vmul.f32 %v580, 1.442695
    %v592 = vpow.pop %v591
    %v593 = vmul.f32 %v581, 1.442695
    %v594 = vpow.pop %v593
    %v595 = vmul.f32 %v582, 1.442695
    %v596 = vpow.pop %v595
    %v597 = vmul.f32 %v583, 1.442695
    %v598 = vpow.pop %v597
    %v599 = vmul.f32 %v584, 1.442695
    %v600 = vpow.pop %v599
    %v601 = vsel %vm145, %v586, 0.0
    %602 = vadd.xlane.f32.xlu0 %v601
    %v603 = vpop.xlane.xlu0 %602
    %v604 = vsel %vm145, %v588, 0.0
    %605 = vadd.xlane.f32.xlu0 %v604
    %v606 = vpop.xlane.xlu0 %605
    %v607 = vsel %vm145, %v590, 0.0
    %608 = vadd.xlane.f32.xlu0 %v607
    %v609 = vpop.xlane.xlu0 %608
    %v610 = vsel %vm145, %v592, 0.0
    %611 = vadd.xlane.f32.xlu0 %v610
    %v612 = vpop.xlane.xlu0 %611
    %v613 = vsel %vm145, %v594, 0.0
    %614 = vadd.xlane.f32.xlu0 %v613
    %v615 = vpop.xlane.xlu0 %614
    %v616 = vsel %vm145, %v596, 0.0
    %617 = vadd.xlane.f32.xlu0 %v616
    %v618 = vpop.xlane.xlu0 %617
    %v619 = vsel %vm145, %v598, 0.0
    %620 = vadd.xlane.f32.xlu0 %v619
    %v621 = vpop.xlane.xlu0 %620
    %v622 = vsel %vm145, %v600, 0.0
    %623 = vadd.xlane.f32.xlu0 %v622
    %v624 = vpop.xlane.xlu0 %623
    %v625 = vrcp.pop %v603
    %v626 = vmul.f32 %v586, %v625
    %v627 = vrcp.pop %v606
    %v628 = vmul.f32 %v588, %v627
    %v629 = vrcp.pop %v609
    %v630 = vmul.f32 %v590, %v629
    %v631 = vrcp.pop %v612
    %v632 = vmul.f32 %v592, %v631
    %v633 = vrcp.pop %v615
    %v634 = vmul.f32 %v594, %v633
    %v635 = vrcp.pop %v618
    %v636 = vmul.f32 %v596, %v635
    %v637 = vrcp.pop %v621
    %v638 = vmul.f32 %v598, %v637
    %v639 = vrcp.pop %v624
    %v640 = vmul.f32 %v600, %v639
    %v641 = vpack.c.bf16 %v626, %v626
    %v642 = vpack.c.bf16 %v628, %v628
    %v643 = vpack.c.bf16 %v630, %v630
    %v644 = vpack.c.bf16 %v632, %v632
    %v645 = vpack.c.bf16 %v634, %v634
    %v646 = vpack.c.bf16 %v636, %v636
    %v647 = vpack.c.bf16 %v638, %v638
    %v648 = vpack.c.bf16 %v640, %v640
    %649 = vrot.lane.b32.xlu0 %v134, 64
    %v650 = vpop.permute.xlu0 %649
    %v652 = vsel %vm145, %v641, 0
    %vm654 = vcmask 1043456
    %v656 = vsel %vm654, %v650, 0
    %658 = vmatprep.subr.bf16.mxu0 0
    %659 = vmatpush1.bf16.msra.mxu0 0
    %660 = vmatprep.subr.bf16.mxu0 0
    %661 = vmatpush1.bf16.msra.mxu0 0
    %662 = vmatprep.subr.bf16.mxu0 0
    %663 = vmatpush1.bf16.msra.mxu0 0
    %664 = vmatprep.subr.bf16.mxu0 0
    %665 = vmatpush1.bf16.msra.mxu0 0
    %666 = vmatprep.subr.bf16.mxu0 0
    %667 = vmatpush1.bf16.msra.mxu0 0
    %668 = vmatprep.subr.bf16.mxu0 0
    %669 = vmatpush1.bf16.msra.mxu0 0
    %670 = vmatprep.subr.bf16.mxu0 0
    %671 = vmatpush1.bf16.msra.mxu0 0
    %672 = vmatprep.subr.bf16.mxu0 0
    %673 = vmatpush1.bf16.msra.mxu0 %v656
    %674 = vmatprep.subr.bf16.mxu0 0
    %675 = vmatpush2.bf16.msra.mxu0 0
    %676 = vmatprep.subr.bf16.mxu0 0
    %677 = vmatpush2.bf16.msra.mxu0 0
    %678 = vmatprep.subr.bf16.mxu0 0
    %679 = vmatpush2.bf16.msra.mxu0 0
    %680 = vmatprep.subr.bf16.mxu0 0
    %681 = vmatpush2.bf16.msra.mxu0 0
    %682 = vmatprep.subr.bf16.mxu0 0
    %683 = vmatpush2.bf16.msra.mxu0 0
    %684 = vmatprep.subr.bf16.mxu0 0
    %685 = vmatpush2.bf16.msra.mxu0 0
    %686 = vmatprep.subr.bf16.mxu0 0
    %687 = vmatpush2.bf16.msra.mxu0 0
    %688 = vmatprep.subr.bf16.mxu0 0
    %689 = vmatpush2.bf16.msra.mxu0 0
    %690 = vmatprep.mubr.bf16.mxu0 0
    %691 = vmatmul.mubr.bf16.gmra.mxu0 %v652
    %v692 = vpop.f32.mrf.mxu0
    %v693 = vadd.f32 0.0, %v692
    %v694 = vpop.f32.mrf.mxu0
    %v695 = vpop.f32.mrf.mxu0
    %v696 = vpop.f32.mrf.mxu0
    %697 = vdwg.mxu0
    %698 = vrot.lane.b32.xlu0 %v135, 64
    %v699 = vpop.permute.xlu0 %698
    %v701 = vsel %vm145, %v642, 0
    %v704 = vsel %vm654, %v699, 0
    %706 = vmatprep.subr.bf16.mxu0 0
    %707 = vmatpush1.bf16.msra.mxu0 0
    %708 = vmatprep.subr.bf16.mxu0 0
    %709 = vmatpush1.bf16.msra.mxu0 0
    %710 = vmatprep.subr.bf16.mxu0 0
    %711 = vmatpush1.bf16.msra.mxu0 0
    %712 = vmatprep.subr.bf16.mxu0 0
    %713 = vmatpush1.bf16.msra.mxu0 0
    %714 = vmatprep.subr.bf16.mxu0 0
    %715 = vmatpush1.bf16.msra.mxu0 0
    %716 = vmatprep.subr.bf16.mxu0 0
    %717 = vmatpush1.bf16.msra.mxu0 0
    %718 = vmatprep.subr.bf16.mxu0 0
    %719 = vmatpush1.bf16.msra.mxu0 0
    %720 = vmatprep.subr.bf16.mxu0 0
    %721 = vmatpush1.bf16.msra.mxu0 %v704
    %722 = vmatprep.subr.bf16.mxu0 0
    %723 = vmatpush2.bf16.msra.mxu0 0
    %724 = vmatprep.subr.bf16.mxu0 0
    %725 = vmatpush2.bf16.msra.mxu0 0
    %726 = vmatprep.subr.bf16.mxu0 0
    %727 = vmatpush2.bf16.msra.mxu0 0
    %728 = vmatprep.subr.bf16.mxu0 0
    %729 = vmatpush2.bf16.msra.mxu0 0
    %730 = vmatprep.subr.bf16.mxu0 0
    %731 = vmatpush2.bf16.msra.mxu0 0
    %732 = vmatprep.subr.bf16.mxu0 0
    %733 = vmatpush2.bf16.msra.mxu0 0
    %734 = vmatprep.subr.bf16.mxu0 0
    %735 = vmatpush2.bf16.msra.mxu0 0
    %736 = vmatprep.subr.bf16.mxu0 0
    %737 = vmatpush2.bf16.msra.mxu0 0
    %738 = vmatprep.mubr.bf16.mxu0 0
    %739 = vmatmul.mubr.bf16.gmra.mxu0 %v701
    %v740 = vpop.f32.mrf.mxu0
    %v741 = vadd.f32 0.0, %v740
    %v742 = vpop.f32.mrf.mxu0
    %v743 = vpop.f32.mrf.mxu0
    %v744 = vpop.f32.mrf.mxu0
    %745 = vdwg.mxu0
    %746 = vrot.lane.b32.xlu0 %v136, 64
    %v747 = vpop.permute.xlu0 %746
    %v749 = vsel %vm145, %v643, 0
    %v752 = vsel %vm654, %v747, 0
    %754 = vmatprep.subr.bf16.mxu0 0
    %755 = vmatpush1.bf16.msra.mxu0 0
    %756 = vmatprep.subr.bf16.mxu0 0
    %757 = vmatpush1.bf16.msra.mxu0 0
    %758 = vmatprep.subr.bf16.mxu0 0
    %759 = vmatpush1.bf16.msra.mxu0 0
    %760 = vmatprep.subr.bf16.mxu0 0
    %761 = vmatpush1.bf16.msra.mxu0 0
    %762 = vmatprep.subr.bf16.mxu0 0
    %763 = vmatpush1.bf16.msra.mxu0 0
    %764 = vmatprep.subr.bf16.mxu0 0
    %765 = vmatpush1.bf16.msra.mxu0 0
    %766 = vmatprep.subr.bf16.mxu0 0
    %767 = vmatpush1.bf16.msra.mxu0 0
    %768 = vmatprep.subr.bf16.mxu0 0
    %769 = vmatpush1.bf16.msra.mxu0 %v752
    %770 = vmatprep.subr.bf16.mxu0 0
    %771 = vmatpush2.bf16.msra.mxu0 0
    %772 = vmatprep.subr.bf16.mxu0 0
    %773 = vmatpush2.bf16.msra.mxu0 0
    %774 = vmatprep.subr.bf16.mxu0 0
    %775 = vmatpush2.bf16.msra.mxu0 0
    %776 = vmatprep.subr.bf16.mxu0 0
    %777 = vmatpush2.bf16.msra.mxu0 0
    %778 = vmatprep.subr.bf16.mxu0 0
    %779 = vmatpush2.bf16.msra.mxu0 0
    %780 = vmatprep.subr.bf16.mxu0 0
    %781 = vmatpush2.bf16.msra.mxu0 0
    %782 = vmatprep.subr.bf16.mxu0 0
    %783 = vmatpush2.bf16.msra.mxu0 0
    %784 = vmatprep.subr.bf16.mxu0 0
    %785 = vmatpush2.bf16.msra.mxu0 0
    %786 = vmatprep.mubr.bf16.mxu0 0
    %787 = vmatmul.mubr.bf16.gmra.mxu0 %v749
    %v788 = vpop.f32.mrf.mxu0
    %v789 = vadd.f32 0.0, %v788
    %v790 = vpop.f32.mrf.mxu0
    %v791 = vpop.f32.mrf.mxu0
    %v792 = vpop.f32.mrf.mxu0
    %793 = vdwg.mxu0
    %794 = vrot.lane.b32.xlu0 %v137, 64
    %v795 = vpop.permute.xlu0 %794
    %v797 = vsel %vm145, %v644, 0
    %v800 = vsel %vm654, %v795, 0
    %802 = vmatprep.subr.bf16.mxu0 0
    %803 = vmatpush1.bf16.msra.mxu0 0
    %804 = vmatprep.subr.bf16.mxu0 0
    %805 = vmatpush1.bf16.msra.mxu0 0
    %806 = vmatprep.subr.bf16.mxu0 0
    %807 = vmatpush1.bf16.msra.mxu0 0
    %808 = vmatprep.subr.bf16.mxu0 0
    %809 = vmatpush1.bf16.msra.mxu0 0
    %810 = vmatprep.subr.bf16.mxu0 0
    %811 = vmatpush1.bf16.msra.mxu0 0
    %812 = vmatprep.subr.bf16.mxu0 0
    %813 = vmatpush1.bf16.msra.mxu0 0
    %814 = vmatprep.subr.bf16.mxu0 0
    %815 = vmatpush1.bf16.msra.mxu0 0
    %816 = vmatprep.subr.bf16.mxu0 0
    %817 = vmatpush1.bf16.msra.mxu0 %v800
    %818 = vmatprep.subr.bf16.mxu0 0
    %819 = vmatpush2.bf16.msra.mxu0 0
    %820 = vmatprep.subr.bf16.mxu0 0
    %821 = vmatpush2.bf16.msra.mxu0 0
    %822 = vmatprep.subr.bf16.mxu0 0
    %823 = vmatpush2.bf16.msra.mxu0 0
    %824 = vmatprep.subr.bf16.mxu0 0
    %825 = vmatpush2.bf16.msra.mxu0 0
    %826 = vmatprep.subr.bf16.mxu0 0
    %827 = vmatpush2.bf16.msra.mxu0 0
    %828 = vmatprep.subr.bf16.mxu0 0
    %829 = vmatpush2.bf16.msra.mxu0 0
    %830 = vmatprep.subr.bf16.mxu0 0
    %831 = vmatpush2.bf16.msra.mxu0 0
    %832 = vmatprep.subr.bf16.mxu0 0
    %833 = vmatpush2.bf16.msra.mxu0 0
    %834 = vmatprep.mubr.bf16.mxu0 0
    %835 = vmatmul.mubr.bf16.gmra.mxu0 %v797
    %v836 = vpop.f32.mrf.mxu0
    %v837 = vadd.f32 0.0, %v836
    %v838 = vpop.f32.mrf.mxu0
    %v839 = vpop.f32.mrf.mxu0
    %v840 = vpop.f32.mrf.mxu0
    %841 = vdwg.mxu0
    %842 = vrot.lane.b32.xlu0 %v138, 64
    %v843 = vpop.permute.xlu0 %842
    %v845 = vsel %vm145, %v645, 0
    %v848 = vsel %vm654, %v843, 0
    %850 = vmatprep.subr.bf16.mxu0 0
    %851 = vmatpush1.bf16.msra.mxu0 0
    %852 = vmatprep.subr.bf16.mxu0 0
    %853 = vmatpush1.bf16.msra.mxu0 0
    %854 = vmatprep.subr.bf16.mxu0 0
    %855 = vmatpush1.bf16.msra.mxu0 0
    %856 = vmatprep.subr.bf16.mxu0 0
    %857 = vmatpush1.bf16.msra.mxu0 0
    %858 = vmatprep.subr.bf16.mxu0 0
    %859 = vmatpush1.bf16.msra.mxu0 0
    %860 = vmatprep.subr.bf16.mxu0 0
    %861 = vmatpush1.bf16.msra.mxu0 0
    %862 = vmatprep.subr.bf16.mxu0 0
    %863 = vmatpush1.bf16.msra.mxu0 0
    %864 = vmatprep.subr.bf16.mxu0 0
    %865 = vmatpush1.bf16.msra.mxu0 %v848
    %866 = vmatprep.subr.bf16.mxu0 0
    %867 = vmatpush2.bf16.msra.mxu0 0
    %868 = vmatprep.subr.bf16.mxu0 0
    %869 = vmatpush2.bf16.msra.mxu0 0
    %870 = vmatprep.subr.bf16.mxu0 0
    %871 = vmatpush2.bf16.msra.mxu0 0
    %872 = vmatprep.subr.bf16.mxu0 0
    %873 = vmatpush2.bf16.msra.mxu0 0
    %874 = vmatprep.subr.bf16.mxu0 0
    %875 = vmatpush2.bf16.msra.mxu0 0
    %876 = vmatprep.subr.bf16.mxu0 0
    %877 = vmatpush2.bf16.msra.mxu0 0
    %878 = vmatprep.subr.bf16.mxu0 0
    %879 = vmatpush2.bf16.msra.mxu0 0
    %880 = vmatprep.subr.bf16.mxu0 0
    %881 = vmatpush2.bf16.msra.mxu0 0
    %882 = vmatprep.mubr.bf16.mxu0 0
    %883 = vmatmul.mubr.bf16.gmra.mxu0 %v845
    %v884 = vpop.f32.mrf.mxu0
    %v885 = vadd.f32 0.0, %v884
    %v886 = vpop.f32.mrf.mxu0
    %v887 = vpop.f32.mrf.mxu0
    %v888 = vpop.f32.mrf.mxu0
    %889 = vdwg.mxu0
    %890 = vrot.lane.b32.xlu0 %v139, 64
    %v891 = vpop.permute.xlu0 %890
    %v893 = vsel %vm145, %v646, 0
    %v896 = vsel %vm654, %v891, 0
    %898 = vmatprep.subr.bf16.mxu0 0
    %899 = vmatpush1.bf16.msra.mxu0 0
    %900 = vmatprep.subr.bf16.mxu0 0
    %901 = vmatpush1.bf16.msra.mxu0 0
    %902 = vmatprep.subr.bf16.mxu0 0
    %903 = vmatpush1.bf16.msra.mxu0 0
    %904 = vmatprep.subr.bf16.mxu0 0
    %905 = vmatpush1.bf16.msra.mxu0 0
    %906 = vmatprep.subr.bf16.mxu0 0
    %907 = vmatpush1.bf16.msra.mxu0 0
    %908 = vmatprep.subr.bf16.mxu0 0
    %909 = vmatpush1.bf16.msra.mxu0 0
    %910 = vmatprep.subr.bf16.mxu0 0
    %911 = vmatpush1.bf16.msra.mxu0 0
    %912 = vmatprep.subr.bf16.mxu0 0
    %913 = vmatpush1.bf16.msra.mxu0 %v896
    %914 = vmatprep.subr.bf16.mxu0 0
    %915 = vmatpush2.bf16.msra.mxu0 0
    %916 = vmatprep.subr.bf16.mxu0 0
    %917 = vmatpush2.bf16.msra.mxu0 0
    %918 = vmatprep.subr.bf16.mxu0 0
    %919 = vmatpush2.bf16.msra.mxu0 0
    %920 = vmatprep.subr.bf16.mxu0 0
    %921 = vmatpush2.bf16.msra.mxu0 0
    %922 = vmatprep.subr.bf16.mxu0 0
    %923 = vmatpush2.bf16.msra.mxu0 0
    %924 = vmatprep.subr.bf16.mxu0 0
    %925 = vmatpush2.bf16.msra.mxu0 0
    %926 = vmatprep.subr.bf16.mxu0 0
    %927 = vmatpush2.bf16.msra.mxu0 0
    %928 = vmatprep.subr.bf16.mxu0 0
    %929 = vmatpush2.bf16.msra.mxu0 0
    %930 = vmatprep.mubr.bf16.mxu0 0
    %931 = vmatmul.mubr.bf16.gmra.mxu0 %v893
    %v932 = vpop.f32.mrf.mxu0
    %v933 = vadd.f32 0.0, %v932
    %v934 = vpop.f32.mrf.mxu0
    %v935 = vpop.f32.mrf.mxu0
    %v936 = vpop.f32.mrf.mxu0
    %937 = vdwg.mxu0
    %938 = vrot.lane.b32.xlu0 %v140, 64
    %v939 = vpop.permute.xlu0 %938
    %v941 = vsel %vm145, %v647, 0
    %v944 = vsel %vm654, %v939, 0
    %946 = vmatprep.subr.bf16.mxu0 0
    %947 = vmatpush1.bf16.msra.mxu0 0
    %948 = vmatprep.subr.bf16.mxu0 0
    %949 = vmatpush1.bf16.msra.mxu0 0
    %950 = vmatprep.subr.bf16.mxu0 0
    %951 = vmatpush1.bf16.msra.mxu0 0
    %952 = vmatprep.subr.bf16.mxu0 0
    %953 = vmatpush1.bf16.msra.mxu0 0
    %954 = vmatprep.subr.bf16.mxu0 0
    %955 = vmatpush1.bf16.msra.mxu0 0
    %956 = vmatprep.subr.bf16.mxu0 0
    %957 = vmatpush1.bf16.msra.mxu0 0
    %958 = vmatprep.subr.bf16.mxu0 0
    %959 = vmatpush1.bf16.msra.mxu0 0
    %960 = vmatprep.subr.bf16.mxu0 0
    %961 = vmatpush1.bf16.msra.mxu0 %v944
    %962 = vmatprep.subr.bf16.mxu0 0
    %963 = vmatpush2.bf16.msra.mxu0 0
    %964 = vmatprep.subr.bf16.mxu0 0
    %965 = vmatpush2.bf16.msra.mxu0 0
    %966 = vmatprep.subr.bf16.mxu0 0
    %967 = vmatpush2.bf16.msra.mxu0 0
    %968 = vmatprep.subr.bf16.mxu0 0
    %969 = vmatpush2.bf16.msra.mxu0 0
    %970 = vmatprep.subr.bf16.mxu0 0
    %971 = vmatpush2.bf16.msra.mxu0 0
    %972 = vmatprep.subr.bf16.mxu0 0
    %973 = vmatpush2.bf16.msra.mxu0 0
    %974 = vmatprep.subr.bf16.mxu0 0
    %975 = vmatpush2.bf16.msra.mxu0 0
    %976 = vmatprep.subr.bf16.mxu0 0
    %977 = vmatpush2.bf16.msra.mxu0 0
    %978 = vmatprep.mubr.bf16.mxu0 0
    %979 = vmatmul.mubr.bf16.gmra.mxu0 %v941
    %v980 = vpop.f32.mrf.mxu0
    %v981 = vadd.f32 0.0, %v980
    %v982 = vpop.f32.mrf.mxu0
    %v983 = vpop.f32.mrf.mxu0
    %v984 = vpop.f32.mrf.mxu0
    %985 = vdwg.mxu0
    %986 = vrot.lane.b32.xlu0 %v141, 64
    %v987 = vpop.permute.xlu0 %986
    %v989 = vsel %vm145, %v648, 0
    %v992 = vsel %vm654, %v987, 0
    %994 = vmatprep.subr.bf16.mxu0 0
    %995 = vmatpush1.bf16.msra.mxu0 0
    %996 = vmatprep.subr.bf16.mxu0 0
    %997 = vmatpush1.bf16.msra.mxu0 0
    %998 = vmatprep.subr.bf16.mxu0 0
    %999 = vmatpush1.bf16.msra.mxu0 0
    %1000 = vmatprep.subr.bf16.mxu0 0
    %1001 = vmatpush1.bf16.msra.mxu0 0
    %1002 = vmatprep.subr.bf16.mxu0 0
    %1003 = vmatpush1.bf16.msra.mxu0 0
    %1004 = vmatprep.subr.bf16.mxu0 0
    %1005 = vmatpush1.bf16.msra.mxu0 0
    %1006 = vmatprep.subr.bf16.mxu0 0
    %1007 = vmatpush1.bf16.msra.mxu0 0
    %1008 = vmatprep.subr.bf16.mxu0 0
    %1009 = vmatpush1.bf16.msra.mxu0 %v992
    %1010 = vmatprep.subr.bf16.mxu0 0
    %1011 = vmatpush2.bf16.msra.mxu0 0
    %1012 = vmatprep.subr.bf16.mxu0 0
    %1013 = vmatpush2.bf16.msra.mxu0 0
    %1014 = vmatprep.subr.bf16.mxu0 0
    %1015 = vmatpush2.bf16.msra.mxu0 0
    %1016 = vmatprep.subr.bf16.mxu0 0
    %1017 = vmatpush2.bf16.msra.mxu0 0
    %1018 = vmatprep.subr.bf16.mxu0 0
    %1019 = vmatpush2.bf16.msra.mxu0 0
    %1020 = vmatprep.subr.bf16.mxu0 0
    %1021 = vmatpush2.bf16.msra.mxu0 0
    %1022 = vmatprep.subr.bf16.mxu0 0
    %1023 = vmatpush2.bf16.msra.mxu0 0
    %1024 = vmatprep.subr.bf16.mxu0 0
    %1025 = vmatpush2.bf16.msra.mxu0 0
    %1026 = vmatprep.mubr.bf16.mxu0 0
    %1027 = vmatmul.mubr.bf16.gmra.mxu0 %v989
    %v1028 = vpop.f32.mrf.mxu0
    %v1029 = vadd.f32 0.0, %v1028
    %v1030 = vpop.f32.mrf.mxu0
    %v1031 = vpop.f32.mrf.mxu0
    %v1032 = vpop.f32.mrf.mxu0
    %1033 = vdwg.mxu0
    %1036 = vrot.lane.b32.xlu0 %v789, 8
    %v1037 = vpop.permute.xlu0 %1036
    %1038 = vrot.lane.b32.xlu0 %v837, 8
    %v1039 = vpop.permute.xlu0 %1038
    %1044 = vrot.lane.b32.xlu0 %v885, 16
    %v1045 = vpop.permute.xlu0 %1044
    %1046 = vrot.lane.b32.xlu0 %v933, 16
    %v1047 = vpop.permute.xlu0 %1046
    %1052 = vrot.lane.b32.xlu0 %v981, 24
    %v1053 = vpop.permute.xlu0 %1052
    %1054 = vrot.lane.b32.xlu0 %v1029, 24
    %v1055 = vpop.permute.xlu0 %1054
    %v1058 = vsel %vm145, %v693, %v1037
    %v1059 = vsel %vm145, %v741, %v1039
    %vm1060 = vcmask 130048
    %v1061 = vsel %vm1060, %v1058, %v1045
    %v1062 = vsel %vm1060, %v1059, %v1047
    %vm1063 = vcmask 195584
    %v1064 = vsel %vm1063, %v1061, %v1053
    %v1065 = vsel %vm1063, %v1062, %v1055
    %v1066 = vpack.c.bf16 %v1065, %v1064
    %v1067 = vld [vmem:[%s4] sm:$0xf]
    %v1068 = vld [vmem:[%s4 + $0x4] sm:$0xf]
    %v1069 = vld [vmem:[%s4 + $0x8] sm:$0xf]
    %v1070 = vld [vmem:[%s4 + $0xc] sm:$0xf]
    %v1071 = vlaneseq
    %v1072 = vshrl.u32 %v1071, 7
    %v1073 = vsub.s32 0, %v1072
    %v1074 = vrot.slane %v44, %v1073
    %v1079 = vunpack.c.l.b16 %v1067
    %v1080 = vunpack.c.l.b16 %v1068
    %v1081 = vunpack.c.l.b16 %v1069
    %v1082 = vunpack.c.l.b16 %v1070
    %v1083 = vpack.c.b16 %v1080, %v1079
    %v1084 = vpack.c.b16 %v1082, %v1081
    %v1088 = vsel %vm69, %v1066, 0
    %1090 = vmatprep.subr.bf16.mxu0 0
    %1091 = vmatpush1.bf16.msra.mxu0 0
    %1092 = vmatprep.subr.bf16.mxu0 0
    %1093 = vmatpush1.bf16.msra.mxu0 0
    %1094 = vmatprep.subr.bf16.mxu0 0
    %1095 = vmatpush1.bf16.msra.mxu0 0
    %1096 = vmatprep.subr.bf16.mxu0 0
    %1097 = vmatpush1.bf16.msra.mxu0 0
    %1098 = vmatprep.subr.bf16.mxu0 0
    %1099 = vmatpush1.bf16.msra.mxu0 0
    %1100 = vmatprep.subr.bf16.mxu0 0
    %1101 = vmatpush1.bf16.msra.mxu0 0
    %1102 = vmatprep.subr.bf16.mxu0 0
    %1103 = vmatpush1.bf16.msra.mxu0 %v1084
    %1104 = vmatprep.subr.bf16.mxu0 0
    %1105 = vmatpush1.bf16.msra.mxu0 %v1083
    %1106 = vmatprep.subr.bf16.mxu0 0
    %1107 = vmatpush2.bf16.msra.mxu0 0
    %1108 = vmatprep.subr.bf16.mxu0 0
    %1109 = vmatpush2.bf16.msra.mxu0 0
    %1110 = vmatprep.subr.bf16.mxu0 0
    %1111 = vmatpush2.bf16.msra.mxu0 0
    %1112 = vmatprep.subr.bf16.mxu0 0
    %1113 = vmatpush2.bf16.msra.mxu0 0
    %1114 = vmatprep.subr.bf16.mxu0 0
    %1115 = vmatpush2.bf16.msra.mxu0 0
    %1116 = vmatprep.subr.bf16.mxu0 0
    %1117 = vmatpush2.bf16.msra.mxu0 0
    %1118 = vmatprep.subr.bf16.mxu0 0
    %1119 = vmatpush2.bf16.msra.mxu0 0
    %1120 = vmatprep.subr.bf16.mxu0 0
    %1121 = vmatpush2.bf16.msra.mxu0 0
    %1122 = vmatprep.mubr.bf16.mxu0 0
    %1123 = vmatmul.mubr.bf16.gmra.mxu0 %v1088
    %v1124 = vpop.f32.mrf.mxu0
    %v1125 = vadd.f32 %v1074, %v1124
    %v1126 = vpop.f32.mrf.mxu0
    %v1127 = vpop.f32.mrf.mxu0
    %v1128 = vadd.f32 %v1074, %v1127
    %v1129 = vpop.f32.mrf.mxu0
    %1130 = vdwg.mxu0
    %v1131 = vadd.f32 %v37, %v1125
    %v1132 = vadd.f32 %v38, %v1128
    %v1133 = vsel %vm69, %v1131, 0.0
    %1134 = vadd.xlane.f32.xlu0 %v1133
    %v1135 = vpop.xlane.xlu0 %1134
    %v1136 = vsel %vm69, %v1132, 0.0
    %1137 = vadd.xlane.f32.xlu0 %v1136
    %v1138 = vpop.xlane.xlu0 %1137
    %v1139 = vrcp.pop 32.0
    %v1140 = vmul.f32 %v1135, %v1139
    %v1141 = vmul.f32 %v1138, %v1139
    %v1142 = vsub.f32 %v1131, %v1140
    %v1143 = vsub.f32 %v1132, %v1141
    %v1144 = vmul.f32 %v1142, %v1142
    %v1145 = vmul.f32 %v1143, %v1143
    %v1146 = vsel %vm69, %v1144, 0.0
    %1147 = vadd.xlane.f32.xlu0 %v1146
    %v1148 = vpop.xlane.xlu0 %1147
    %v1149 = vsel %vm69, %v1145, 0.0
    %1150 = vadd.xlane.f32.xlu0 %v1149
    %v1151 = vpop.xlane.xlu0 %1150
    %v1152 = vmul.f32 %v1148, %v1139
    %v1153 = vmul.f32 %v1151, %v1139
    %v1154 = vadd.f32 %v1152, 1e-05
    %v1155 = vadd.f32 %v1153, 1e-05
    %v1156 = vrsqrt.pop %v1154
    %v1157 = vrsqrt.pop %v1155
    %v1158 = vmul.f32 %v1142, %v1156
    %v1159 = vmul.f32 %v1143, %v1157
    %v1160 = vlaneseq
    %v1161 = vshrl.u32 %v1160, 7
    %v1162 = vsub.s32 1, %v1161
    %v1163 = vrot.slane %v44, %v1162
    %v1164 = vmul.f32 %v1158, %v1163
    %v1165 = vmul.f32 %v1159, %v1163
    %v1166 = vlaneseq
    %v1167 = vshrl.u32 %v1166, 7
    %v1168 = vsub.s32 2, %v1167
    %v1169 = vrot.slane %v44, %v1168
    %v1170 = vadd.f32 %v1164, %v1169
    %v1171 = vadd.f32 %v1165, %v1169
    %v1172 = vpack.c.bf16 %v1171, %v1170
    %v1173 = vld [vmem:[%s6] sm:$0xf]
    %v1174 = vld [vmem:[%s6 + $0x4] sm:$0xf]
    %v1175 = vld [vmem:[%s6 + $0x8] sm:$0xf]
    %v1176 = vld [vmem:[%s6 + $0xc] sm:$0xf]
    %v1177 = vld [vmem:[%s7] sm:$0x1]
    %v1179 = vlaneseq
    %v1180 = vshrl.u32 %v1179, 7
    %v1181 = vsub.s32 0, %v1180
    %v1182 = vrot.slane %v1177, %v1181
    %v1188 = vunpack.c.l.b16 %v1173
    %v1189 = vunpack.c.l.b16 %v1174
    %v1190 = vunpack.c.l.b16 %v1175
    %v1191 = vunpack.c.l.b16 %v1176
    %v1192 = vpack.c.b16 %v1189, %v1188
    %v1193 = vpack.c.b16 %v1191, %v1190
    %v1197 = vsel %vm69, %v1172, 0
    %1199 = vmatprep.subr.bf16.mxu0 0
    %1200 = vmatpush1.bf16.msra.mxu0 0
    %1201 = vmatprep.subr.bf16.mxu0 0
    %1202 = vmatpush1.bf16.msra.mxu0 0
    %1203 = vmatprep.subr.bf16.mxu0 0
    %1204 = vmatpush1.bf16.msra.mxu0 0
    %1205 = vmatprep.subr.bf16.mxu0 0
    %1206 = vmatpush1.bf16.msra.mxu0 0
    %1207 = vmatprep.subr.bf16.mxu0 0
    %1208 = vmatpush1.bf16.msra.mxu0 0
    %1209 = vmatprep.subr.bf16.mxu0 0
    %1210 = vmatpush1.bf16.msra.mxu0 0
    %1211 = vmatprep.subr.bf16.mxu0 0
    %1212 = vmatpush1.bf16.msra.mxu0 %v1193
    %1213 = vmatprep.subr.bf16.mxu0 0
    %1214 = vmatpush1.bf16.msra.mxu0 %v1192
    %1215 = vmatprep.subr.bf16.mxu0 0
    %1216 = vmatpush2.bf16.msra.mxu0 0
    %1217 = vmatprep.subr.bf16.mxu0 0
    %1218 = vmatpush2.bf16.msra.mxu0 0
    %1219 = vmatprep.subr.bf16.mxu0 0
    %1220 = vmatpush2.bf16.msra.mxu0 0
    %1221 = vmatprep.subr.bf16.mxu0 0
    %1222 = vmatpush2.bf16.msra.mxu0 0
    %1223 = vmatprep.subr.bf16.mxu0 0
    %1224 = vmatpush2.bf16.msra.mxu0 0
    %1225 = vmatprep.subr.bf16.mxu0 0
    %1226 = vmatpush2.bf16.msra.mxu0 0
    %1227 = vmatprep.subr.bf16.mxu0 0
    %1228 = vmatpush2.bf16.msra.mxu0 0
    %1229 = vmatprep.subr.bf16.mxu0 0
    %1230 = vmatpush2.bf16.msra.mxu0 0
    %1231 = vmatprep.mubr.bf16.mxu0 0
    %1232 = vmatmul.mubr.bf16.gmra.mxu0 %v1197
    %v1233 = vpop.f32.mrf.mxu0
    %v1234 = vadd.f32 %v1182, %v1233
    %v1235 = vpop.f32.mrf.mxu0
    %v1236 = vpop.f32.mrf.mxu0
    %v1237 = vadd.f32 %v1182, %v1236
    %v1238 = vpop.f32.mrf.mxu0
    %1239 = vdwg.mxu0
    %v1240 = vmax.f32 %v1234, 0.0
    %v1241 = vmax.f32 %v1237, 0.0
    %v1242 = vpack.c.bf16 %v1241, %v1240
    %v1243 = vld [vmem:[%s8] sm:$0xf]
    %v1244 = vld [vmem:[%s8 + $0x4] sm:$0xf]
    %v1245 = vld [vmem:[%s8 + $0x8] sm:$0xf]
    %v1246 = vld [vmem:[%s8 + $0xc] sm:$0xf]
    %v1247 = vld [vmem:[%s8 + $0x10] sm:$0xf]
    %v1248 = vld [vmem:[%s8 + $0x14] sm:$0xf]
    %v1249 = vld [vmem:[%s8 + $0x18] sm:$0xf]
    %v1250 = vld [vmem:[%s8 + $0x1c] sm:$0xf]
    %v1251 = vlaneseq
    %v1252 = vshrl.u32 %v1251, 7
    %v1253 = vsub.s32 3, %v1252
    %v1254 = vrot.slane %v44, %v1253
    %v1263 = vunpack.c.l.b16 %v1243
    %v1264 = vunpack.c.l.b16 %v1244
    %v1265 = vunpack.c.l.b16 %v1245
    %v1266 = vunpack.c.l.b16 %v1246
    %v1267 = vunpack.c.l.b16 %v1247
    %v1268 = vunpack.c.l.b16 %v1248
    %v1269 = vunpack.c.l.b16 %v1249
    %v1270 = vunpack.c.l.b16 %v1250
    %v1271 = vpack.c.b16 %v1264, %v1263
    %v1272 = vpack.c.b16 %v1266, %v1265
    %v1273 = vpack.c.b16 %v1268, %v1267
    %v1274 = vpack.c.b16 %v1270, %v1269
    %vm1279 = vcmask 523264
    %v1281 = vsel %vm1279, %v1242, 0
    %1283 = vmatprep.subr.bf16.mxu0 0
    %1284 = vmatpush1.bf16.msra.mxu0 0
    %1285 = vmatprep.subr.bf16.mxu0 0
    %1286 = vmatpush1.bf16.msra.mxu0 0
    %1287 = vmatprep.subr.bf16.mxu0 0
    %1288 = vmatpush1.bf16.msra.mxu0 0
    %1289 = vmatprep.subr.bf16.mxu0 0
    %1290 = vmatpush1.bf16.msra.mxu0 0
    %1291 = vmatprep.subr.bf16.mxu0 0
    %1292 = vmatpush1.bf16.msra.mxu0 %v1274
    %1293 = vmatprep.subr.bf16.mxu0 0
    %1294 = vmatpush1.bf16.msra.mxu0 %v1273
    %1295 = vmatprep.subr.bf16.mxu0 0
    %1296 = vmatpush1.bf16.msra.mxu0 %v1272
    %1297 = vmatprep.subr.bf16.mxu0 0
    %1298 = vmatpush1.bf16.msra.mxu0 %v1271
    %1299 = vmatprep.subr.bf16.mxu0 0
    %1300 = vmatpush2.bf16.msra.mxu0 0
    %1301 = vmatprep.subr.bf16.mxu0 0
    %1302 = vmatpush2.bf16.msra.mxu0 0
    %1303 = vmatprep.subr.bf16.mxu0 0
    %1304 = vmatpush2.bf16.msra.mxu0 0
    %1305 = vmatprep.subr.bf16.mxu0 0
    %1306 = vmatpush2.bf16.msra.mxu0 0
    %1307 = vmatprep.subr.bf16.mxu0 0
    %1308 = vmatpush2.bf16.msra.mxu0 0
    %1309 = vmatprep.subr.bf16.mxu0 0
    %1310 = vmatpush2.bf16.msra.mxu0 0
    %1311 = vmatprep.subr.bf16.mxu0 0
    %1312 = vmatpush2.bf16.msra.mxu0 0
    %1313 = vmatprep.subr.bf16.mxu0 0
    %1314 = vmatpush2.bf16.msra.mxu0 0
    %1315 = vmatprep.mubr.bf16.mxu0 0
    %1316 = vmatmul.mubr.bf16.gmra.mxu0 %v1281
    %v1317 = vpop.f32.mrf.mxu0
    %v1318 = vadd.f32 %v1254, %v1317
    %v1319 = vpop.f32.mrf.mxu0
    %v1320 = vpop.f32.mrf.mxu0
    %v1321 = vadd.f32 %v1254, %v1320
    %v1322 = vpop.f32.mrf.mxu0
    %1323 = vdwg.mxu0
    %v1324 = vadd.f32 %v1170, %v1318
    %v1325 = vadd.f32 %v1171, %v1321
    %v1326 = vsel %vm69, %v1324, 0.0
    %1327 = vadd.xlane.f32.xlu0 %v1326
    %v1328 = vpop.xlane.xlu0 %1327
    %v1329 = vsel %vm69, %v1325, 0.0
    %1330 = vadd.xlane.f32.xlu0 %v1329
    %v1331 = vpop.xlane.xlu0 %1330
    %v1332 = vmul.f32 %v1328, %v1139
    %v1333 = vmul.f32 %v1331, %v1139
    %v1334 = vsub.f32 %v1324, %v1332
    %v1335 = vsub.f32 %v1325, %v1333
    %v1336 = vmul.f32 %v1334, %v1334
    %v1337 = vmul.f32 %v1335, %v1335
    %v1338 = vsel %vm69, %v1336, 0.0
    %1339 = vadd.xlane.f32.xlu0 %v1338
    %v1340 = vpop.xlane.xlu0 %1339
    %v1341 = vsel %vm69, %v1337, 0.0
    %1342 = vadd.xlane.f32.xlu0 %v1341
    %v1343 = vpop.xlane.xlu0 %1342
    %v1344 = vmul.f32 %v1340, %v1139
    %v1345 = vmul.f32 %v1343, %v1139
    %v1346 = vadd.f32 %v1344, 1e-05
    %v1347 = vadd.f32 %v1345, 1e-05
    %v1348 = vrsqrt.pop %v1346
    %v1349 = vrsqrt.pop %v1347
    %v1350 = vmul.f32 %v1334, %v1348
    %v1351 = vmul.f32 %v1335, %v1349
    %v1352 = vlaneseq
    %v1353 = vshrl.u32 %v1352, 7
    %v1354 = vsub.s32 4, %v1353
    %v1355 = vrot.slane %v44, %v1354
    %v1356 = vmul.f32 %v1350, %v1355
    %v1357 = vmul.f32 %v1351, %v1355
    %v1358 = vlaneseq
    %v1359 = vshrl.u32 %v1358, 7
    %v1360 = vsub.s32 5, %v1359
    %v1361 = vrot.slane %v44, %v1360
    %v1362 = vadd.f32 %v1356, %v1361
    %v1363 = vadd.f32 %v1357, %v1361
    %s1364 = scalar_lea.vmem %s5, 8
    %v1365 = vld [vmem:[%s1364] sm:$0x3f]
    %v1366 = vpack.c.bf16 %v1363, %v1362
    %s1367 = scalar_lea.vmem %s2, 16
    %v1368 = vld [vmem:[%s1367] sm:$0xf]
    %v1369 = vld [vmem:[%s1367 + $0x4] sm:$0xf]
    %v1370 = vld [vmem:[%s1367 + $0x8] sm:$0xf]
    %v1371 = vld [vmem:[%s1367 + $0xc] sm:$0xf]
    %s1372 = scalar_lea.vmem %s3, 1
    %v1373 = vld [vmem:[%s1372] sm:$0x1]
    %v1375 = vlaneseq
    %v1376 = vshrl.u32 %v1375, 7
    %v1377 = vsub.s32 0, %v1376
    %v1378 = vrot.slane %v1373, %v1377
    %v1384 = vunpack.c.l.b16 %v1368
    %v1385 = vunpack.c.l.b16 %v1369
    %v1386 = vunpack.c.l.b16 %v1370
    %v1387 = vunpack.c.l.b16 %v1371
    %v1388 = vpack.c.b16 %v1385, %v1384
    %v1389 = vpack.c.b16 %v1387, %v1386
    %v1393 = vsel %vm69, %v1366, 0
    %1395 = vmatprep.subr.bf16.mxu0 0
    %1396 = vmatpush1.bf16.msra.mxu0 0
    %1397 = vmatprep.subr.bf16.mxu0 0
    %1398 = vmatpush1.bf16.msra.mxu0 0
    %1399 = vmatprep.subr.bf16.mxu0 0
    %1400 = vmatpush1.bf16.msra.mxu0 0
    %1401 = vmatprep.subr.bf16.mxu0 0
    %1402 = vmatpush1.bf16.msra.mxu0 0
    %1403 = vmatprep.subr.bf16.mxu0 0
    %1404 = vmatpush1.bf16.msra.mxu0 0
    %1405 = vmatprep.subr.bf16.mxu0 0
    %1406 = vmatpush1.bf16.msra.mxu0 0
    %1407 = vmatprep.subr.bf16.mxu0 0
    %1408 = vmatpush1.bf16.msra.mxu0 %v1389
    %1409 = vmatprep.subr.bf16.mxu0 0
    %1410 = vmatpush1.bf16.msra.mxu0 %v1388
    %1411 = vmatprep.subr.bf16.mxu0 0
    %1412 = vmatpush2.bf16.msra.mxu0 0
    %1413 = vmatprep.subr.bf16.mxu0 0
    %1414 = vmatpush2.bf16.msra.mxu0 0
    %1415 = vmatprep.subr.bf16.mxu0 0
    %1416 = vmatpush2.bf16.msra.mxu0 0
    %1417 = vmatprep.subr.bf16.mxu0 0
    %1418 = vmatpush2.bf16.msra.mxu0 0
    %1419 = vmatprep.subr.bf16.mxu0 0
    %1420 = vmatpush2.bf16.msra.mxu0 0
    %1421 = vmatprep.subr.bf16.mxu0 0
    %1422 = vmatpush2.bf16.msra.mxu0 0
    %1423 = vmatprep.subr.bf16.mxu0 0
    %1424 = vmatpush2.bf16.msra.mxu0 0
    %1425 = vmatprep.subr.bf16.mxu0 0
    %1426 = vmatpush2.bf16.msra.mxu0 0
    %1427 = vmatprep.mubr.bf16.mxu0 0
    %1428 = vmatmul.mubr.bf16.gmra.mxu0 %v1393
    %v1429 = vpop.f32.mrf.mxu0
    %v1430 = vadd.f32 %v1378, %v1429
    %v1431 = vpop.f32.mrf.mxu0
    %v1432 = vpop.f32.mrf.mxu0
    %v1433 = vadd.f32 %v1378, %v1432
    %v1434 = vpop.f32.mrf.mxu0
    %1435 = vdwg.mxu0
    %1438 = vrot.lane.b32.xlu0 %v1430, 120
    %v1439 = vpop.permute.xlu0 %1438
    %1440 = vrot.lane.b32.xlu0 %v1433, 120
    %v1441 = vpop.permute.xlu0 %1440
    %1444 = vrot.lane.b32.xlu0 %v1430, 112
    %v1445 = vpop.permute.xlu0 %1444
    %1446 = vrot.lane.b32.xlu0 %v1433, 112
    %v1447 = vpop.permute.xlu0 %1446
    %1450 = vrot.lane.b32.xlu0 %v1430, 104
    %v1451 = vpop.permute.xlu0 %1450
    %1452 = vrot.lane.b32.xlu0 %v1433, 104
    %v1453 = vpop.permute.xlu0 %1452
    %v1456 = vpack.c.bf16 %v1430, %v1430
    %v1457 = vpack.c.bf16 %v1433, %v1433
    %v1458 = vpack.c.bf16 %v1439, %v1439
    %v1459 = vpack.c.bf16 %v1441, %v1441
    %v1460 = vpack.c.bf16 %v1445, %v1445
    %v1461 = vpack.c.bf16 %v1447, %v1447
    %v1462 = vpack.c.bf16 %v1451, %v1451
    %v1463 = vpack.c.bf16 %v1453, %v1453
    %1465 = vrot.lane.b32.xlu0 %v1456, 96
    %v1466 = vpop.permute.xlu0 %1465
    %v1468 = vsel %vm145, %v1456, 0
    %v1471 = vsel %vm145, %v1466, 0
    %1473 = vmatprep.subr.bf16.mxu0 0
    %1474 = vmatpush1.bf16.xpose.msra.mxu0 0
    %1475 = vmatprep.subr.bf16.mxu0 0
    %1476 = vmatpush1.bf16.xpose.msra.mxu0 0
    %1477 = vmatprep.subr.bf16.mxu0 0
    %1478 = vmatpush1.bf16.xpose.msra.mxu0 0
    %1479 = vmatprep.subr.bf16.mxu0 0
    %1480 = vmatpush1.bf16.xpose.msra.mxu0 0
    %1481 = vmatprep.subr.bf16.mxu0 0
    %1482 = vmatpush1.bf16.xpose.msra.mxu0 0
    %1483 = vmatprep.subr.bf16.mxu0 0
    %1484 = vmatpush1.bf16.xpose.msra.mxu0 0
    %1485 = vmatprep.subr.bf16.mxu0 0
    %1486 = vmatpush1.bf16.xpose.msra.mxu0 0
    %1487 = vmatprep.subr.bf16.mxu0 0
    %1488 = vmatpush1.bf16.xpose.msra.mxu0 %v1471
    %1489 = vmatprep.subr.bf16.mxu0 0
    %1490 = vmatpush2.bf16.xpose.msra.mxu0 0
    %1491 = vmatprep.subr.bf16.mxu0 0
    %1492 = vmatpush2.bf16.xpose.msra.mxu0 0
    %1493 = vmatprep.subr.bf16.mxu0 0
    %1494 = vmatpush2.bf16.xpose.msra.mxu0 0
    %1495 = vmatprep.subr.bf16.mxu0 0
    %1496 = vmatpush2.bf16.xpose.msra.mxu0 0
    %1497 = vmatprep.subr.bf16.mxu0 0
    %1498 = vmatpush2.bf16.xpose.msra.mxu0 0
    %1499 = vmatprep.subr.bf16.mxu0 0
    %1500 = vmatpush2.bf16.xpose.msra.mxu0 0
    %1501 = vmatprep.subr.bf16.mxu0 0
    %1502 = vmatpush2.bf16.xpose.msra.mxu0 0
    %1503 = vmatprep.subr.bf16.mxu0 0
    %1504 = vmatpush2.bf16.xpose.msra.mxu0 0
    %1505 = vmatprep.mubr.bf16.mxu0 0
    %1506 = vmatmul.mubr.bf16.gmra.mxu0 %v1468
    %v1507 = vpop.f32.mrf.mxu0
    %v1508 = vadd.f32 0.0, %v1507
    %v1509 = vpop.f32.mrf.mxu0
    %v1510 = vpop.f32.mrf.mxu0
    %v1511 = vpop.f32.mrf.mxu0
    %1512 = vdwg.mxu0
    %1514 = vrot.lane.b32.xlu0 %v1457, 96
    %v1515 = vpop.permute.xlu0 %1514
    %v1517 = vsel %vm145, %v1457, 0
    %v1520 = vsel %vm145, %v1515, 0
    %1522 = vmatprep.subr.bf16.mxu0 0
    %1523 = vmatpush1.bf16.xpose.msra.mxu0 0
    %1524 = vmatprep.subr.bf16.mxu0 0
    %1525 = vmatpush1.bf16.xpose.msra.mxu0 0
    %1526 = vmatprep.subr.bf16.mxu0 0
    %1527 = vmatpush1.bf16.xpose.msra.mxu0 0
    %1528 = vmatprep.subr.bf16.mxu0 0
    %1529 = vmatpush1.bf16.xpose.msra.mxu0 0
    %1530 = vmatprep.subr.bf16.mxu0 0
    %1531 = vmatpush1.bf16.xpose.msra.mxu0 0
    %1532 = vmatprep.subr.bf16.mxu0 0
    %1533 = vmatpush1.bf16.xpose.msra.mxu0 0
    %1534 = vmatprep.subr.bf16.mxu0 0
    %1535 = vmatpush1.bf16.xpose.msra.mxu0 0
    %1536 = vmatprep.subr.bf16.mxu0 0
    %1537 = vmatpush1.bf16.xpose.msra.mxu0 %v1520
    %1538 = vmatprep.subr.bf16.mxu0 0
    %1539 = vmatpush2.bf16.xpose.msra.mxu0 0
    %1540 = vmatprep.subr.bf16.mxu0 0
    %1541 = vmatpush2.bf16.xpose.msra.mxu0 0
    %1542 = vmatprep.subr.bf16.mxu0 0
    %1543 = vmatpush2.bf16.xpose.msra.mxu0 0
    %1544 = vmatprep.subr.bf16.mxu0 0
    %1545 = vmatpush2.bf16.xpose.msra.mxu0 0
    %1546 = vmatprep.subr.bf16.mxu0 0
    %1547 = vmatpush2.bf16.xpose.msra.mxu0 0
    %1548 = vmatprep.subr.bf16.mxu0 0
    %1549 = vmatpush2.bf16.xpose.msra.mxu0 0
    %1550 = vmatprep.subr.bf16.mxu0 0
    %1551 = vmatpush2.bf16.xpose.msra.mxu0 0
    %1552 = vmatprep.subr.bf16.mxu0 0
    %1553 = vmatpush2.bf16.xpose.msra.mxu0 0
    %1554 = vmatprep.mubr.bf16.mxu0 0
    %1555 = vmatmul.mubr.bf16.gmra.mxu0 %v1517
    %v1556 = vpop.f32.mrf.mxu0
    %v1557 = vadd.f32 0.0, %v1556
    %v1558 = vpop.f32.mrf.mxu0
    %v1559 = vpop.f32.mrf.mxu0
    %v1560 = vpop.f32.mrf.mxu0
    %1561 = vdwg.mxu0
    %1563 = vrot.lane.b32.xlu0 %v1458, 96
    %v1564 = vpop.permute.xlu0 %1563
    %v1566 = vsel %vm145, %v1458, 0
    %v1569 = vsel %vm145, %v1564, 0
    %1571 = vmatprep.subr.bf16.mxu0 0
    %1572 = vmatpush1.bf16.xpose.msra.mxu0 0
    %1573 = vmatprep.subr.bf16.mxu0 0
    %1574 = vmatpush1.bf16.xpose.msra.mxu0 0
    %1575 = vmatprep.subr.bf16.mxu0 0
    %1576 = vmatpush1.bf16.xpose.msra.mxu0 0
    %1577 = vmatprep.subr.bf16.mxu0 0
    %1578 = vmatpush1.bf16.xpose.msra.mxu0 0
    %1579 = vmatprep.subr.bf16.mxu0 0
    %1580 = vmatpush1.bf16.xpose.msra.mxu0 0
    %1581 = vmatprep.subr.bf16.mxu0 0
    %1582 = vmatpush1.bf16.xpose.msra.mxu0 0
    %1583 = vmatprep.subr.bf16.mxu0 0
    %1584 = vmatpush1.bf16.xpose.msra.mxu0 0
    %1585 = vmatprep.subr.bf16.mxu0 0
    %1586 = vmatpush1.bf16.xpose.msra.mxu0 %v1569
    %1587 = vmatprep.subr.bf16.mxu0 0
    %1588 = vmatpush2.bf16.xpose.msra.mxu0 0
    %1589 = vmatprep.subr.bf16.mxu0 0
    %1590 = vmatpush2.bf16.xpose.msra.mxu0 0
    %1591 = vmatprep.subr.bf16.mxu0 0
    %1592 = vmatpush2.bf16.xpose.msra.mxu0 0
    %1593 = vmatprep.subr.bf16.mxu0 0
    %1594 = vmatpush2.bf16.xpose.msra.mxu0 0
    %1595 = vmatprep.subr.bf16.mxu0 0
    %1596 = vmatpush2.bf16.xpose.msra.mxu0 0
    %1597 = vmatprep.subr.bf16.mxu0 0
    %1598 = vmatpush2.bf16.xpose.msra.mxu0 0
    %1599 = vmatprep.subr.bf16.mxu0 0
    %1600 = vmatpush2.bf16.xpose.msra.mxu0 0
    %1601 = vmatprep.subr.bf16.mxu0 0
    %1602 = vmatpush2.bf16.xpose.msra.mxu0 0
    %1603 = vmatprep.mubr.bf16.mxu0 0
    %1604 = vmatmul.mubr.bf16.gmra.mxu0 %v1566
    %v1605 = vpop.f32.mrf.mxu0
    %v1606 = vadd.f32 0.0, %v1605
    %v1607 = vpop.f32.mrf.mxu0
    %v1608 = vpop.f32.mrf.mxu0
    %v1609 = vpop.f32.mrf.mxu0
    %1610 = vdwg.mxu0
    %1612 = vrot.lane.b32.xlu0 %v1459, 96
    %v1613 = vpop.permute.xlu0 %1612
    %v1615 = vsel %vm145, %v1459, 0
    %v1618 = vsel %vm145, %v1613, 0
    %1620 = vmatprep.subr.bf16.mxu0 0
    %1621 = vmatpush1.bf16.xpose.msra.mxu0 0
    %1622 = vmatprep.subr.bf16.mxu0 0
    %1623 = vmatpush1.bf16.xpose.msra.mxu0 0
    %1624 = vmatprep.subr.bf16.mxu0 0
    %1625 = vmatpush1.bf16.xpose.msra.mxu0 0
    %1626 = vmatprep.subr.bf16.mxu0 0
    %1627 = vmatpush1.bf16.xpose.msra.mxu0 0
    %1628 = vmatprep.subr.bf16.mxu0 0
    %1629 = vmatpush1.bf16.xpose.msra.mxu0 0
    %1630 = vmatprep.subr.bf16.mxu0 0
    %1631 = vmatpush1.bf16.xpose.msra.mxu0 0
    %1632 = vmatprep.subr.bf16.mxu0 0
    %1633 = vmatpush1.bf16.xpose.msra.mxu0 0
    %1634 = vmatprep.subr.bf16.mxu0 0
    %1635 = vmatpush1.bf16.xpose.msra.mxu0 %v1618
    %1636 = vmatprep.subr.bf16.mxu0 0
    %1637 = vmatpush2.bf16.xpose.msra.mxu0 0
    %1638 = vmatprep.subr.bf16.mxu0 0
    %1639 = vmatpush2.bf16.xpose.msra.mxu0 0
    %1640 = vmatprep.subr.bf16.mxu0 0
    %1641 = vmatpush2.bf16.xpose.msra.mxu0 0
    %1642 = vmatprep.subr.bf16.mxu0 0
    %1643 = vmatpush2.bf16.xpose.msra.mxu0 0
    %1644 = vmatprep.subr.bf16.mxu0 0
    %1645 = vmatpush2.bf16.xpose.msra.mxu0 0
    %1646 = vmatprep.subr.bf16.mxu0 0
    %1647 = vmatpush2.bf16.xpose.msra.mxu0 0
    %1648 = vmatprep.subr.bf16.mxu0 0
    %1649 = vmatpush2.bf16.xpose.msra.mxu0 0
    %1650 = vmatprep.subr.bf16.mxu0 0
    %1651 = vmatpush2.bf16.xpose.msra.mxu0 0
    %1652 = vmatprep.mubr.bf16.mxu0 0
    %1653 = vmatmul.mubr.bf16.gmra.mxu0 %v1615
    %v1654 = vpop.f32.mrf.mxu0
    %v1655 = vadd.f32 0.0, %v1654
    %v1656 = vpop.f32.mrf.mxu0
    %v1657 = vpop.f32.mrf.mxu0
    %v1658 = vpop.f32.mrf.mxu0
    %1659 = vdwg.mxu0
    %1661 = vrot.lane.b32.xlu0 %v1460, 96
    %v1662 = vpop.permute.xlu0 %1661
    %v1664 = vsel %vm145, %v1460, 0
    %v1667 = vsel %vm145, %v1662, 0
    %1669 = vmatprep.subr.bf16.mxu0 0
    %1670 = vmatpush1.bf16.xpose.msra.mxu0 0
    %1671 = vmatprep.subr.bf16.mxu0 0
    %1672 = vmatpush1.bf16.xpose.msra.mxu0 0
    %1673 = vmatprep.subr.bf16.mxu0 0
    %1674 = vmatpush1.bf16.xpose.msra.mxu0 0
    %1675 = vmatprep.subr.bf16.mxu0 0
    %1676 = vmatpush1.bf16.xpose.msra.mxu0 0
    %1677 = vmatprep.subr.bf16.mxu0 0
    %1678 = vmatpush1.bf16.xpose.msra.mxu0 0
    %1679 = vmatprep.subr.bf16.mxu0 0
    %1680 = vmatpush1.bf16.xpose.msra.mxu0 0
    %1681 = vmatprep.subr.bf16.mxu0 0
    %1682 = vmatpush1.bf16.xpose.msra.mxu0 0
    %1683 = vmatprep.subr.bf16.mxu0 0
    %1684 = vmatpush1.bf16.xpose.msra.mxu0 %v1667
    %1685 = vmatprep.subr.bf16.mxu0 0
    %1686 = vmatpush2.bf16.xpose.msra.mxu0 0
    %1687 = vmatprep.subr.bf16.mxu0 0
    %1688 = vmatpush2.bf16.xpose.msra.mxu0 0
    %1689 = vmatprep.subr.bf16.mxu0 0
    %1690 = vmatpush2.bf16.xpose.msra.mxu0 0
    %1691 = vmatprep.subr.bf16.mxu0 0
    %1692 = vmatpush2.bf16.xpose.msra.mxu0 0
    %1693 = vmatprep.subr.bf16.mxu0 0
    %1694 = vmatpush2.bf16.xpose.msra.mxu0 0
    %1695 = vmatprep.subr.bf16.mxu0 0
    %1696 = vmatpush2.bf16.xpose.msra.mxu0 0
    %1697 = vmatprep.subr.bf16.mxu0 0
    %1698 = vmatpush2.bf16.xpose.msra.mxu0 0
    %1699 = vmatprep.subr.bf16.mxu0 0
    %1700 = vmatpush2.bf16.xpose.msra.mxu0 0
    %1701 = vmatprep.mubr.bf16.mxu0 0
    %1702 = vmatmul.mubr.bf16.gmra.mxu0 %v1664
    %v1703 = vpop.f32.mrf.mxu0
    %v1704 = vadd.f32 0.0, %v1703
    %v1705 = vpop.f32.mrf.mxu0
    %v1706 = vpop.f32.mrf.mxu0
    %v1707 = vpop.f32.mrf.mxu0
    %1708 = vdwg.mxu0
    %1710 = vrot.lane.b32.xlu0 %v1461, 96
    %v1711 = vpop.permute.xlu0 %1710
    %v1713 = vsel %vm145, %v1461, 0
    %v1716 = vsel %vm145, %v1711, 0
    %1718 = vmatprep.subr.bf16.mxu0 0
    %1719 = vmatpush1.bf16.xpose.msra.mxu0 0
    %1720 = vmatprep.subr.bf16.mxu0 0
    %1721 = vmatpush1.bf16.xpose.msra.mxu0 0
    %1722 = vmatprep.subr.bf16.mxu0 0
    %1723 = vmatpush1.bf16.xpose.msra.mxu0 0
    %1724 = vmatprep.subr.bf16.mxu0 0
    %1725 = vmatpush1.bf16.xpose.msra.mxu0 0
    %1726 = vmatprep.subr.bf16.mxu0 0
    %1727 = vmatpush1.bf16.xpose.msra.mxu0 0
    %1728 = vmatprep.subr.bf16.mxu0 0
    %1729 = vmatpush1.bf16.xpose.msra.mxu0 0
    %1730 = vmatprep.subr.bf16.mxu0 0
    %1731 = vmatpush1.bf16.xpose.msra.mxu0 0
    %1732 = vmatprep.subr.bf16.mxu0 0
    %1733 = vmatpush1.bf16.xpose.msra.mxu0 %v1716
    %1734 = vmatprep.subr.bf16.mxu0 0
    %1735 = vmatpush2.bf16.xpose.msra.mxu0 0
    %1736 = vmatprep.subr.bf16.mxu0 0
    %1737 = vmatpush2.bf16.xpose.msra.mxu0 0
    %1738 = vmatprep.subr.bf16.mxu0 0
    %1739 = vmatpush2.bf16.xpose.msra.mxu0 0
    %1740 = vmatprep.subr.bf16.mxu0 0
    %1741 = vmatpush2.bf16.xpose.msra.mxu0 0
    %1742 = vmatprep.subr.bf16.mxu0 0
    %1743 = vmatpush2.bf16.xpose.msra.mxu0 0
    %1744 = vmatprep.subr.bf16.mxu0 0
    %1745 = vmatpush2.bf16.xpose.msra.mxu0 0
    %1746 = vmatprep.subr.bf16.mxu0 0
    %1747 = vmatpush2.bf16.xpose.msra.mxu0 0
    %1748 = vmatprep.subr.bf16.mxu0 0
    %1749 = vmatpush2.bf16.xpose.msra.mxu0 0
    %1750 = vmatprep.mubr.bf16.mxu0 0
    %1751 = vmatmul.mubr.bf16.gmra.mxu0 %v1713
    %v1752 = vpop.f32.mrf.mxu0
    %v1753 = vadd.f32 0.0, %v1752
    %v1754 = vpop.f32.mrf.mxu0
    %v1755 = vpop.f32.mrf.mxu0
    %v1756 = vpop.f32.mrf.mxu0
    %1757 = vdwg.mxu0
    %1759 = vrot.lane.b32.xlu0 %v1462, 96
    %v1760 = vpop.permute.xlu0 %1759
    %v1762 = vsel %vm145, %v1462, 0
    %v1765 = vsel %vm145, %v1760, 0
    %1767 = vmatprep.subr.bf16.mxu0 0
    %1768 = vmatpush1.bf16.xpose.msra.mxu0 0
    %1769 = vmatprep.subr.bf16.mxu0 0
    %1770 = vmatpush1.bf16.xpose.msra.mxu0 0
    %1771 = vmatprep.subr.bf16.mxu0 0
    %1772 = vmatpush1.bf16.xpose.msra.mxu0 0
    %1773 = vmatprep.subr.bf16.mxu0 0
    %1774 = vmatpush1.bf16.xpose.msra.mxu0 0
    %1775 = vmatprep.subr.bf16.mxu0 0
    %1776 = vmatpush1.bf16.xpose.msra.mxu0 0
    %1777 = vmatprep.subr.bf16.mxu0 0
    %1778 = vmatpush1.bf16.xpose.msra.mxu0 0
    %1779 = vmatprep.subr.bf16.mxu0 0
    %1780 = vmatpush1.bf16.xpose.msra.mxu0 0
    %1781 = vmatprep.subr.bf16.mxu0 0
    %1782 = vmatpush1.bf16.xpose.msra.mxu0 %v1765
    %1783 = vmatprep.subr.bf16.mxu0 0
    %1784 = vmatpush2.bf16.xpose.msra.mxu0 0
    %1785 = vmatprep.subr.bf16.mxu0 0
    %1786 = vmatpush2.bf16.xpose.msra.mxu0 0
    %1787 = vmatprep.subr.bf16.mxu0 0
    %1788 = vmatpush2.bf16.xpose.msra.mxu0 0
    %1789 = vmatprep.subr.bf16.mxu0 0
    %1790 = vmatpush2.bf16.xpose.msra.mxu0 0
    %1791 = vmatprep.subr.bf16.mxu0 0
    %1792 = vmatpush2.bf16.xpose.msra.mxu0 0
    %1793 = vmatprep.subr.bf16.mxu0 0
    %1794 = vmatpush2.bf16.xpose.msra.mxu0 0
    %1795 = vmatprep.subr.bf16.mxu0 0
    %1796 = vmatpush2.bf16.xpose.msra.mxu0 0
    %1797 = vmatprep.subr.bf16.mxu0 0
    %1798 = vmatpush2.bf16.xpose.msra.mxu0 0
    %1799 = vmatprep.mubr.bf16.mxu0 0
    %1800 = vmatmul.mubr.bf16.gmra.mxu0 %v1762
    %v1801 = vpop.f32.mrf.mxu0
    %v1802 = vadd.f32 0.0, %v1801
    %v1803 = vpop.f32.mrf.mxu0
    %v1804 = vpop.f32.mrf.mxu0
    %v1805 = vpop.f32.mrf.mxu0
    %1806 = vdwg.mxu0
    %1808 = vrot.lane.b32.xlu0 %v1463, 96
    %v1809 = vpop.permute.xlu0 %1808
    %v1811 = vsel %vm145, %v1463, 0
    %v1814 = vsel %vm145, %v1809, 0
    %1816 = vmatprep.subr.bf16.mxu0 0
    %1817 = vmatpush1.bf16.xpose.msra.mxu0 0
    %1818 = vmatprep.subr.bf16.mxu0 0
    %1819 = vmatpush1.bf16.xpose.msra.mxu0 0
    %1820 = vmatprep.subr.bf16.mxu0 0
    %1821 = vmatpush1.bf16.xpose.msra.mxu0 0
    %1822 = vmatprep.subr.bf16.mxu0 0
    %1823 = vmatpush1.bf16.xpose.msra.mxu0 0
    %1824 = vmatprep.subr.bf16.mxu0 0
    %1825 = vmatpush1.bf16.xpose.msra.mxu0 0
    %1826 = vmatprep.subr.bf16.mxu0 0
    %1827 = vmatpush1.bf16.xpose.msra.mxu0 0
    %1828 = vmatprep.subr.bf16.mxu0 0
    %1829 = vmatpush1.bf16.xpose.msra.mxu0 0
    %1830 = vmatprep.subr.bf16.mxu0 0
    %1831 = vmatpush1.bf16.xpose.msra.mxu0 %v1814
    %1832 = vmatprep.subr.bf16.mxu0 0
    %1833 = vmatpush2.bf16.xpose.msra.mxu0 0
    %1834 = vmatprep.subr.bf16.mxu0 0
    %1835 = vmatpush2.bf16.xpose.msra.mxu0 0
    %1836 = vmatprep.subr.bf16.mxu0 0
    %1837 = vmatpush2.bf16.xpose.msra.mxu0 0
    %1838 = vmatprep.subr.bf16.mxu0 0
    %1839 = vmatpush2.bf16.xpose.msra.mxu0 0
    %1840 = vmatprep.subr.bf16.mxu0 0
    %1841 = vmatpush2.bf16.xpose.msra.mxu0 0
    %1842 = vmatprep.subr.bf16.mxu0 0
    %1843 = vmatpush2.bf16.xpose.msra.mxu0 0
    %1844 = vmatprep.subr.bf16.mxu0 0
    %1845 = vmatpush2.bf16.xpose.msra.mxu0 0
    %1846 = vmatprep.subr.bf16.mxu0 0
    %1847 = vmatpush2.bf16.xpose.msra.mxu0 0
    %1848 = vmatprep.mubr.bf16.mxu0 0
    %1849 = vmatmul.mubr.bf16.gmra.mxu0 %v1811
    %v1850 = vpop.f32.mrf.mxu0
    %v1851 = vadd.f32 0.0, %v1850
    %v1852 = vpop.f32.mrf.mxu0
    %v1853 = vpop.f32.mrf.mxu0
    %v1854 = vpop.f32.mrf.mxu0
    %1855 = vdwg.mxu0
    %v1856 = vmul.f32 %v1508, 0.35355338
    %v1857 = vmul.f32 %v1557, 0.35355338
    %v1858 = vmul.f32 %v1606, 0.35355338
    %v1859 = vmul.f32 %v1655, 0.35355338
    %v1860 = vmul.f32 %v1704, 0.35355338
    %v1861 = vmul.f32 %v1753, 0.35355338
    %v1862 = vmul.f32 %v1802, 0.35355338
    %v1863 = vmul.f32 %v1851, 0.35355338
    %v1864 = vsel %vm544, -1e+30, %v1856
    %v1865 = vsel %vm544, -1e+30, %v1857
    %v1866 = vsel %vm544, -1e+30, %v1858
    %v1867 = vsel %vm544, -1e+30, %v1859
    %v1868 = vsel %vm544, -1e+30, %v1860
    %v1869 = vsel %vm544, -1e+30, %v1861
    %v1870 = vsel %vm544, -1e+30, %v1862
    %v1871 = vsel %vm544, -1e+30, %v1863
    %v1872 = vsel %vm145, %v1864, -inf
    %1873 = vmax.xlane.f32.xlu0 %v1872
    %v1874 = vpop.xlane.xlu0 %1873
    %v1875 = vsel %vm145, %v1865, -inf
    %1876 = vmax.xlane.f32.xlu0 %v1875
    %v1877 = vpop.xlane.xlu0 %1876
    %v1878 = vsel %vm145, %v1866, -inf
    %1879 = vmax.xlane.f32.xlu0 %v1878
    %v1880 = vpop.xlane.xlu0 %1879
    %v1881 = vsel %vm145, %v1867, -inf
    %1882 = vmax.xlane.f32.xlu0 %v1881
    %v1883 = vpop.xlane.xlu0 %1882
    %v1884 = vsel %vm145, %v1868, -inf
    %1885 = vmax.xlane.f32.xlu0 %v1884
    %v1886 = vpop.xlane.xlu0 %1885
    %v1887 = vsel %vm145, %v1869, -inf
    %1888 = vmax.xlane.f32.xlu0 %v1887
    %v1889 = vpop.xlane.xlu0 %1888
    %v1890 = vsel %vm145, %v1870, -inf
    %1891 = vmax.xlane.f32.xlu0 %v1890
    %v1892 = vpop.xlane.xlu0 %1891
    %v1893 = vsel %vm145, %v1871, -inf
    %1894 = vmax.xlane.f32.xlu0 %v1893
    %v1895 = vpop.xlane.xlu0 %1894
    %v1896 = vsub.f32 %v1864, %v1874
    %v1897 = vsub.f32 %v1865, %v1877
    %v1898 = vsub.f32 %v1866, %v1880
    %v1899 = vsub.f32 %v1867, %v1883
    %v1900 = vsub.f32 %v1868, %v1886
    %v1901 = vsub.f32 %v1869, %v1889
    %v1902 = vsub.f32 %v1870, %v1892
    %v1903 = vsub.f32 %v1871, %v1895
    %v1904 = vmul.f32 %v1896, 1.442695
    %v1905 = vpow.pop %v1904
    %v1906 = vmul.f32 %v1897, 1.442695
    %v1907 = vpow.pop %v1906
    %v1908 = vmul.f32 %v1898, 1.442695
    %v1909 = vpow.pop %v1908
    %v1910 = vmul.f32 %v1899, 1.442695
    %v1911 = vpow.pop %v1910
    %v1912 = vmul.f32 %v1900, 1.442695
    %v1913 = vpow.pop %v1912
    %v1914 = vmul.f32 %v1901, 1.442695
    %v1915 = vpow.pop %v1914
    %v1916 = vmul.f32 %v1902, 1.442695
    %v1917 = vpow.pop %v1916
    %v1918 = vmul.f32 %v1903, 1.442695
    %v1919 = vpow.pop %v1918
    %v1920 = vsel %vm145, %v1905, 0.0
    %1921 = vadd.xlane.f32.xlu0 %v1920
    %v1922 = vpop.xlane.xlu0 %1921
    %v1923 = vsel %vm145, %v1907, 0.0
    %1924 = vadd.xlane.f32.xlu0 %v1923
    %v1925 = vpop.xlane.xlu0 %1924
    %v1926 = vsel %vm145, %v1909, 0.0
    %1927 = vadd.xlane.f32.xlu0 %v1926
    %v1928 = vpop.xlane.xlu0 %1927
    %v1929 = vsel %vm145, %v1911, 0.0
    %1930 = vadd.xlane.f32.xlu0 %v1929
    %v1931 = vpop.xlane.xlu0 %1930
    %v1932 = vsel %vm145, %v1913, 0.0
    %1933 = vadd.xlane.f32.xlu0 %v1932
    %v1934 = vpop.xlane.xlu0 %1933
    %v1935 = vsel %vm145, %v1915, 0.0
    %1936 = vadd.xlane.f32.xlu0 %v1935
    %v1937 = vpop.xlane.xlu0 %1936
    %v1938 = vsel %vm145, %v1917, 0.0
    %1939 = vadd.xlane.f32.xlu0 %v1938
    %v1940 = vpop.xlane.xlu0 %1939
    %v1941 = vsel %vm145, %v1919, 0.0
    %1942 = vadd.xlane.f32.xlu0 %v1941
    %v1943 = vpop.xlane.xlu0 %1942
    %v1944 = vrcp.pop %v1922
    %v1945 = vmul.f32 %v1905, %v1944
    %v1946 = vrcp.pop %v1925
    %v1947 = vmul.f32 %v1907, %v1946
    %v1948 = vrcp.pop %v1928
    %v1949 = vmul.f32 %v1909, %v1948
    %v1950 = vrcp.pop %v1931
    %v1951 = vmul.f32 %v1911, %v1950
    %v1952 = vrcp.pop %v1934
    %v1953 = vmul.f32 %v1913, %v1952
    %v1954 = vrcp.pop %v1937
    %v1955 = vmul.f32 %v1915, %v1954
    %v1956 = vrcp.pop %v1940
    %v1957 = vmul.f32 %v1917, %v1956
    %v1958 = vrcp.pop %v1943
    %v1959 = vmul.f32 %v1919, %v1958
    %v1960 = vpack.c.bf16 %v1945, %v1945
    %v1961 = vpack.c.bf16 %v1947, %v1947
    %v1962 = vpack.c.bf16 %v1949, %v1949
    %v1963 = vpack.c.bf16 %v1951, %v1951
    %v1964 = vpack.c.bf16 %v1953, %v1953
    %v1965 = vpack.c.bf16 %v1955, %v1955
    %v1966 = vpack.c.bf16 %v1957, %v1957
    %v1967 = vpack.c.bf16 %v1959, %v1959
    %1968 = vrot.lane.b32.xlu0 %v1456, 64
    %v1969 = vpop.permute.xlu0 %1968
    %v1971 = vsel %vm145, %v1960, 0
    %v1974 = vsel %vm654, %v1969, 0
    %1976 = vmatprep.subr.bf16.mxu0 0
    %1977 = vmatpush1.bf16.msra.mxu0 0
    %1978 = vmatprep.subr.bf16.mxu0 0
    %1979 = vmatpush1.bf16.msra.mxu0 0
    %1980 = vmatprep.subr.bf16.mxu0 0
    %1981 = vmatpush1.bf16.msra.mxu0 0
    %1982 = vmatprep.subr.bf16.mxu0 0
    %1983 = vmatpush1.bf16.msra.mxu0 0
    %1984 = vmatprep.subr.bf16.mxu0 0
    %1985 = vmatpush1.bf16.msra.mxu0 0
    %1986 = vmatprep.subr.bf16.mxu0 0
    %1987 = vmatpush1.bf16.msra.mxu0 0
    %1988 = vmatprep.subr.bf16.mxu0 0
    %1989 = vmatpush1.bf16.msra.mxu0 0
    %1990 = vmatprep.subr.bf16.mxu0 0
    %1991 = vmatpush1.bf16.msra.mxu0 %v1974
    %1992 = vmatprep.subr.bf16.mxu0 0
    %1993 = vmatpush2.bf16.msra.mxu0 0
    %1994 = vmatprep.subr.bf16.mxu0 0
    %1995 = vmatpush2.bf16.msra.mxu0 0
    %1996 = vmatprep.subr.bf16.mxu0 0
    %1997 = vmatpush2.bf16.msra.mxu0 0
    %1998 = vmatprep.subr.bf16.mxu0 0
    %1999 = vmatpush2.bf16.msra.mxu0 0
    %2000 = vmatprep.subr.bf16.mxu0 0
    %2001 = vmatpush2.bf16.msra.mxu0 0
    %2002 = vmatprep.subr.bf16.mxu0 0
    %2003 = vmatpush2.bf16.msra.mxu0 0
    %2004 = vmatprep.subr.bf16.mxu0 0
    %2005 = vmatpush2.bf16.msra.mxu0 0
    %2006 = vmatprep.subr.bf16.mxu0 0
    %2007 = vmatpush2.bf16.msra.mxu0 0
    %2008 = vmatprep.mubr.bf16.mxu0 0
    %2009 = vmatmul.mubr.bf16.gmra.mxu0 %v1971
    %v2010 = vpop.f32.mrf.mxu0
    %v2011 = vadd.f32 0.0, %v2010
    %v2012 = vpop.f32.mrf.mxu0
    %v2013 = vpop.f32.mrf.mxu0
    %v2014 = vpop.f32.mrf.mxu0
    %2015 = vdwg.mxu0
    %2016 = vrot.lane.b32.xlu0 %v1457, 64
    %v2017 = vpop.permute.xlu0 %2016
    %v2019 = vsel %vm145, %v1961, 0
    %v2022 = vsel %vm654, %v2017, 0
    %2024 = vmatprep.subr.bf16.mxu0 0
    %2025 = vmatpush1.bf16.msra.mxu0 0
    %2026 = vmatprep.subr.bf16.mxu0 0
    %2027 = vmatpush1.bf16.msra.mxu0 0
    %2028 = vmatprep.subr.bf16.mxu0 0
    %2029 = vmatpush1.bf16.msra.mxu0 0
    %2030 = vmatprep.subr.bf16.mxu0 0
    %2031 = vmatpush1.bf16.msra.mxu0 0
    %2032 = vmatprep.subr.bf16.mxu0 0
    %2033 = vmatpush1.bf16.msra.mxu0 0
    %2034 = vmatprep.subr.bf16.mxu0 0
    %2035 = vmatpush1.bf16.msra.mxu0 0
    %2036 = vmatprep.subr.bf16.mxu0 0
    %2037 = vmatpush1.bf16.msra.mxu0 0
    %2038 = vmatprep.subr.bf16.mxu0 0
    %2039 = vmatpush1.bf16.msra.mxu0 %v2022
    %2040 = vmatprep.subr.bf16.mxu0 0
    %2041 = vmatpush2.bf16.msra.mxu0 0
    %2042 = vmatprep.subr.bf16.mxu0 0
    %2043 = vmatpush2.bf16.msra.mxu0 0
    %2044 = vmatprep.subr.bf16.mxu0 0
    %2045 = vmatpush2.bf16.msra.mxu0 0
    %2046 = vmatprep.subr.bf16.mxu0 0
    %2047 = vmatpush2.bf16.msra.mxu0 0
    %2048 = vmatprep.subr.bf16.mxu0 0
    %2049 = vmatpush2.bf16.msra.mxu0 0
    %2050 = vmatprep.subr.bf16.mxu0 0
    %2051 = vmatpush2.bf16.msra.mxu0 0
    %2052 = vmatprep.subr.bf16.mxu0 0
    %2053 = vmatpush2.bf16.msra.mxu0 0
    %2054 = vmatprep.subr.bf16.mxu0 0
    %2055 = vmatpush2.bf16.msra.mxu0 0
    %2056 = vmatprep.mubr.bf16.mxu0 0
    %2057 = vmatmul.mubr.bf16.gmra.mxu0 %v2019
    %v2058 = vpop.f32.mrf.mxu0
    %v2059 = vadd.f32 0.0, %v2058
    %v2060 = vpop.f32.mrf.mxu0
    %v2061 = vpop.f32.mrf.mxu0
    %v2062 = vpop.f32.mrf.mxu0
    %2063 = vdwg.mxu0
    %2064 = vrot.lane.b32.xlu0 %v1458, 64
    %v2065 = vpop.permute.xlu0 %2064
    %v2067 = vsel %vm145, %v1962, 0
    %v2070 = vsel %vm654, %v2065, 0
    %2072 = vmatprep.subr.bf16.mxu0 0
    %2073 = vmatpush1.bf16.msra.mxu0 0
    %2074 = vmatprep.subr.bf16.mxu0 0
    %2075 = vmatpush1.bf16.msra.mxu0 0
    %2076 = vmatprep.subr.bf16.mxu0 0
    %2077 = vmatpush1.bf16.msra.mxu0 0
    %2078 = vmatprep.subr.bf16.mxu0 0
    %2079 = vmatpush1.bf16.msra.mxu0 0
    %2080 = vmatprep.subr.bf16.mxu0 0
    %2081 = vmatpush1.bf16.msra.mxu0 0
    %2082 = vmatprep.subr.bf16.mxu0 0
    %2083 = vmatpush1.bf16.msra.mxu0 0
    %2084 = vmatprep.subr.bf16.mxu0 0
    %2085 = vmatpush1.bf16.msra.mxu0 0
    %2086 = vmatprep.subr.bf16.mxu0 0
    %2087 = vmatpush1.bf16.msra.mxu0 %v2070
    %2088 = vmatprep.subr.bf16.mxu0 0
    %2089 = vmatpush2.bf16.msra.mxu0 0
    %2090 = vmatprep.subr.bf16.mxu0 0
    %2091 = vmatpush2.bf16.msra.mxu0 0
    %2092 = vmatprep.subr.bf16.mxu0 0
    %2093 = vmatpush2.bf16.msra.mxu0 0
    %2094 = vmatprep.subr.bf16.mxu0 0
    %2095 = vmatpush2.bf16.msra.mxu0 0
    %2096 = vmatprep.subr.bf16.mxu0 0
    %2097 = vmatpush2.bf16.msra.mxu0 0
    %2098 = vmatprep.subr.bf16.mxu0 0
    %2099 = vmatpush2.bf16.msra.mxu0 0
    %2100 = vmatprep.subr.bf16.mxu0 0
    %2101 = vmatpush2.bf16.msra.mxu0 0
    %2102 = vmatprep.subr.bf16.mxu0 0
    %2103 = vmatpush2.bf16.msra.mxu0 0
    %2104 = vmatprep.mubr.bf16.mxu0 0
    %2105 = vmatmul.mubr.bf16.gmra.mxu0 %v2067
    %v2106 = vpop.f32.mrf.mxu0
    %v2107 = vadd.f32 0.0, %v2106
    %v2108 = vpop.f32.mrf.mxu0
    %v2109 = vpop.f32.mrf.mxu0
    %v2110 = vpop.f32.mrf.mxu0
    %2111 = vdwg.mxu0
    %2112 = vrot.lane.b32.xlu0 %v1459, 64
    %v2113 = vpop.permute.xlu0 %2112
    %v2115 = vsel %vm145, %v1963, 0
    %v2118 = vsel %vm654, %v2113, 0
    %2120 = vmatprep.subr.bf16.mxu0 0
    %2121 = vmatpush1.bf16.msra.mxu0 0
    %2122 = vmatprep.subr.bf16.mxu0 0
    %2123 = vmatpush1.bf16.msra.mxu0 0
    %2124 = vmatprep.subr.bf16.mxu0 0
    %2125 = vmatpush1.bf16.msra.mxu0 0
    %2126 = vmatprep.subr.bf16.mxu0 0
    %2127 = vmatpush1.bf16.msra.mxu0 0
    %2128 = vmatprep.subr.bf16.mxu0 0
    %2129 = vmatpush1.bf16.msra.mxu0 0
    %2130 = vmatprep.subr.bf16.mxu0 0
    %2131 = vmatpush1.bf16.msra.mxu0 0
    %2132 = vmatprep.subr.bf16.mxu0 0
    %2133 = vmatpush1.bf16.msra.mxu0 0
    %2134 = vmatprep.subr.bf16.mxu0 0
    %2135 = vmatpush1.bf16.msra.mxu0 %v2118
    %2136 = vmatprep.subr.bf16.mxu0 0
    %2137 = vmatpush2.bf16.msra.mxu0 0
    %2138 = vmatprep.subr.bf16.mxu0 0
    %2139 = vmatpush2.bf16.msra.mxu0 0
    %2140 = vmatprep.subr.bf16.mxu0 0
    %2141 = vmatpush2.bf16.msra.mxu0 0
    %2142 = vmatprep.subr.bf16.mxu0 0
    %2143 = vmatpush2.bf16.msra.mxu0 0
    %2144 = vmatprep.subr.bf16.mxu0 0
    %2145 = vmatpush2.bf16.msra.mxu0 0
    %2146 = vmatprep.subr.bf16.mxu0 0
    %2147 = vmatpush2.bf16.msra.mxu0 0
    %2148 = vmatprep.subr.bf16.mxu0 0
    %2149 = vmatpush2.bf16.msra.mxu0 0
    %2150 = vmatprep.subr.bf16.mxu0 0
    %2151 = vmatpush2.bf16.msra.mxu0 0
    %2152 = vmatprep.mubr.bf16.mxu0 0
    %2153 = vmatmul.mubr.bf16.gmra.mxu0 %v2115
    %v2154 = vpop.f32.mrf.mxu0
    %v2155 = vadd.f32 0.0, %v2154
    %v2156 = vpop.f32.mrf.mxu0
    %v2157 = vpop.f32.mrf.mxu0
    %v2158 = vpop.f32.mrf.mxu0
    %2159 = vdwg.mxu0
    %2160 = vrot.lane.b32.xlu0 %v1460, 64
    %v2161 = vpop.permute.xlu0 %2160
    %v2163 = vsel %vm145, %v1964, 0
    %v2166 = vsel %vm654, %v2161, 0
    %2168 = vmatprep.subr.bf16.mxu0 0
    %2169 = vmatpush1.bf16.msra.mxu0 0
    %2170 = vmatprep.subr.bf16.mxu0 0
    %2171 = vmatpush1.bf16.msra.mxu0 0
    %2172 = vmatprep.subr.bf16.mxu0 0
    %2173 = vmatpush1.bf16.msra.mxu0 0
    %2174 = vmatprep.subr.bf16.mxu0 0
    %2175 = vmatpush1.bf16.msra.mxu0 0
    %2176 = vmatprep.subr.bf16.mxu0 0
    %2177 = vmatpush1.bf16.msra.mxu0 0
    %2178 = vmatprep.subr.bf16.mxu0 0
    %2179 = vmatpush1.bf16.msra.mxu0 0
    %2180 = vmatprep.subr.bf16.mxu0 0
    %2181 = vmatpush1.bf16.msra.mxu0 0
    %2182 = vmatprep.subr.bf16.mxu0 0
    %2183 = vmatpush1.bf16.msra.mxu0 %v2166
    %2184 = vmatprep.subr.bf16.mxu0 0
    %2185 = vmatpush2.bf16.msra.mxu0 0
    %2186 = vmatprep.subr.bf16.mxu0 0
    %2187 = vmatpush2.bf16.msra.mxu0 0
    %2188 = vmatprep.subr.bf16.mxu0 0
    %2189 = vmatpush2.bf16.msra.mxu0 0
    %2190 = vmatprep.subr.bf16.mxu0 0
    %2191 = vmatpush2.bf16.msra.mxu0 0
    %2192 = vmatprep.subr.bf16.mxu0 0
    %2193 = vmatpush2.bf16.msra.mxu0 0
    %2194 = vmatprep.subr.bf16.mxu0 0
    %2195 = vmatpush2.bf16.msra.mxu0 0
    %2196 = vmatprep.subr.bf16.mxu0 0
    %2197 = vmatpush2.bf16.msra.mxu0 0
    %2198 = vmatprep.subr.bf16.mxu0 0
    %2199 = vmatpush2.bf16.msra.mxu0 0
    %2200 = vmatprep.mubr.bf16.mxu0 0
    %2201 = vmatmul.mubr.bf16.gmra.mxu0 %v2163
    %v2202 = vpop.f32.mrf.mxu0
    %v2203 = vadd.f32 0.0, %v2202
    %v2204 = vpop.f32.mrf.mxu0
    %v2205 = vpop.f32.mrf.mxu0
    %v2206 = vpop.f32.mrf.mxu0
    %2207 = vdwg.mxu0
    %2208 = vrot.lane.b32.xlu0 %v1461, 64
    %v2209 = vpop.permute.xlu0 %2208
    %v2211 = vsel %vm145, %v1965, 0
    %v2214 = vsel %vm654, %v2209, 0
    %2216 = vmatprep.subr.bf16.mxu0 0
    %2217 = vmatpush1.bf16.msra.mxu0 0
    %2218 = vmatprep.subr.bf16.mxu0 0
    %2219 = vmatpush1.bf16.msra.mxu0 0
    %2220 = vmatprep.subr.bf16.mxu0 0
    %2221 = vmatpush1.bf16.msra.mxu0 0
    %2222 = vmatprep.subr.bf16.mxu0 0
    %2223 = vmatpush1.bf16.msra.mxu0 0
    %2224 = vmatprep.subr.bf16.mxu0 0
    %2225 = vmatpush1.bf16.msra.mxu0 0
    %2226 = vmatprep.subr.bf16.mxu0 0
    %2227 = vmatpush1.bf16.msra.mxu0 0
    %2228 = vmatprep.subr.bf16.mxu0 0
    %2229 = vmatpush1.bf16.msra.mxu0 0
    %2230 = vmatprep.subr.bf16.mxu0 0
    %2231 = vmatpush1.bf16.msra.mxu0 %v2214
    %2232 = vmatprep.subr.bf16.mxu0 0
    %2233 = vmatpush2.bf16.msra.mxu0 0
    %2234 = vmatprep.subr.bf16.mxu0 0
    %2235 = vmatpush2.bf16.msra.mxu0 0
    %2236 = vmatprep.subr.bf16.mxu0 0
    %2237 = vmatpush2.bf16.msra.mxu0 0
    %2238 = vmatprep.subr.bf16.mxu0 0
    %2239 = vmatpush2.bf16.msra.mxu0 0
    %2240 = vmatprep.subr.bf16.mxu0 0
    %2241 = vmatpush2.bf16.msra.mxu0 0
    %2242 = vmatprep.subr.bf16.mxu0 0
    %2243 = vmatpush2.bf16.msra.mxu0 0
    %2244 = vmatprep.subr.bf16.mxu0 0
    %2245 = vmatpush2.bf16.msra.mxu0 0
    %2246 = vmatprep.subr.bf16.mxu0 0
    %2247 = vmatpush2.bf16.msra.mxu0 0
    %2248 = vmatprep.mubr.bf16.mxu0 0
    %2249 = vmatmul.mubr.bf16.gmra.mxu0 %v2211
    %v2250 = vpop.f32.mrf.mxu0
    %v2251 = vadd.f32 0.0, %v2250
    %v2252 = vpop.f32.mrf.mxu0
    %v2253 = vpop.f32.mrf.mxu0
    %v2254 = vpop.f32.mrf.mxu0
    %2255 = vdwg.mxu0
    %2256 = vrot.lane.b32.xlu0 %v1462, 64
    %v2257 = vpop.permute.xlu0 %2256
    %v2259 = vsel %vm145, %v1966, 0
    %v2262 = vsel %vm654, %v2257, 0
    %2264 = vmatprep.subr.bf16.mxu0 0
    %2265 = vmatpush1.bf16.msra.mxu0 0
    %2266 = vmatprep.subr.bf16.mxu0 0
    %2267 = vmatpush1.bf16.msra.mxu0 0
    %2268 = vmatprep.subr.bf16.mxu0 0
    %2269 = vmatpush1.bf16.msra.mxu0 0
    %2270 = vmatprep.subr.bf16.mxu0 0
    %2271 = vmatpush1.bf16.msra.mxu0 0
    %2272 = vmatprep.subr.bf16.mxu0 0
    %2273 = vmatpush1.bf16.msra.mxu0 0
    %2274 = vmatprep.subr.bf16.mxu0 0
    %2275 = vmatpush1.bf16.msra.mxu0 0
    %2276 = vmatprep.subr.bf16.mxu0 0
    %2277 = vmatpush1.bf16.msra.mxu0 0
    %2278 = vmatprep.subr.bf16.mxu0 0
    %2279 = vmatpush1.bf16.msra.mxu0 %v2262
    %2280 = vmatprep.subr.bf16.mxu0 0
    %2281 = vmatpush2.bf16.msra.mxu0 0
    %2282 = vmatprep.subr.bf16.mxu0 0
    %2283 = vmatpush2.bf16.msra.mxu0 0
    %2284 = vmatprep.subr.bf16.mxu0 0
    %2285 = vmatpush2.bf16.msra.mxu0 0
    %2286 = vmatprep.subr.bf16.mxu0 0
    %2287 = vmatpush2.bf16.msra.mxu0 0
    %2288 = vmatprep.subr.bf16.mxu0 0
    %2289 = vmatpush2.bf16.msra.mxu0 0
    %2290 = vmatprep.subr.bf16.mxu0 0
    %2291 = vmatpush2.bf16.msra.mxu0 0
    %2292 = vmatprep.subr.bf16.mxu0 0
    %2293 = vmatpush2.bf16.msra.mxu0 0
    %2294 = vmatprep.subr.bf16.mxu0 0
    %2295 = vmatpush2.bf16.msra.mxu0 0
    %2296 = vmatprep.mubr.bf16.mxu0 0
    %2297 = vmatmul.mubr.bf16.gmra.mxu0 %v2259
    %v2298 = vpop.f32.mrf.mxu0
    %v2299 = vadd.f32 0.0, %v2298
    %v2300 = vpop.f32.mrf.mxu0
    %v2301 = vpop.f32.mrf.mxu0
    %v2302 = vpop.f32.mrf.mxu0
    %2303 = vdwg.mxu0
    %2304 = vrot.lane.b32.xlu0 %v1463, 64
    %v2305 = vpop.permute.xlu0 %2304
    %v2307 = vsel %vm145, %v1967, 0
    %v2310 = vsel %vm654, %v2305, 0
    %2312 = vmatprep.subr.bf16.mxu0 0
    %2313 = vmatpush1.bf16.msra.mxu0 0
    %2314 = vmatprep.subr.bf16.mxu0 0
    %2315 = vmatpush1.bf16.msra.mxu0 0
    %2316 = vmatprep.subr.bf16.mxu0 0
    %2317 = vmatpush1.bf16.msra.mxu0 0
    %2318 = vmatprep.subr.bf16.mxu0 0
    %2319 = vmatpush1.bf16.msra.mxu0 0
    %2320 = vmatprep.subr.bf16.mxu0 0
    %2321 = vmatpush1.bf16.msra.mxu0 0
    %2322 = vmatprep.subr.bf16.mxu0 0
    %2323 = vmatpush1.bf16.msra.mxu0 0
    %2324 = vmatprep.subr.bf16.mxu0 0
    %2325 = vmatpush1.bf16.msra.mxu0 0
    %2326 = vmatprep.subr.bf16.mxu0 0
    %2327 = vmatpush1.bf16.msra.mxu0 %v2310
    %2328 = vmatprep.subr.bf16.mxu0 0
    %2329 = vmatpush2.bf16.msra.mxu0 0
    %2330 = vmatprep.subr.bf16.mxu0 0
    %2331 = vmatpush2.bf16.msra.mxu0 0
    %2332 = vmatprep.subr.bf16.mxu0 0
    %2333 = vmatpush2.bf16.msra.mxu0 0
    %2334 = vmatprep.subr.bf16.mxu0 0
    %2335 = vmatpush2.bf16.msra.mxu0 0
    %2336 = vmatprep.subr.bf16.mxu0 0
    %2337 = vmatpush2.bf16.msra.mxu0 0
    %2338 = vmatprep.subr.bf16.mxu0 0
    %2339 = vmatpush2.bf16.msra.mxu0 0
    %2340 = vmatprep.subr.bf16.mxu0 0
    %2341 = vmatpush2.bf16.msra.mxu0 0
    %2342 = vmatprep.subr.bf16.mxu0 0
    %2343 = vmatpush2.bf16.msra.mxu0 0
    %2344 = vmatprep.mubr.bf16.mxu0 0
    %2345 = vmatmul.mubr.bf16.gmra.mxu0 %v2307
    %v2346 = vpop.f32.mrf.mxu0
    %v2347 = vadd.f32 0.0, %v2346
    %v2348 = vpop.f32.mrf.mxu0
    %v2349 = vpop.f32.mrf.mxu0
    %v2350 = vpop.f32.mrf.mxu0
    %2351 = vdwg.mxu0
    %2354 = vrot.lane.b32.xlu0 %v2107, 8
    %v2355 = vpop.permute.xlu0 %2354
    %2356 = vrot.lane.b32.xlu0 %v2155, 8
    %v2357 = vpop.permute.xlu0 %2356
    %2362 = vrot.lane.b32.xlu0 %v2203, 16
    %v2363 = vpop.permute.xlu0 %2362
    %2364 = vrot.lane.b32.xlu0 %v2251, 16
    %v2365 = vpop.permute.xlu0 %2364
    %2370 = vrot.lane.b32.xlu0 %v2299, 24
    %v2371 = vpop.permute.xlu0 %2370
    %2372 = vrot.lane.b32.xlu0 %v2347, 24
    %v2373 = vpop.permute.xlu0 %2372
    %v2376 = vsel %vm145, %v2011, %v2355
    %v2377 = vsel %vm145, %v2059, %v2357
    %v2378 = vsel %vm1060, %v2376, %v2363
    %v2379 = vsel %vm1060, %v2377, %v2365
    %v2380 = vsel %vm1063, %v2378, %v2371
    %v2381 = vsel %vm1063, %v2379, %v2373
    %v2382 = vpack.c.bf16 %v2381, %v2380
    %s2383 = scalar_lea.vmem %s4, 16
    %v2384 = vld [vmem:[%s2383] sm:$0xf]
    %v2385 = vld [vmem:[%s2383 + $0x4] sm:$0xf]
    %v2386 = vld [vmem:[%s2383 + $0x8] sm:$0xf]
    %v2387 = vld [vmem:[%s2383 + $0xc] sm:$0xf]
    %v2388 = vlaneseq
    %v2389 = vshrl.u32 %v2388, 7
    %v2390 = vsub.s32 0, %v2389
    %v2391 = vrot.slane %v1365, %v2390
    %v2396 = vunpack.c.l.b16 %v2384
    %v2397 = vunpack.c.l.b16 %v2385
    %v2398 = vunpack.c.l.b16 %v2386
    %v2399 = vunpack.c.l.b16 %v2387
    %v2400 = vpack.c.b16 %v2397, %v2396
    %v2401 = vpack.c.b16 %v2399, %v2398
    %v2405 = vsel %vm69, %v2382, 0
    %2407 = vmatprep.subr.bf16.mxu0 0
    %2408 = vmatpush1.bf16.msra.mxu0 0
    %2409 = vmatprep.subr.bf16.mxu0 0
    %2410 = vmatpush1.bf16.msra.mxu0 0
    %2411 = vmatprep.subr.bf16.mxu0 0
    %2412 = vmatpush1.bf16.msra.mxu0 0
    %2413 = vmatprep.subr.bf16.mxu0 0
    %2414 = vmatpush1.bf16.msra.mxu0 0
    %2415 = vmatprep.subr.bf16.mxu0 0
    %2416 = vmatpush1.bf16.msra.mxu0 0
    %2417 = vmatprep.subr.bf16.mxu0 0
    %2418 = vmatpush1.bf16.msra.mxu0 0
    %2419 = vmatprep.subr.bf16.mxu0 0
    %2420 = vmatpush1.bf16.msra.mxu0 %v2401
    %2421 = vmatprep.subr.bf16.mxu0 0
    %2422 = vmatpush1.bf16.msra.mxu0 %v2400
    %2423 = vmatprep.subr.bf16.mxu0 0
    %2424 = vmatpush2.bf16.msra.mxu0 0
    %2425 = vmatprep.subr.bf16.mxu0 0
    %2426 = vmatpush2.bf16.msra.mxu0 0
    %2427 = vmatprep.subr.bf16.mxu0 0
    %2428 = vmatpush2.bf16.msra.mxu0 0
    %2429 = vmatprep.subr.bf16.mxu0 0
    %2430 = vmatpush2.bf16.msra.mxu0 0
    %2431 = vmatprep.subr.bf16.mxu0 0
    %2432 = vmatpush2.bf16.msra.mxu0 0
    %2433 = vmatprep.subr.bf16.mxu0 0
    %2434 = vmatpush2.bf16.msra.mxu0 0
    %2435 = vmatprep.subr.bf16.mxu0 0
    %2436 = vmatpush2.bf16.msra.mxu0 0
    %2437 = vmatprep.subr.bf16.mxu0 0
    %2438 = vmatpush2.bf16.msra.mxu0 0
    %2439 = vmatprep.mubr.bf16.mxu0 0
    %2440 = vmatmul.mubr.bf16.gmra.mxu0 %v2405
    %v2441 = vpop.f32.mrf.mxu0
    %v2442 = vadd.f32 %v2391, %v2441
    %v2443 = vpop.f32.mrf.mxu0
    %v2444 = vpop.f32.mrf.mxu0
    %v2445 = vadd.f32 %v2391, %v2444
    %v2446 = vpop.f32.mrf.mxu0
    %2447 = vdwg.mxu0
    %v2448 = vadd.f32 %v1362, %v2442
    %v2449 = vadd.f32 %v1363, %v2445
    %v2450 = vsel %vm69, %v2448, 0.0
    %2451 = vadd.xlane.f32.xlu0 %v2450
    %v2452 = vpop.xlane.xlu0 %2451
    %v2453 = vsel %vm69, %v2449, 0.0
    %2454 = vadd.xlane.f32.xlu0 %v2453
    %v2455 = vpop.xlane.xlu0 %2454
    %v2456 = vmul.f32 %v2452, %v1139
    %v2457 = vmul.f32 %v2455, %v1139
    %v2458 = vsub.f32 %v2448, %v2456
    %v2459 = vsub.f32 %v2449, %v2457
    %v2460 = vmul.f32 %v2458, %v2458
    %v2461 = vmul.f32 %v2459, %v2459
    %v2462 = vsel %vm69, %v2460, 0.0
    %2463 = vadd.xlane.f32.xlu0 %v2462
    %v2464 = vpop.xlane.xlu0 %2463
    %v2465 = vsel %vm69, %v2461, 0.0
    %2466 = vadd.xlane.f32.xlu0 %v2465
    %v2467 = vpop.xlane.xlu0 %2466
    %v2468 = vmul.f32 %v2464, %v1139
    %v2469 = vmul.f32 %v2467, %v1139
    %v2470 = vadd.f32 %v2468, 1e-05
    %v2471 = vadd.f32 %v2469, 1e-05
    %v2472 = vrsqrt.pop %v2470
    %v2473 = vrsqrt.pop %v2471
    %v2474 = vmul.f32 %v2458, %v2472
    %v2475 = vmul.f32 %v2459, %v2473
    %v2476 = vlaneseq
    %v2477 = vshrl.u32 %v2476, 7
    %v2478 = vsub.s32 1, %v2477
    %v2479 = vrot.slane %v1365, %v2478
    %v2480 = vmul.f32 %v2474, %v2479
    %v2481 = vmul.f32 %v2475, %v2479
    %v2482 = vlaneseq
    %v2483 = vshrl.u32 %v2482, 7
    %v2484 = vsub.s32 2, %v2483
    %v2485 = vrot.slane %v1365, %v2484
    %v2486 = vadd.f32 %v2480, %v2485
    %v2487 = vadd.f32 %v2481, %v2485
    %v2488 = vpack.c.bf16 %v2487, %v2486
    %s2489 = scalar_lea.vmem %s6, 16
    %v2490 = vld [vmem:[%s2489] sm:$0xf]
    %v2491 = vld [vmem:[%s2489 + $0x4] sm:$0xf]
    %v2492 = vld [vmem:[%s2489 + $0x8] sm:$0xf]
    %v2493 = vld [vmem:[%s2489 + $0xc] sm:$0xf]
    %s2494 = scalar_lea.vmem %s7, 1
    %v2495 = vld [vmem:[%s2494] sm:$0x1]
    %v2497 = vlaneseq
    %v2498 = vshrl.u32 %v2497, 7
    %v2499 = vsub.s32 0, %v2498
    %v2500 = vrot.slane %v2495, %v2499
    %v2506 = vunpack.c.l.b16 %v2490
    %v2507 = vunpack.c.l.b16 %v2491
    %v2508 = vunpack.c.l.b16 %v2492
    %v2509 = vunpack.c.l.b16 %v2493
    %v2510 = vpack.c.b16 %v2507, %v2506
    %v2511 = vpack.c.b16 %v2509, %v2508
    %v2515 = vsel %vm69, %v2488, 0
    %2517 = vmatprep.subr.bf16.mxu0 0
    %2518 = vmatpush1.bf16.msra.mxu0 0
    %2519 = vmatprep.subr.bf16.mxu0 0
    %2520 = vmatpush1.bf16.msra.mxu0 0
    %2521 = vmatprep.subr.bf16.mxu0 0
    %2522 = vmatpush1.bf16.msra.mxu0 0
    %2523 = vmatprep.subr.bf16.mxu0 0
    %2524 = vmatpush1.bf16.msra.mxu0 0
    %2525 = vmatprep.subr.bf16.mxu0 0
    %2526 = vmatpush1.bf16.msra.mxu0 0
    %2527 = vmatprep.subr.bf16.mxu0 0
    %2528 = vmatpush1.bf16.msra.mxu0 0
    %2529 = vmatprep.subr.bf16.mxu0 0
    %2530 = vmatpush1.bf16.msra.mxu0 %v2511
    %2531 = vmatprep.subr.bf16.mxu0 0
    %2532 = vmatpush1.bf16.msra.mxu0 %v2510
    %2533 = vmatprep.subr.bf16.mxu0 0
    %2534 = vmatpush2.bf16.msra.mxu0 0
    %2535 = vmatprep.subr.bf16.mxu0 0
    %2536 = vmatpush2.bf16.msra.mxu0 0
    %2537 = vmatprep.subr.bf16.mxu0 0
    %2538 = vmatpush2.bf16.msra.mxu0 0
    %2539 = vmatprep.subr.bf16.mxu0 0
    %2540 = vmatpush2.bf16.msra.mxu0 0
    %2541 = vmatprep.subr.bf16.mxu0 0
    %2542 = vmatpush2.bf16.msra.mxu0 0
    %2543 = vmatprep.subr.bf16.mxu0 0
    %2544 = vmatpush2.bf16.msra.mxu0 0
    %2545 = vmatprep.subr.bf16.mxu0 0
    %2546 = vmatpush2.bf16.msra.mxu0 0
    %2547 = vmatprep.subr.bf16.mxu0 0
    %2548 = vmatpush2.bf16.msra.mxu0 0
    %2549 = vmatprep.mubr.bf16.mxu0 0
    %2550 = vmatmul.mubr.bf16.gmra.mxu0 %v2515
    %v2551 = vpop.f32.mrf.mxu0
    %v2552 = vadd.f32 %v2500, %v2551
    %v2553 = vpop.f32.mrf.mxu0
    %v2554 = vpop.f32.mrf.mxu0
    %v2555 = vadd.f32 %v2500, %v2554
    %v2556 = vpop.f32.mrf.mxu0
    %2557 = vdwg.mxu0
    %v2558 = vmax.f32 %v2552, 0.0
    %v2559 = vmax.f32 %v2555, 0.0
    %v2560 = vpack.c.bf16 %v2559, %v2558
    %s2561 = scalar_lea.vmem %s8, 32
    %v2562 = vld [vmem:[%s2561] sm:$0xf]
    %v2563 = vld [vmem:[%s2561 + $0x4] sm:$0xf]
    %v2564 = vld [vmem:[%s2561 + $0x8] sm:$0xf]
    %v2565 = vld [vmem:[%s2561 + $0xc] sm:$0xf]
    %v2566 = vld [vmem:[%s2561 + $0x10] sm:$0xf]
    %v2567 = vld [vmem:[%s2561 + $0x14] sm:$0xf]
    %v2568 = vld [vmem:[%s2561 + $0x18] sm:$0xf]
    %v2569 = vld [vmem:[%s2561 + $0x1c] sm:$0xf]
    %v2570 = vlaneseq
    %v2571 = vshrl.u32 %v2570, 7
    %v2572 = vsub.s32 3, %v2571
    %v2573 = vrot.slane %v1365, %v2572
    %v2582 = vunpack.c.l.b16 %v2562
    %v2583 = vunpack.c.l.b16 %v2563
    %v2584 = vunpack.c.l.b16 %v2564
    %v2585 = vunpack.c.l.b16 %v2565
    %v2586 = vunpack.c.l.b16 %v2566
    %v2587 = vunpack.c.l.b16 %v2567
    %v2588 = vunpack.c.l.b16 %v2568
    %v2589 = vunpack.c.l.b16 %v2569
    %v2590 = vpack.c.b16 %v2583, %v2582
    %v2591 = vpack.c.b16 %v2585, %v2584
    %v2592 = vpack.c.b16 %v2587, %v2586
    %v2593 = vpack.c.b16 %v2589, %v2588
    %v2599 = vsel %vm1279, %v2560, 0
    %2601 = vmatprep.subr.bf16.mxu0 0
    %2602 = vmatpush1.bf16.msra.mxu0 0
    %2603 = vmatprep.subr.bf16.mxu0 0
    %2604 = vmatpush1.bf16.msra.mxu0 0
    %2605 = vmatprep.subr.bf16.mxu0 0
    %2606 = vmatpush1.bf16.msra.mxu0 0
    %2607 = vmatprep.subr.bf16.mxu0 0
    %2608 = vmatpush1.bf16.msra.mxu0 0
    %2609 = vmatprep.subr.bf16.mxu0 0
    %2610 = vmatpush1.bf16.msra.mxu0 %v2593
    %2611 = vmatprep.subr.bf16.mxu0 0
    %2612 = vmatpush1.bf16.msra.mxu0 %v2592
    %2613 = vmatprep.subr.bf16.mxu0 0
    %2614 = vmatpush1.bf16.msra.mxu0 %v2591
    %2615 = vmatprep.subr.bf16.mxu0 0
    %2616 = vmatpush1.bf16.msra.mxu0 %v2590
    %2617 = vmatprep.subr.bf16.mxu0 0
    %2618 = vmatpush2.bf16.msra.mxu0 0
    %2619 = vmatprep.subr.bf16.mxu0 0
    %2620 = vmatpush2.bf16.msra.mxu0 0
    %2621 = vmatprep.subr.bf16.mxu0 0
    %2622 = vmatpush2.bf16.msra.mxu0 0
    %2623 = vmatprep.subr.bf16.mxu0 0
    %2624 = vmatpush2.bf16.msra.mxu0 0
    %2625 = vmatprep.subr.bf16.mxu0 0
    %2626 = vmatpush2.bf16.msra.mxu0 0
    %2627 = vmatprep.subr.bf16.mxu0 0
    %2628 = vmatpush2.bf16.msra.mxu0 0
    %2629 = vmatprep.subr.bf16.mxu0 0
    %2630 = vmatpush2.bf16.msra.mxu0 0
    %2631 = vmatprep.subr.bf16.mxu0 0
    %2632 = vmatpush2.bf16.msra.mxu0 0
    %2633 = vmatprep.mubr.bf16.mxu0 0
    %2634 = vmatmul.mubr.bf16.gmra.mxu0 %v2599
    %v2635 = vpop.f32.mrf.mxu0
    %v2636 = vadd.f32 %v2573, %v2635
    %v2637 = vpop.f32.mrf.mxu0
    %v2638 = vpop.f32.mrf.mxu0
    %v2639 = vadd.f32 %v2573, %v2638
    %v2640 = vpop.f32.mrf.mxu0
    %2641 = vdwg.mxu0
    %v2642 = vadd.f32 %v2486, %v2636
    %v2643 = vadd.f32 %v2487, %v2639
    %v2644 = vsel %vm69, %v2642, 0.0
    %2645 = vadd.xlane.f32.xlu0 %v2644
    %v2646 = vpop.xlane.xlu0 %2645
    %v2647 = vsel %vm69, %v2643, 0.0
    %2648 = vadd.xlane.f32.xlu0 %v2647
    %v2649 = vpop.xlane.xlu0 %2648
    %v2650 = vmul.f32 %v2646, %v1139
    %v2651 = vmul.f32 %v2649, %v1139
    %v2652 = vsub.f32 %v2642, %v2650
    %v2653 = vsub.f32 %v2643, %v2651
    %v2654 = vmul.f32 %v2652, %v2652
    %v2655 = vmul.f32 %v2653, %v2653
    %v2656 = vsel %vm69, %v2654, 0.0
    %2657 = vadd.xlane.f32.xlu0 %v2656
    %v2658 = vpop.xlane.xlu0 %2657
    %v2659 = vsel %vm69, %v2655, 0.0
    %2660 = vadd.xlane.f32.xlu0 %v2659
    %v2661 = vpop.xlane.xlu0 %2660
    %v2662 = vmul.f32 %v2658, %v1139
    %v2663 = vmul.f32 %v2661, %v1139
    %v2664 = vadd.f32 %v2662, 1e-05
    %v2665 = vadd.f32 %v2663, 1e-05
    %v2666 = vrsqrt.pop %v2664
    %v2667 = vrsqrt.pop %v2665
    %v2668 = vmul.f32 %v2652, %v2666
    %v2669 = vmul.f32 %v2653, %v2667
    %v2670 = vlaneseq
    %v2671 = vshrl.u32 %v2670, 7
    %v2672 = vsub.s32 4, %v2671
    %v2673 = vrot.slane %v1365, %v2672
    %v2674 = vmul.f32 %v2668, %v2673
    %v2675 = vmul.f32 %v2669, %v2673
    %v2676 = vlaneseq
    %v2677 = vshrl.u32 %v2676, 7
    %v2678 = vsub.s32 5, %v2677
    %v2679 = vrot.slane %v1365, %v2678
    %v2680 = vadd.f32 %v2674, %v2679
    %v2681 = vadd.f32 %v2675, %v2679
    %2682 = vst.msk [vmem:[#allocation2] sm:$0xff] %vm69, %v2680
    %2683 = vst.msk [vmem:[#allocation2 + $0x8] sm:$0xff] %vm69, %v2681
    // Predicated region
    $region38: #{causal_transformer.1} parent=1 // pred_check
      _
    $region39: #{causal_transformer.1} parent=1 // pred_check_branch
      %2685 = sbr.rel (0) target = $region41
    $region40: #{causal_transformer.1} parent=1 // pred_region
      %s2687 = ssub.s32 256, 256
      %2688 = vsyncadd [#allocation3], %s2687
      %s2689 = sshll.u32 [#allocation2], 4
      %s2690 = int_to_ptr.vmem [resolvable:$true] %s2689
      %2695 = dma.vmem_to_hbm [thread:$0]  %s2690, 256, %s9, [#allocation3], 128, 128, 8
    $region41: #{causal_transformer.1} parent=1 // pred_fallthru
      _
    // Predicated region
    $region42: #{causal_transformer.1} parent=1 // pred_check
      _
    $region43: #{causal_transformer.1} parent=1 // pred_check_branch
      %2697 = sbr.rel (0) target = $region45
    $region44: #{causal_transformer.1} parent=1 // pred_region
      %2698 = dma.done [#allocation3], 256
    $region45: #{causal_transformer.1} parent=1 // pred_fallthru
      _
    %2699 = vsyncpa [#allocation3], 1

</llo_original>
